<compile_context>
chip_gen: v6e
topology: v6e:2x2x1
jax: 0.10.0
libtpu: 0.0.40
codegen_flags: <defaults>
</compile_context>

<pallas_src>
import functools

import jax
import jax.numpy as jnp
from jax.experimental import pallas as pl
from jax.experimental.pallas import tpu as pltpu

_SUBLANE = 8


# ----------------------------------------------------------------------------
# One peephole-LSTM timestep with folded peepholes.
#   slab rows: [0:X) Wx | [X:X+2H) Whc = [Wh ; Wc_if|0] | [X+2H:X+3H) Woc_pad | [X+3H] b
#   gate column order: [i, f, c, o]
# ----------------------------------------------------------------------------
def _lstm_step(slab_ref, X, H, h, c, xp_t):
    whc = slab_ref[X:X + 2 * H, :]              # (2H, 4H)
    woc = slab_ref[X + 2 * H:X + 3 * H, :]      # (H, 4H), nonzero only in o-block
    hc = jnp.concatenate([h, c], axis=1)        # (Bp, 2H)
    gates = xp_t + jnp.dot(hc, whc, preferred_element_type=jnp.float32)   # (Bp, 4H)
    # Fused i/f sigmoid: i and f are adjacent in the packed layout.
    ifg = jax.nn.sigmoid(gates[:, 0:2 * H])
    c_new = ifg[:, H:2 * H] * c + ifg[:, 0:H] * jnp.tanh(gates[:, 2 * H:3 * H])
    # o-peephole uses the NEW c; Woc is padded so this is a full-vreg add.
    o_pre = gates + jnp.dot(c_new, woc, preferred_element_type=jnp.float32)
    o = jax.nn.sigmoid(o_pre[:, 3 * H:4 * H])
    h_new = o * jnp.tanh(c_new)
    return h_new, c_new


# ----------------------------------------------------------------------------
# Fused forward: 3 interleaved LSTM scans + relu(cat @ W + bW) @ G + bG + softmax.
# ----------------------------------------------------------------------------
def parsing_forward(s, b, t, params):
    B = s.shape[1]
    H = params["stack"]["Woc"].shape[0]
    ST = params["G"].shape[0]
    Bp = ((B + _SUBLANE - 1) // _SUBLANE) * _SUBLANE  # pad batch to sublane multiple

    def prep(seq, feat):
        T = int(seq.shape[0])
        if T == 0:
            # Empty iterator: dummy (ignored) block to keep kernel arity/shapes valid.
            return jnp.zeros((Bp, feat), jnp.float32), 0
        seq = seq.astype(jnp.float32)
        if Bp > B:
            pad = jnp.zeros((T, Bp - B, feat), jnp.float32)
            seq = jnp.concatenate([seq, pad], axis=1)
        return seq.reshape(T * Bp, feat), T

    X_s = params["stack"]["Wx"].shape[0]
    X_b = params["buffer"]["Wx"].shape[0]
    X_t = params["tran"]["Wx"].shape[0]
    s2, T_s = prep(s, X_s)
    b2, T_b = prep(b, X_b)
    t2, T_t = prep(t, X_t)

    def pack_lstm_slab(p):
        Wh, Wc, Woc = p["Wh"], p["Wc"], p["Woc"]
        whc = jnp.concatenate(
            [Wh, jnp.concatenate([Wc, jnp.zeros((H, 2 * H), jnp.float32)], axis=1)],
            axis=0)                                                     # (2H, 4H)
        woc_pad = jnp.concatenate(
            [jnp.zeros((H, 3 * H), jnp.float32), Woc], axis=1)          # (H, 4H)
        return jnp.concatenate([p["Wx"], whc, woc_pad, p["b"]], axis=0)  # (X+3H+1, 4H)

    slab_s = pack_lstm_slab(params["stack"])
    slab_b = pack_lstm_slab(params["buffer"])
    slab_t = pack_lstm_slab(params["tran"])
    head = jnp.concatenate(
        [params["W"], params["G"], params["bW"], params["bG"]], axis=0)  # (3H+ST+2, ST)

    Ts = (T_s, T_b, T_t)
    Xs = (X_s, X_b, X_t)

    def kernel(s_ref, b_ref, t_ref, sl_s, sl_b, sl_t, head_ref, out_ref):
        seq_refs = (s_ref, b_ref, t_ref)
        slab_refs = (sl_s, sl_b, sl_t)

        # Hoisted input projections: one lane-dense (T*Bp, X) @ (X, 4H) matmul per LSTM.
        xps, hs, cs = [], [], []
        for k in range(3):
            if Ts[k] > 0:
                wx = slab_refs[k][0:Xs[k], :]
                bias = slab_refs[k][Xs[k] + 3 * H:Xs[k] + 3 * H + 1, :]
                xps.append(jnp.dot(seq_refs[k][...], wx,
                                   preferred_element_type=jnp.float32) + bias)
            else:
                xps.append(None)  # empty iterator: h stays zero (matches PyTorch)
            hs.append(jnp.zeros((Bp, H), jnp.float32))
            cs.append(jnp.zeros((Bp, H), jnp.float32))

        # Interleaved recurrence: round-robin over the three independent chains so the
        # single EUP / MXU latency of one chain hides under another's work.
        for tstep in range(max(Ts)):
            for k in range(3):
                if tstep < Ts[k]:
                    hs[k], cs[k] = _lstm_step(
                        slab_refs[k], Xs[k], H, hs[k], cs[k],
                        xps[k][tstep * Bp:(tstep + 1) * Bp, :])

        # Head: relu(cat(h_s, h_b, h_t) @ W + bW) @ G + bG, softmax over last dim.
        cat = jnp.concatenate([hs[0], hs[1], hs[2]], axis=1)            # (Bp, 3H)
        W = head_ref[0:3 * H, :]
        G = head_ref[3 * H:3 * H + ST, :]
        bW = head_ref[3 * H + ST:3 * H + ST + 1, :]
        bG = head_ref[3 * H + ST + 1:3 * H + ST + 2, :]
        p = jnp.maximum(jnp.dot(cat, W, preferred_element_type=jnp.float32) + bW, 0.0)
        logits = jnp.dot(p, G, preferred_element_type=jnp.float32) + bG
        m = jnp.max(logits, axis=-1, keepdims=True)
        e = jnp.exp(logits - m)
        probs = e / jnp.sum(e, axis=-1, keepdims=True)
        out_ref[...] = probs[:B, :]

    args = (s2, b2, t2, slab_s, slab_b, slab_t, head)
    vmem = pl.BlockSpec(memory_space=pltpu.MemorySpace.VMEM)
    return pl.pallas_call(
        kernel,
        out_shape=jax.ShapeDtypeStruct((B, ST), jnp.float32),
        in_specs=[vmem] * len(args),
        out_specs=vmem,
    )(*args)


# ----------------------------------------------------------------------------
# Parameter init (deterministic, mirrors torch.normal(zeros, 0.1) / zeros).
# Gate weights kept in a lane-dense packed form; the kernel wrapper builds slabs.
# ----------------------------------------------------------------------------
def init_lstm_params(key, X, H):
    ks = jax.random.split(key, 11)
    n = lambda k, shape: 0.1 * jax.random.normal(k, shape, jnp.float32)
    W_ix, W_fx, W_cx, W_ox = (n(ks[i], (X, H)) for i in range(4))
    W_ih, W_fh, W_ch, W_oh = (n(ks[i], (H, H)) for i in range(4, 8))
    W_ic, W_fc, W_oc = n(ks[8], (H, H)), n(ks[9], (H, H)), n(ks[10], (H, H))
    return {
        "Wx": jnp.concatenate([W_ix, W_fx, W_cx, W_ox], axis=1),   # (X, 4H), order i,f,c,o
        "Wh": jnp.concatenate([W_ih, W_fh, W_ch, W_oh], axis=1),   # (H, 4H)
        "Wc": jnp.concatenate([W_ic, W_fc], axis=1),               # (H, 2H) peepholes i,f
        "Woc": W_oc,                                               # (H, H)  peephole o
        "b": jnp.zeros((1, 4 * H), jnp.float32),
    }


def init_parsing_params(key, size_vector, size_tran, size_out):
    k_s, k_b, k_t, k_w, k_g = jax.random.split(key, 5)
    return {
        "stack": init_lstm_params(k_s, size_vector, size_out),
        "buffer": init_lstm_params(k_b, size_vector, size_out),
        "tran": init_lstm_params(k_t, size_tran, size_out),
        "W": 0.1 * jax.random.normal(k_w, (3 * size_out, size_tran), jnp.float32),
        "G": 0.1 * jax.random.normal(k_g, (size_tran, size_tran), jnp.float32),
        "bW": jnp.zeros((1, size_tran), jnp.float32),
        "bG": jnp.zeros((1, size_tran), jnp.float32),
    }


# ----------------------------------------------------------------------------
# Pure-JAX reference (direct transcription of the PyTorch forward) for checking.
# ----------------------------------------------------------------------------
def _lstm_ref(x_seq, p):
    T, B, _ = x_seq.shape
    H = p["Woc"].shape[0]
    Wx, Wh, Wc, bias = p["Wx"], p["Wh"], p["Wc"], p["b"]
    h = jnp.zeros((B, H), jnp.float32)
    c1 = jnp.zeros((B, H), jnp.float32)
    for t in range(T):
        x, h1 = x_seq[t], h
        i = jax.nn.sigmoid(x @ Wx[:, 0:H] + h1 @ Wh[:, 0:H] + c1 @ Wc[:, 0:H] + bias[:, 0:H])
        f = jax.nn.sigmoid(x @ Wx[:, H:2 * H] + h1 @ Wh[:, H:2 * H]
                           + c1 @ Wc[:, H:2 * H] + bias[:, H:2 * H])
        c = f * c1 + i * jnp.tanh(x @ Wx[:, 2 * H:3 * H] + h1 @ Wh[:, 2 * H:3 * H]
                                  + bias[:, 2 * H:3 * H])
        o = jax.nn.sigmoid(x @ Wx[:, 3 * H:] + h1 @ Wh[:, 3 * H:]
                           + c @ p["Woc"] + bias[:, 3 * H:])
        h = o * jnp.tanh(c)
        c1 = c
    return h


def _parsing_ref(s, b, t, params):
    stack = _lstm_ref(s, params["stack"])
    buffer = _lstm_ref(b, params["buffer"])
    tran = _lstm_ref(t, params["tran"])
    cat = jnp.concatenate([stack, buffer, tran], axis=1)
    p = jax.nn.relu(cat @ params["W"] + params["bW"])
    return jax.nn.softmax(p @ params["G"] + params["bG"], axis=-1)


if __name__ == "__main__":
    size_vector, size_tran, size_out = 16, 8, 32
    batch = 2
    T_s, T_b, T_t = 5, 6, 4

    key = jax.random.PRNGKey(0)
    k_params, k_s, k_b, k_t = jax.random.split(key, 4)
    params = init_parsing_params(k_params, size_vector, size_tran, size_out)

    s = jax.random.normal(k_s, (T_s, batch, size_vector), jnp.float32)
    b = jax.random.normal(k_b, (T_b, batch, size_vector), jnp.float32)
    t = jax.random.normal(k_t, (T_t, batch, size_tran), jnp.float32)

    out = jax.jit(functools.partial(parsing_forward, params=params))(s, b, t)
    out = jax.block_until_ready(out)

    ref = _parsing_ref(s, b, t, params)
    assert out.shape == (batch, size_tran)
    assert jnp.allclose(out, ref, atol=1e-4, rtol=1e-4), (out, ref)

    print("KERNEL_OK")
</pallas_src>

<mosaic_0001>
module attributes {stable_mosaic.version = 11 : i64} {
  func.func @kernel(%arg0: memref<40x16xf32, #tpu.memory_space<vmem>>, %arg1: memref<48x16xf32, #tpu.memory_space<vmem>>, %arg2: memref<32x8xf32, #tpu.memory_space<vmem>>, %arg3: memref<113x128xf32, #tpu.memory_space<vmem>>, %arg4: memref<113x128xf32, #tpu.memory_space<vmem>>, %arg5: memref<105x128xf32, #tpu.memory_space<vmem>>, %arg6: memref<106x8xf32, #tpu.memory_space<vmem>>, %arg7: memref<2x8xf32, #tpu.memory_space<vmem>>) attributes {dimension_semantics = [], scalar_prefetch = 0 : i64, scratch_operands = 0 : i64, tpu.core_type = #tpu.core_type<tc>} {
    %c0 = arith.constant 0 : index
    %c0_0 = arith.constant 0 : index
    %0 = vector.load %arg3[%c0, %c0_0] : memref<113x128xf32, #tpu.memory_space<vmem>>, vector<16x128xf32>
    %c112 = arith.constant 112 : index
    %c0_1 = arith.constant 0 : index
    %1 = vector.load %arg3[%c112, %c0_1] : memref<113x128xf32, #tpu.memory_space<vmem>>, vector<1x128xf32>
    %c0_2 = arith.constant 0 : index
    %c0_3 = arith.constant 0 : index
    %2 = vector.load %arg0[%c0_2, %c0_3] : memref<40x16xf32, #tpu.memory_space<vmem>>, vector<40x16xf32>
    %cst = arith.constant dense<0.000000e+00> : vector<40x128xf32>
    %3 = tpu.matmul %2, %0, %cst {dimension_numbers = #tpu.dot_dimension_numbers<[1], [0], [0], [1], [0, 0, 1, 1], [], []>} : vector<40x16xf32>, vector<16x128xf32>, vector<40x128xf32> -> vector<40x128xf32>
    %4 = vector.broadcast %1 : vector<1x128xf32> to vector<40x128xf32>
    %5 = arith.addf %3, %4 : vector<40x128xf32>
    %cst_4 = arith.constant 0.000000e+00 : f32
    %6 = vector.broadcast %cst_4 : f32 to vector<8x32xf32>
    %cst_5 = arith.constant 0.000000e+00 : f32
    %7 = vector.broadcast %cst_5 : f32 to vector<8x32xf32>
    %c0_6 = arith.constant 0 : index
    %c0_7 = arith.constant 0 : index
    %8 = vector.load %arg4[%c0_6, %c0_7] : memref<113x128xf32, #tpu.memory_space<vmem>>, vector<16x128xf32>
    %c112_8 = arith.constant 112 : index
    %c0_9 = arith.constant 0 : index
    %9 = vector.load %arg4[%c112_8, %c0_9] : memref<113x128xf32, #tpu.memory_space<vmem>>, vector<1x128xf32>
    %c0_10 = arith.constant 0 : index
    %c0_11 = arith.constant 0 : index
    %10 = vector.load %arg1[%c0_10, %c0_11] : memref<48x16xf32, #tpu.memory_space<vmem>>, vector<48x16xf32>
    %cst_12 = arith.constant dense<0.000000e+00> : vector<48x128xf32>
    %11 = tpu.matmul %10, %8, %cst_12 {dimension_numbers = #tpu.dot_dimension_numbers<[1], [0], [0], [1], [0, 0, 1, 1], [], []>} : vector<48x16xf32>, vector<16x128xf32>, vector<48x128xf32> -> vector<48x128xf32>
    %12 = vector.broadcast %9 : vector<1x128xf32> to vector<48x128xf32>
    %13 = arith.addf %11, %12 : vector<48x128xf32>
    %cst_13 = arith.constant 0.000000e+00 : f32
    %14 = vector.broadcast %cst_13 : f32 to vector<8x32xf32>
    %cst_14 = arith.constant 0.000000e+00 : f32
    %15 = vector.broadcast %cst_14 : f32 to vector<8x32xf32>
    %c0_15 = arith.constant 0 : index
    %c0_16 = arith.constant 0 : index
    %16 = vector.load %arg5[%c0_15, %c0_16] : memref<105x128xf32, #tpu.memory_space<vmem>>, vector<8x128xf32>
    %c104 = arith.constant 104 : index
    %c0_17 = arith.constant 0 : index
    %17 = vector.load %arg5[%c104, %c0_17] : memref<105x128xf32, #tpu.memory_space<vmem>>, vector<1x128xf32>
    %c0_18 = arith.constant 0 : index
    %c0_19 = arith.constant 0 : index
    %18 = vector.load %arg2[%c0_18, %c0_19] : memref<32x8xf32, #tpu.memory_space<vmem>>, vector<32x8xf32>
    %cst_20 = arith.constant dense<0.000000e+00> : vector<32x128xf32>
    %19 = tpu.matmul %18, %16, %cst_20 {dimension_numbers = #tpu.dot_dimension_numbers<[1], [0], [0], [1], [0, 0, 1, 1], [], []>} : vector<32x8xf32>, vector<8x128xf32>, vector<32x128xf32> -> vector<32x128xf32>
    %20 = vector.broadcast %17 : vector<1x128xf32> to vector<32x128xf32>
    %21 = arith.addf %19, %20 : vector<32x128xf32>
    %cst_21 = arith.constant 0.000000e+00 : f32
    %22 = vector.broadcast %cst_21 : f32 to vector<8x32xf32>
    %cst_22 = arith.constant 0.000000e+00 : f32
    %23 = vector.broadcast %cst_22 : f32 to vector<8x32xf32>
    %24 = vector.extract_strided_slice %5 {offsets = [0, 0], sizes = [8, 128], strides = [1, 1]} : vector<40x128xf32> to vector<8x128xf32>
    %c16 = arith.constant 16 : index
    %c0_23 = arith.constant 0 : index
    %25 = vector.load %arg3[%c16, %c0_23] : memref<113x128xf32, #tpu.memory_space<vmem>>, vector<64x128xf32>
    %c80 = arith.constant 80 : index
    %c0_24 = arith.constant 0 : index
    %26 = vector.load %arg3[%c80, %c0_24] : memref<113x128xf32, #tpu.memory_space<vmem>>, vector<32x128xf32>
    %27 = tpu.concatenate %6, %7 in 1 : vector<8x32xf32>, vector<8x32xf32> -> vector<8x64xf32>
    %cst_25 = arith.constant dense<0.000000e+00> : vector<8x128xf32>
    %28 = tpu.matmul %27, %25, %cst_25 {dimension_numbers = #tpu.dot_dimension_numbers<[1], [0], [0], [1], [0, 0, 1, 1], [], []>} : vector<8x64xf32>, vector<64x128xf32>, vector<8x128xf32> -> vector<8x128xf32>
    %29 = arith.addf %24, %28 : vector<8x128xf32>
    %30 = vector.extract_strided_slice %29 {offsets = [0, 0], sizes = [8, 64], strides = [1, 1]} : vector<8x128xf32> to vector<8x64xf32>
    %31 = arith.negf %30 : vector<8x64xf32>
    %32 = math.exp %31 : vector<8x64xf32>
    %cst_26 = arith.constant 1.000000e+00 : f32
    %33 = vector.broadcast %cst_26 : f32 to vector<8x64xf32>
    %34 = arith.addf %33, %32 : vector<8x64xf32>
    %35 = arith.divf %33, %34 : vector<8x64xf32>
    %36 = vector.extract_strided_slice %35 {offsets = [0, 32], sizes = [8, 32], strides = [1, 1]} : vector<8x64xf32> to vector<8x32xf32>
    %37 = arith.mulf %36, %7 : vector<8x32xf32>
    %38 = vector.extract_strided_slice %35 {offsets = [0, 0], sizes = [8, 32], strides = [1, 1]} : vector<8x64xf32> to vector<8x32xf32>
    %39 = vector.extract_strided_slice %29 {offsets = [0, 64], sizes = [8, 32], strides = [1, 1]} : vector<8x128xf32> to vector<8x32xf32>
    %40 = math.tanh %39 : vector<8x32xf32>
    %41 = arith.mulf %38, %40 : vector<8x32xf32>
    %42 = arith.addf %37, %41 : vector<8x32xf32>
    %cst_27 = arith.constant dense<0.000000e+00> : vector<8x128xf32>
    %43 = tpu.matmul %42, %26, %cst_27 {dimension_numbers = #tpu.dot_dimension_numbers<[1], [0], [0], [1], [0, 0, 1, 1], [], []>} : vector<8x32xf32>, vector<32x128xf32>, vector<8x128xf32> -> vector<8x128xf32>
    %44 = arith.addf %29, %43 : vector<8x128xf32>
    %45 = vector.extract_strided_slice %44 {offsets = [0, 96], sizes = [8, 32], strides = [1, 1]} : vector<8x128xf32> to vector<8x32xf32>
    %46 = arith.negf %45 : vector<8x32xf32>
    %47 = math.exp %46 : vector<8x32xf32>
    %cst_28 = arith.constant 1.000000e+00 : f32
    %48 = vector.broadcast %cst_28 : f32 to vector<8x32xf32>
    %49 = arith.addf %48, %47 : vector<8x32xf32>
    %50 = arith.divf %48, %49 : vector<8x32xf32>
    %51 = math.tanh %42 : vector<8x32xf32>
    %52 = arith.mulf %50, %51 : vector<8x32xf32>
    %53 = vector.extract_strided_slice %13 {offsets = [0, 0], sizes = [8, 128], strides = [1, 1]} : vector<48x128xf32> to vector<8x128xf32>
    %c16_29 = arith.constant 16 : index
    %c0_30 = arith.constant 0 : index
    %54 = vector.load %arg4[%c16_29, %c0_30] : memref<113x128xf32, #tpu.memory_space<vmem>>, vector<64x128xf32>
    %c80_31 = arith.constant 80 : index
    %c0_32 = arith.constant 0 : index
    %55 = vector.load %arg4[%c80_31, %c0_32] : memref<113x128xf32, #tpu.memory_space<vmem>>, vector<32x128xf32>
    %56 = tpu.concatenate %14, %15 in 1 : vector<8x32xf32>, vector<8x32xf32> -> vector<8x64xf32>
    %cst_33 = arith.constant dense<0.000000e+00> : vector<8x128xf32>
    %57 = tpu.matmul %56, %54, %cst_33 {dimension_numbers = #tpu.dot_dimension_numbers<[1], [0], [0], [1], [0, 0, 1, 1], [], []>} : vector<8x64xf32>, vector<64x128xf32>, vector<8x128xf32> -> vector<8x128xf32>
    %58 = arith.addf %53, %57 : vector<8x128xf32>
    %59 = vector.extract_strided_slice %58 {offsets = [0, 0], sizes = [8, 64], strides = [1, 1]} : vector<8x128xf32> to vector<8x64xf32>
    %60 = arith.negf %59 : vector<8x64xf32>
    %61 = math.exp %60 : vector<8x64xf32>
    %cst_34 = arith.constant 1.000000e+00 : f32
    %62 = vector.broadcast %cst_34 : f32 to vector<8x64xf32>
    %63 = arith.addf %62, %61 : vector<8x64xf32>
    %64 = arith.divf %62, %63 : vector<8x64xf32>
    %65 = vector.extract_strided_slice %64 {offsets = [0, 32], sizes = [8, 32], strides = [1, 1]} : vector<8x64xf32> to vector<8x32xf32>
    %66 = arith.mulf %65, %15 : vector<8x32xf32>
    %67 = vector.extract_strided_slice %64 {offsets = [0, 0], sizes = [8, 32], strides = [1, 1]} : vector<8x64xf32> to vector<8x32xf32>
    %68 = vector.extract_strided_slice %58 {offsets = [0, 64], sizes = [8, 32], strides = [1, 1]} : vector<8x128xf32> to vector<8x32xf32>
    %69 = math.tanh %68 : vector<8x32xf32>
    %70 = arith.mulf %67, %69 : vector<8x32xf32>
    %71 = arith.addf %66, %70 : vector<8x32xf32>
    %cst_35 = arith.constant dense<0.000000e+00> : vector<8x128xf32>
    %72 = tpu.matmul %71, %55, %cst_35 {dimension_numbers = #tpu.dot_dimension_numbers<[1], [0], [0], [1], [0, 0, 1, 1], [], []>} : vector<8x32xf32>, vector<32x128xf32>, vector<8x128xf32> -> vector<8x128xf32>
    %73 = arith.addf %58, %72 : vector<8x128xf32>
    %74 = vector.extract_strided_slice %73 {offsets = [0, 96], sizes = [8, 32], strides = [1, 1]} : vector<8x128xf32> to vector<8x32xf32>
    %75 = arith.negf %74 : vector<8x32xf32>
    %76 = math.exp %75 : vector<8x32xf32>
    %cst_36 = arith.constant 1.000000e+00 : f32
    %77 = vector.broadcast %cst_36 : f32 to vector<8x32xf32>
    %78 = arith.addf %77, %76 : vector<8x32xf32>
    %79 = arith.divf %77, %78 : vector<8x32xf32>
    %80 = math.tanh %71 : vector<8x32xf32>
    %81 = arith.mulf %79, %80 : vector<8x32xf32>
    %82 = vector.extract_strided_slice %21 {offsets = [0, 0], sizes = [8, 128], strides = [1, 1]} : vector<32x128xf32> to vector<8x128xf32>
    %c8 = arith.constant 8 : index
    %c0_37 = arith.constant 0 : index
    %83 = vector.load %arg5[%c8, %c0_37] : memref<105x128xf32, #tpu.memory_space<vmem>>, vector<64x128xf32>
    %c72 = arith.constant 72 : index
    %c0_38 = arith.constant 0 : index
    %84 = vector.load %arg5[%c72, %c0_38] : memref<105x128xf32, #tpu.memory_space<vmem>>, vector<32x128xf32>
    %85 = tpu.concatenate %22, %23 in 1 : vector<8x32xf32>, vector<8x32xf32> -> vector<8x64xf32>
    %cst_39 = arith.constant dense<0.000000e+00> : vector<8x128xf32>
    %86 = tpu.matmul %85, %83, %cst_39 {dimension_numbers = #tpu.dot_dimension_numbers<[1], [0], [0], [1], [0, 0, 1, 1], [], []>} : vector<8x64xf32>, vector<64x128xf32>, vector<8x128xf32> -> vector<8x128xf32>
    %87 = arith.addf %82, %86 : vector<8x128xf32>
    %88 = vector.extract_strided_slice %87 {offsets = [0, 0], sizes = [8, 64], strides = [1, 1]} : vector<8x128xf32> to vector<8x64xf32>
    %89 = arith.negf %88 : vector<8x64xf32>
    %90 = math.exp %89 : vector<8x64xf32>
    %cst_40 = arith.constant 1.000000e+00 : f32
    %91 = vector.broadcast %cst_40 : f32 to vector<8x64xf32>
    %92 = arith.addf %91, %90 : vector<8x64xf32>
    %93 = arith.divf %91, %92 : vector<8x64xf32>
    %94 = vector.extract_strided_slice %93 {offsets = [0, 32], sizes = [8, 32], strides = [1, 1]} : vector<8x64xf32> to vector<8x32xf32>
    %95 = arith.mulf %94, %23 : vector<8x32xf32>
    %96 = vector.extract_strided_slice %93 {offsets = [0, 0], sizes = [8, 32], strides = [1, 1]} : vector<8x64xf32> to vector<8x32xf32>
    %97 = vector.extract_strided_slice %87 {offsets = [0, 64], sizes = [8, 32], strides = [1, 1]} : vector<8x128xf32> to vector<8x32xf32>
    %98 = math.tanh %97 : vector<8x32xf32>
    %99 = arith.mulf %96, %98 : vector<8x32xf32>
    %100 = arith.addf %95, %99 : vector<8x32xf32>
    %cst_41 = arith.constant dense<0.000000e+00> : vector<8x128xf32>
    %101 = tpu.matmul %100, %84, %cst_41 {dimension_numbers = #tpu.dot_dimension_numbers<[1], [0], [0], [1], [0, 0, 1, 1], [], []>} : vector<8x32xf32>, vector<32x128xf32>, vector<8x128xf32> -> vector<8x128xf32>
    %102 = arith.addf %87, %101 : vector<8x128xf32>
    %103 = vector.extract_strided_slice %102 {offsets = [0, 96], sizes = [8, 32], strides = [1, 1]} : vector<8x128xf32> to vector<8x32xf32>
    %104 = arith.negf %103 : vector<8x32xf32>
    %105 = math.exp %104 : vector<8x32xf32>
    %cst_42 = arith.constant 1.000000e+00 : f32
    %106 = vector.broadcast %cst_42 : f32 to vector<8x32xf32>
    %107 = arith.addf %106, %105 : vector<8x32xf32>
    %108 = arith.divf %106, %107 : vector<8x32xf32>
    %109 = math.tanh %100 : vector<8x32xf32>
    %110 = arith.mulf %108, %109 : vector<8x32xf32>
    %111 = vector.extract_strided_slice %5 {offsets = [8, 0], sizes = [8, 128], strides = [1, 1]} : vector<40x128xf32> to vector<8x128xf32>
    %c16_43 = arith.constant 16 : index
    %c0_44 = arith.constant 0 : index
    %112 = vector.load %arg3[%c16_43, %c0_44] : memref<113x128xf32, #tpu.memory_space<vmem>>, vector<64x128xf32>
    %c80_45 = arith.constant 80 : index
    %c0_46 = arith.constant 0 : index
    %113 = vector.load %arg3[%c80_45, %c0_46] : memref<113x128xf32, #tpu.memory_space<vmem>>, vector<32x128xf32>
    %114 = tpu.concatenate %52, %42 in 1 : vector<8x32xf32>, vector<8x32xf32> -> vector<8x64xf32>
    %cst_47 = arith.constant dense<0.000000e+00> : vector<8x128xf32>
    %115 = tpu.matmul %114, %112, %cst_47 {dimension_numbers = #tpu.dot_dimension_numbers<[1], [0], [0], [1], [0, 0, 1, 1], [], []>} : vector<8x64xf32>, vector<64x128xf32>, vector<8x128xf32> -> vector<8x128xf32>
    %116 = arith.addf %111, %115 : vector<8x128xf32>
    %117 = vector.extract_strided_slice %116 {offsets = [0, 0], sizes = [8, 64], strides = [1, 1]} : vector<8x128xf32> to vector<8x64xf32>
    %118 = arith.negf %117 : vector<8x64xf32>
    %119 = math.exp %118 : vector<8x64xf32>
    %cst_48 = arith.constant 1.000000e+00 : f32
    %120 = vector.broadcast %cst_48 : f32 to vector<8x64xf32>
    %121 = arith.addf %120, %119 : vector<8x64xf32>
    %122 = arith.divf %120, %121 : vector<8x64xf32>
    %123 = vector.extract_strided_slice %122 {offsets = [0, 32], sizes = [8, 32], strides = [1, 1]} : vector<8x64xf32> to vector<8x32xf32>
    %124 = arith.mulf %123, %42 : vector<8x32xf32>
    %125 = vector.extract_strided_slice %122 {offsets = [0, 0], sizes = [8, 32], strides = [1, 1]} : vector<8x64xf32> to vector<8x32xf32>
    %126 = vector.extract_strided_slice %116 {offsets = [0, 64], sizes = [8, 32], strides = [1, 1]} : vector<8x128xf32> to vector<8x32xf32>
    %127 = math.tanh %126 : vector<8x32xf32>
    %128 = arith.mulf %125, %127 : vector<8x32xf32>
    %129 = arith.addf %124, %128 : vector<8x32xf32>
    %cst_49 = arith.constant dense<0.000000e+00> : vector<8x128xf32>
    %130 = tpu.matmul %129, %113, %cst_49 {dimension_numbers = #tpu.dot_dimension_numbers<[1], [0], [0], [1], [0, 0, 1, 1], [], []>} : vector<8x32xf32>, vector<32x128xf32>, vector<8x128xf32> -> vector<8x128xf32>
    %131 = arith.addf %116, %130 : vector<8x128xf32>
    %132 = vector.extract_strided_slice %131 {offsets = [0, 96], sizes = [8, 32], strides = [1, 1]} : vector<8x128xf32> to vector<8x32xf32>
    %133 = arith.negf %132 : vector<8x32xf32>
    %134 = math.exp %133 : vector<8x32xf32>
    %cst_50 = arith.constant 1.000000e+00 : f32
    %135 = vector.broadcast %cst_50 : f32 to vector<8x32xf32>
    %136 = arith.addf %135, %134 : vector<8x32xf32>
    %137 = arith.divf %135, %136 : vector<8x32xf32>
    %138 = math.tanh %129 : vector<8x32xf32>
    %139 = arith.mulf %137, %138 : vector<8x32xf32>
    %140 = vector.extract_strided_slice %13 {offsets = [8, 0], sizes = [8, 128], strides = [1, 1]} : vector<48x128xf32> to vector<8x128xf32>
    %c16_51 = arith.constant 16 : index
    %c0_52 = arith.constant 0 : index
    %141 = vector.load %arg4[%c16_51, %c0_52] : memref<113x128xf32, #tpu.memory_space<vmem>>, vector<64x128xf32>
    %c80_53 = arith.constant 80 : index
    %c0_54 = arith.constant 0 : index
    %142 = vector.load %arg4[%c80_53, %c0_54] : memref<113x128xf32, #tpu.memory_space<vmem>>, vector<32x128xf32>
    %143 = tpu.concatenate %81, %71 in 1 : vector<8x32xf32>, vector<8x32xf32> -> vector<8x64xf32>
    %cst_55 = arith.constant dense<0.000000e+00> : vector<8x128xf32>
    %144 = tpu.matmul %143, %141, %cst_55 {dimension_numbers = #tpu.dot_dimension_numbers<[1], [0], [0], [1], [0, 0, 1, 1], [], []>} : vector<8x64xf32>, vector<64x128xf32>, vector<8x128xf32> -> vector<8x128xf32>
    %145 = arith.addf %140, %144 : vector<8x128xf32>
    %146 = vector.extract_strided_slice %145 {offsets = [0, 0], sizes = [8, 64], strides = [1, 1]} : vector<8x128xf32> to vector<8x64xf32>
    %147 = arith.negf %146 : vector<8x64xf32>
    %148 = math.exp %147 : vector<8x64xf32>
    %cst_56 = arith.constant 1.000000e+00 : f32
    %149 = vector.broadcast %cst_56 : f32 to vector<8x64xf32>
    %150 = arith.addf %149, %148 : vector<8x64xf32>
    %151 = arith.divf %149, %150 : vector<8x64xf32>
    %152 = vector.extract_strided_slice %151 {offsets = [0, 32], sizes = [8, 32], strides = [1, 1]} : vector<8x64xf32> to vector<8x32xf32>
    %153 = arith.mulf %152, %71 : vector<8x32xf32>
    %154 = vector.extract_strided_slice %151 {offsets = [0, 0], sizes = [8, 32], strides = [1, 1]} : vector<8x64xf32> to vector<8x32xf32>
    %155 = vector.extract_strided_slice %145 {offsets = [0, 64], sizes = [8, 32], strides = [1, 1]} : vector<8x128xf32> to vector<8x32xf32>
    %156 = math.tanh %155 : vector<8x32xf32>
    %157 = arith.mulf %154, %156 : vector<8x32xf32>
    %158 = arith.addf %153, %157 : vector<8x32xf32>
    %cst_57 = arith.constant dense<0.000000e+00> : vector<8x128xf32>
    %159 = tpu.matmul %158, %142, %cst_57 {dimension_numbers = #tpu.dot_dimension_numbers<[1], [0], [0], [1], [0, 0, 1, 1], [], []>} : vector<8x32xf32>, vector<32x128xf32>, vector<8x128xf32> -> vector<8x128xf32>
    %160 = arith.addf %145, %159 : vector<8x128xf32>
    %161 = vector.extract_strided_slice %160 {offsets = [0, 96], sizes = [8, 32], strides = [1, 1]} : vector<8x128xf32> to vector<8x32xf32>
    %162 = arith.negf %161 : vector<8x32xf32>
    %163 = math.exp %162 : vector<8x32xf32>
    %cst_58 = arith.constant 1.000000e+00 : f32
    %164 = vector.broadcast %cst_58 : f32 to vector<8x32xf32>
    %165 = arith.addf %164, %163 : vector<8x32xf32>
    %166 = arith.divf %164, %165 : vector<8x32xf32>
    %167 = math.tanh %158 : vector<8x32xf32>
    %168 = arith.mulf %166, %167 : vector<8x32xf32>
    %169 = vector.extract_strided_slice %21 {offsets = [8, 0], sizes = [8, 128], strides = [1, 1]} : vector<32x128xf32> to vector<8x128xf32>
    %c8_59 = arith.constant 8 : index
    %c0_60 = arith.constant 0 : index
    %170 = vector.load %arg5[%c8_59, %c0_60] : memref<105x128xf32, #tpu.memory_space<vmem>>, vector<64x128xf32>
    %c72_61 = arith.constant 72 : index
    %c0_62 = arith.constant 0 : index
    %171 = vector.load %arg5[%c72_61, %c0_62] : memref<105x128xf32, #tpu.memory_space<vmem>>, vector<32x128xf32>
    %172 = tpu.concatenate %110, %100 in 1 : vector<8x32xf32>, vector<8x32xf32> -> vector<8x64xf32>
    %cst_63 = arith.constant dense<0.000000e+00> : vector<8x128xf32>
    %173 = tpu.matmul %172, %170, %cst_63 {dimension_numbers = #tpu.dot_dimension_numbers<[1], [0], [0], [1], [0, 0, 1, 1], [], []>} : vector<8x64xf32>, vector<64x128xf32>, vector<8x128xf32> -> vector<8x128xf32>
    %174 = arith.addf %169, %173 : vector<8x128xf32>
    %175 = vector.extract_strided_slice %174 {offsets = [0, 0], sizes = [8, 64], strides = [1, 1]} : vector<8x128xf32> to vector<8x64xf32>
    %176 = arith.negf %175 : vector<8x64xf32>
    %177 = math.exp %176 : vector<8x64xf32>
    %cst_64 = arith.constant 1.000000e+00 : f32
    %178 = vector.broadcast %cst_64 : f32 to vector<8x64xf32>
    %179 = arith.addf %178, %177 : vector<8x64xf32>
    %180 = arith.divf %178, %179 : vector<8x64xf32>
    %181 = vector.extract_strided_slice %180 {offsets = [0, 32], sizes = [8, 32], strides = [1, 1]} : vector<8x64xf32> to vector<8x32xf32>
    %182 = arith.mulf %181, %100 : vector<8x32xf32>
    %183 = vector.extract_strided_slice %180 {offsets = [0, 0], sizes = [8, 32], strides = [1, 1]} : vector<8x64xf32> to vector<8x32xf32>
    %184 = vector.extract_strided_slice %174 {offsets = [0, 64], sizes = [8, 32], strides = [1, 1]} : vector<8x128xf32> to vector<8x32xf32>
    %185 = math.tanh %184 : vector<8x32xf32>
    %186 = arith.mulf %183, %185 : vector<8x32xf32>
    %187 = arith.addf %182, %186 : vector<8x32xf32>
    %cst_65 = arith.constant dense<0.000000e+00> : vector<8x128xf32>
    %188 = tpu.matmul %187, %171, %cst_65 {dimension_numbers = #tpu.dot_dimension_numbers<[1], [0], [0], [1], [0, 0, 1, 1], [], []>} : vector<8x32xf32>, vector<32x128xf32>, vector<8x128xf32> -> vector<8x128xf32>
    %189 = arith.addf %174, %188 : vector<8x128xf32>
    %190 = vector.extract_strided_slice %189 {offsets = [0, 96], sizes = [8, 32], strides = [1, 1]} : vector<8x128xf32> to vector<8x32xf32>
    %191 = arith.negf %190 : vector<8x32xf32>
    %192 = math.exp %191 : vector<8x32xf32>
    %cst_66 = arith.constant 1.000000e+00 : f32
    %193 = vector.broadcast %cst_66 : f32 to vector<8x32xf32>
    %194 = arith.addf %193, %192 : vector<8x32xf32>
    %195 = arith.divf %193, %194 : vector<8x32xf32>
    %196 = math.tanh %187 : vector<8x32xf32>
    %197 = arith.mulf %195, %196 : vector<8x32xf32>
    %198 = vector.extract_strided_slice %5 {offsets = [16, 0], sizes = [8, 128], strides = [1, 1]} : vector<40x128xf32> to vector<8x128xf32>
    %c16_67 = arith.constant 16 : index
    %c0_68 = arith.constant 0 : index
    %199 = vector.load %arg3[%c16_67, %c0_68] : memref<113x128xf32, #tpu.memory_space<vmem>>, vector<64x128xf32>
    %c80_69 = arith.constant 80 : index
    %c0_70 = arith.constant 0 : index
    %200 = vector.load %arg3[%c80_69, %c0_70] : memref<113x128xf32, #tpu.memory_space<vmem>>, vector<32x128xf32>
    %201 = tpu.concatenate %139, %129 in 1 : vector<8x32xf32>, vector<8x32xf32> -> vector<8x64xf32>
    %cst_71 = arith.constant dense<0.000000e+00> : vector<8x128xf32>
    %202 = tpu.matmul %201, %199, %cst_71 {dimension_numbers = #tpu.dot_dimension_numbers<[1], [0], [0], [1], [0, 0, 1, 1], [], []>} : vector<8x64xf32>, vector<64x128xf32>, vector<8x128xf32> -> vector<8x128xf32>
    %203 = arith.addf %198, %202 : vector<8x128xf32>
    %204 = vector.extract_strided_slice %203 {offsets = [0, 0], sizes = [8, 64], strides = [1, 1]} : vector<8x128xf32> to vector<8x64xf32>
    %205 = arith.negf %204 : vector<8x64xf32>
    %206 = math.exp %205 : vector<8x64xf32>
    %cst_72 = arith.constant 1.000000e+00 : f32
    %207 = vector.broadcast %cst_72 : f32 to vector<8x64xf32>
    %208 = arith.addf %207, %206 : vector<8x64xf32>
    %209 = arith.divf %207, %208 : vector<8x64xf32>
    %210 = vector.extract_strided_slice %209 {offsets = [0, 32], sizes = [8, 32], strides = [1, 1]} : vector<8x64xf32> to vector<8x32xf32>
    %211 = arith.mulf %210, %129 : vector<8x32xf32>
    %212 = vector.extract_strided_slice %209 {offsets = [0, 0], sizes = [8, 32], strides = [1, 1]} : vector<8x64xf32> to vector<8x32xf32>
    %213 = vector.extract_strided_slice %203 {offsets = [0, 64], sizes = [8, 32], strides = [1, 1]} : vector<8x128xf32> to vector<8x32xf32>
    %214 = math.tanh %213 : vector<8x32xf32>
    %215 = arith.mulf %212, %214 : vector<8x32xf32>
    %216 = arith.addf %211, %215 : vector<8x32xf32>
    %cst_73 = arith.constant dense<0.000000e+00> : vector<8x128xf32>
    %217 = tpu.matmul %216, %200, %cst_73 {dimension_numbers = #tpu.dot_dimension_numbers<[1], [0], [0], [1], [0, 0, 1, 1], [], []>} : vector<8x32xf32>, vector<32x128xf32>, vector<8x128xf32> -> vector<8x128xf32>
    %218 = arith.addf %203, %217 : vector<8x128xf32>
    %219 = vector.extract_strided_slice %218 {offsets = [0, 96], sizes = [8, 32], strides = [1, 1]} : vector<8x128xf32> to vector<8x32xf32>
    %220 = arith.negf %219 : vector<8x32xf32>
    %221 = math.exp %220 : vector<8x32xf32>
    %cst_74 = arith.constant 1.000000e+00 : f32
    %222 = vector.broadcast %cst_74 : f32 to vector<8x32xf32>
    %223 = arith.addf %222, %221 : vector<8x32xf32>
    %224 = arith.divf %222, %223 : vector<8x32xf32>
    %225 = math.tanh %216 : vector<8x32xf32>
    %226 = arith.mulf %224, %225 : vector<8x32xf32>
    %227 = vector.extract_strided_slice %13 {offsets = [16, 0], sizes = [8, 128], strides = [1, 1]} : vector<48x128xf32> to vector<8x128xf32>
    %c16_75 = arith.constant 16 : index
    %c0_76 = arith.constant 0 : index
    %228 = vector.load %arg4[%c16_75, %c0_76] : memref<113x128xf32, #tpu.memory_space<vmem>>, vector<64x128xf32>
    %c80_77 = arith.constant 80 : index
    %c0_78 = arith.constant 0 : index
    %229 = vector.load %arg4[%c80_77, %c0_78] : memref<113x128xf32, #tpu.memory_space<vmem>>, vector<32x128xf32>
    %230 = tpu.concatenate %168, %158 in 1 : vector<8x32xf32>, vector<8x32xf32> -> vector<8x64xf32>
    %cst_79 = arith.constant dense<0.000000e+00> : vector<8x128xf32>
    %231 = tpu.matmul %230, %228, %cst_79 {dimension_numbers = #tpu.dot_dimension_numbers<[1], [0], [0], [1], [0, 0, 1, 1], [], []>} : vector<8x64xf32>, vector<64x128xf32>, vector<8x128xf32> -> vector<8x128xf32>
    %232 = arith.addf %227, %231 : vector<8x128xf32>
    %233 = vector.extract_strided_slice %232 {offsets = [0, 0], sizes = [8, 64], strides = [1, 1]} : vector<8x128xf32> to vector<8x64xf32>
    %234 = arith.negf %233 : vector<8x64xf32>
    %235 = math.exp %234 : vector<8x64xf32>
    %cst_80 = arith.constant 1.000000e+00 : f32
    %236 = vector.broadcast %cst_80 : f32 to vector<8x64xf32>
    %237 = arith.addf %236, %235 : vector<8x64xf32>
    %238 = arith.divf %236, %237 : vector<8x64xf32>
    %239 = vector.extract_strided_slice %238 {offsets = [0, 32], sizes = [8, 32], strides = [1, 1]} : vector<8x64xf32> to vector<8x32xf32>
    %240 = arith.mulf %239, %158 : vector<8x32xf32>
    %241 = vector.extract_strided_slice %238 {offsets = [0, 0], sizes = [8, 32], strides = [1, 1]} : vector<8x64xf32> to vector<8x32xf32>
    %242 = vector.extract_strided_slice %232 {offsets = [0, 64], sizes = [8, 32], strides = [1, 1]} : vector<8x128xf32> to vector<8x32xf32>
    %243 = math.tanh %242 : vector<8x32xf32>
    %244 = arith.mulf %241, %243 : vector<8x32xf32>
    %245 = arith.addf %240, %244 : vector<8x32xf32>
    %cst_81 = arith.constant dense<0.000000e+00> : vector<8x128xf32>
    %246 = tpu.matmul %245, %229, %cst_81 {dimension_numbers = #tpu.dot_dimension_numbers<[1], [0], [0], [1], [0, 0, 1, 1], [], []>} : vector<8x32xf32>, vector<32x128xf32>, vector<8x128xf32> -> vector<8x128xf32>
    %247 = arith.addf %232, %246 : vector<8x128xf32>
    %248 = vector.extract_strided_slice %247 {offsets = [0, 96], sizes = [8, 32], strides = [1, 1]} : vector<8x128xf32> to vector<8x32xf32>
    %249 = arith.negf %248 : vector<8x32xf32>
    %250 = math.exp %249 : vector<8x32xf32>
    %cst_82 = arith.constant 1.000000e+00 : f32
    %251 = vector.broadcast %cst_82 : f32 to vector<8x32xf32>
    %252 = arith.addf %251, %250 : vector<8x32xf32>
    %253 = arith.divf %251, %252 : vector<8x32xf32>
    %254 = math.tanh %245 : vector<8x32xf32>
    %255 = arith.mulf %253, %254 : vector<8x32xf32>
    %256 = vector.extract_strided_slice %21 {offsets = [16, 0], sizes = [8, 128], strides = [1, 1]} : vector<32x128xf32> to vector<8x128xf32>
    %c8_83 = arith.constant 8 : index
    %c0_84 = arith.constant 0 : index
    %257 = vector.load %arg5[%c8_83, %c0_84] : memref<105x128xf32, #tpu.memory_space<vmem>>, vector<64x128xf32>
    %c72_85 = arith.constant 72 : index
    %c0_86 = arith.constant 0 : index
    %258 = vector.load %arg5[%c72_85, %c0_86] : memref<105x128xf32, #tpu.memory_space<vmem>>, vector<32x128xf32>
    %259 = tpu.concatenate %197, %187 in 1 : vector<8x32xf32>, vector<8x32xf32> -> vector<8x64xf32>
    %cst_87 = arith.constant dense<0.000000e+00> : vector<8x128xf32>
    %260 = tpu.matmul %259, %257, %cst_87 {dimension_numbers = #tpu.dot_dimension_numbers<[1], [0], [0], [1], [0, 0, 1, 1], [], []>} : vector<8x64xf32>, vector<64x128xf32>, vector<8x128xf32> -> vector<8x128xf32>
    %261 = arith.addf %256, %260 : vector<8x128xf32>
    %262 = vector.extract_strided_slice %261 {offsets = [0, 0], sizes = [8, 64], strides = [1, 1]} : vector<8x128xf32> to vector<8x64xf32>
    %263 = arith.negf %262 : vector<8x64xf32>
    %264 = math.exp %263 : vector<8x64xf32>
    %cst_88 = arith.constant 1.000000e+00 : f32
    %265 = vector.broadcast %cst_88 : f32 to vector<8x64xf32>
    %266 = arith.addf %265, %264 : vector<8x64xf32>
    %267 = arith.divf %265, %266 : vector<8x64xf32>
    %268 = vector.extract_strided_slice %267 {offsets = [0, 32], sizes = [8, 32], strides = [1, 1]} : vector<8x64xf32> to vector<8x32xf32>
    %269 = arith.mulf %268, %187 : vector<8x32xf32>
    %270 = vector.extract_strided_slice %267 {offsets = [0, 0], sizes = [8, 32], strides = [1, 1]} : vector<8x64xf32> to vector<8x32xf32>
    %271 = vector.extract_strided_slice %261 {offsets = [0, 64], sizes = [8, 32], strides = [1, 1]} : vector<8x128xf32> to vector<8x32xf32>
    %272 = math.tanh %271 : vector<8x32xf32>
    %273 = arith.mulf %270, %272 : vector<8x32xf32>
    %274 = arith.addf %269, %273 : vector<8x32xf32>
    %cst_89 = arith.constant dense<0.000000e+00> : vector<8x128xf32>
    %275 = tpu.matmul %274, %258, %cst_89 {dimension_numbers = #tpu.dot_dimension_numbers<[1], [0], [0], [1], [0, 0, 1, 1], [], []>} : vector<8x32xf32>, vector<32x128xf32>, vector<8x128xf32> -> vector<8x128xf32>
    %276 = arith.addf %261, %275 : vector<8x128xf32>
    %277 = vector.extract_strided_slice %276 {offsets = [0, 96], sizes = [8, 32], strides = [1, 1]} : vector<8x128xf32> to vector<8x32xf32>
    %278 = arith.negf %277 : vector<8x32xf32>
    %279 = math.exp %278 : vector<8x32xf32>
    %cst_90 = arith.constant 1.000000e+00 : f32
    %280 = vector.broadcast %cst_90 : f32 to vector<8x32xf32>
    %281 = arith.addf %280, %279 : vector<8x32xf32>
    %282 = arith.divf %280, %281 : vector<8x32xf32>
    %283 = math.tanh %274 : vector<8x32xf32>
    %284 = arith.mulf %282, %283 : vector<8x32xf32>
    %285 = vector.extract_strided_slice %5 {offsets = [24, 0], sizes = [8, 128], strides = [1, 1]} : vector<40x128xf32> to vector<8x128xf32>
    %c16_91 = arith.constant 16 : index
    %c0_92 = arith.constant 0 : index
    %286 = vector.load %arg3[%c16_91, %c0_92] : memref<113x128xf32, #tpu.memory_space<vmem>>, vector<64x128xf32>
    %c80_93 = arith.constant 80 : index
    %c0_94 = arith.constant 0 : index
    %287 = vector.load %arg3[%c80_93, %c0_94] : memref<113x128xf32, #tpu.memory_space<vmem>>, vector<32x128xf32>
    %288 = tpu.concatenate %226, %216 in 1 : vector<8x32xf32>, vector<8x32xf32> -> vector<8x64xf32>
    %cst_95 = arith.constant dense<0.000000e+00> : vector<8x128xf32>
    %289 = tpu.matmul %288, %286, %cst_95 {dimension_numbers = #tpu.dot_dimension_numbers<[1], [0], [0], [1], [0, 0, 1, 1], [], []>} : vector<8x64xf32>, vector<64x128xf32>, vector<8x128xf32> -> vector<8x128xf32>
    %290 = arith.addf %285, %289 : vector<8x128xf32>
    %291 = vector.extract_strided_slice %290 {offsets = [0, 0], sizes = [8, 64], strides = [1, 1]} : vector<8x128xf32> to vector<8x64xf32>
    %292 = arith.negf %291 : vector<8x64xf32>
    %293 = math.exp %292 : vector<8x64xf32>
    %cst_96 = arith.constant 1.000000e+00 : f32
    %294 = vector.broadcast %cst_96 : f32 to vector<8x64xf32>
    %295 = arith.addf %294, %293 : vector<8x64xf32>
    %296 = arith.divf %294, %295 : vector<8x64xf32>
    %297 = vector.extract_strided_slice %296 {offsets = [0, 32], sizes = [8, 32], strides = [1, 1]} : vector<8x64xf32> to vector<8x32xf32>
    %298 = arith.mulf %297, %216 : vector<8x32xf32>
    %299 = vector.extract_strided_slice %296 {offsets = [0, 0], sizes = [8, 32], strides = [1, 1]} : vector<8x64xf32> to vector<8x32xf32>
    %300 = vector.extract_strided_slice %290 {offsets = [0, 64], sizes = [8, 32], strides = [1, 1]} : vector<8x128xf32> to vector<8x32xf32>
    %301 = math.tanh %300 : vector<8x32xf32>
    %302 = arith.mulf %299, %301 : vector<8x32xf32>
    %303 = arith.addf %298, %302 : vector<8x32xf32>
    %cst_97 = arith.constant dense<0.000000e+00> : vector<8x128xf32>
    %304 = tpu.matmul %303, %287, %cst_97 {dimension_numbers = #tpu.dot_dimension_numbers<[1], [0], [0], [1], [0, 0, 1, 1], [], []>} : vector<8x32xf32>, vector<32x128xf32>, vector<8x128xf32> -> vector<8x128xf32>
    %305 = arith.addf %290, %304 : vector<8x128xf32>
    %306 = vector.extract_strided_slice %305 {offsets = [0, 96], sizes = [8, 32], strides = [1, 1]} : vector<8x128xf32> to vector<8x32xf32>
    %307 = arith.negf %306 : vector<8x32xf32>
    %308 = math.exp %307 : vector<8x32xf32>
    %cst_98 = arith.constant 1.000000e+00 : f32
    %309 = vector.broadcast %cst_98 : f32 to vector<8x32xf32>
    %310 = arith.addf %309, %308 : vector<8x32xf32>
    %311 = arith.divf %309, %310 : vector<8x32xf32>
    %312 = math.tanh %303 : vector<8x32xf32>
    %313 = arith.mulf %311, %312 : vector<8x32xf32>
    %314 = vector.extract_strided_slice %13 {offsets = [24, 0], sizes = [8, 128], strides = [1, 1]} : vector<48x128xf32> to vector<8x128xf32>
    %c16_99 = arith.constant 16 : index
    %c0_100 = arith.constant 0 : index
    %315 = vector.load %arg4[%c16_99, %c0_100] : memref<113x128xf32, #tpu.memory_space<vmem>>, vector<64x128xf32>
    %c80_101 = arith.constant 80 : index
    %c0_102 = arith.constant 0 : index
    %316 = vector.load %arg4[%c80_101, %c0_102] : memref<113x128xf32, #tpu.memory_space<vmem>>, vector<32x128xf32>
    %317 = tpu.concatenate %255, %245 in 1 : vector<8x32xf32>, vector<8x32xf32> -> vector<8x64xf32>
    %cst_103 = arith.constant dense<0.000000e+00> : vector<8x128xf32>
    %318 = tpu.matmul %317, %315, %cst_103 {dimension_numbers = #tpu.dot_dimension_numbers<[1], [0], [0], [1], [0, 0, 1, 1], [], []>} : vector<8x64xf32>, vector<64x128xf32>, vector<8x128xf32> -> vector<8x128xf32>
    %319 = arith.addf %314, %318 : vector<8x128xf32>
    %320 = vector.extract_strided_slice %319 {offsets = [0, 0], sizes = [8, 64], strides = [1, 1]} : vector<8x128xf32> to vector<8x64xf32>
    %321 = arith.negf %320 : vector<8x64xf32>
    %322 = math.exp %321 : vector<8x64xf32>
    %cst_104 = arith.constant 1.000000e+00 : f32
    %323 = vector.broadcast %cst_104 : f32 to vector<8x64xf32>
    %324 = arith.addf %323, %322 : vector<8x64xf32>
    %325 = arith.divf %323, %324 : vector<8x64xf32>
    %326 = vector.extract_strided_slice %325 {offsets = [0, 32], sizes = [8, 32], strides = [1, 1]} : vector<8x64xf32> to vector<8x32xf32>
    %327 = arith.mulf %326, %245 : vector<8x32xf32>
    %328 = vector.extract_strided_slice %325 {offsets = [0, 0], sizes = [8, 32], strides = [1, 1]} : vector<8x64xf32> to vector<8x32xf32>
    %329 = vector.extract_strided_slice %319 {offsets = [0, 64], sizes = [8, 32], strides = [1, 1]} : vector<8x128xf32> to vector<8x32xf32>
    %330 = math.tanh %329 : vector<8x32xf32>
    %331 = arith.mulf %328, %330 : vector<8x32xf32>
    %332 = arith.addf %327, %331 : vector<8x32xf32>
    %cst_105 = arith.constant dense<0.000000e+00> : vector<8x128xf32>
    %333 = tpu.matmul %332, %316, %cst_105 {dimension_numbers = #tpu.dot_dimension_numbers<[1], [0], [0], [1], [0, 0, 1, 1], [], []>} : vector<8x32xf32>, vector<32x128xf32>, vector<8x128xf32> -> vector<8x128xf32>
    %334 = arith.addf %319, %333 : vector<8x128xf32>
    %335 = vector.extract_strided_slice %334 {offsets = [0, 96], sizes = [8, 32], strides = [1, 1]} : vector<8x128xf32> to vector<8x32xf32>
    %336 = arith.negf %335 : vector<8x32xf32>
    %337 = math.exp %336 : vector<8x32xf32>
    %cst_106 = arith.constant 1.000000e+00 : f32
    %338 = vector.broadcast %cst_106 : f32 to vector<8x32xf32>
    %339 = arith.addf %338, %337 : vector<8x32xf32>
    %340 = arith.divf %338, %339 : vector<8x32xf32>
    %341 = math.tanh %332 : vector<8x32xf32>
    %342 = arith.mulf %340, %341 : vector<8x32xf32>
    %343 = vector.extract_strided_slice %21 {offsets = [24, 0], sizes = [8, 128], strides = [1, 1]} : vector<32x128xf32> to vector<8x128xf32>
    %c8_107 = arith.constant 8 : index
    %c0_108 = arith.constant 0 : index
    %344 = vector.load %arg5[%c8_107, %c0_108] : memref<105x128xf32, #tpu.memory_space<vmem>>, vector<64x128xf32>
    %c72_109 = arith.constant 72 : index
    %c0_110 = arith.constant 0 : index
    %345 = vector.load %arg5[%c72_109, %c0_110] : memref<105x128xf32, #tpu.memory_space<vmem>>, vector<32x128xf32>
    %346 = tpu.concatenate %284, %274 in 1 : vector<8x32xf32>, vector<8x32xf32> -> vector<8x64xf32>
    %cst_111 = arith.constant dense<0.000000e+00> : vector<8x128xf32>
    %347 = tpu.matmul %346, %344, %cst_111 {dimension_numbers = #tpu.dot_dimension_numbers<[1], [0], [0], [1], [0, 0, 1, 1], [], []>} : vector<8x64xf32>, vector<64x128xf32>, vector<8x128xf32> -> vector<8x128xf32>
    %348 = arith.addf %343, %347 : vector<8x128xf32>
    %349 = vector.extract_strided_slice %348 {offsets = [0, 0], sizes = [8, 64], strides = [1, 1]} : vector<8x128xf32> to vector<8x64xf32>
    %350 = arith.negf %349 : vector<8x64xf32>
    %351 = math.exp %350 : vector<8x64xf32>
    %cst_112 = arith.constant 1.000000e+00 : f32
    %352 = vector.broadcast %cst_112 : f32 to vector<8x64xf32>
    %353 = arith.addf %352, %351 : vector<8x64xf32>
    %354 = arith.divf %352, %353 : vector<8x64xf32>
    %355 = vector.extract_strided_slice %354 {offsets = [0, 32], sizes = [8, 32], strides = [1, 1]} : vector<8x64xf32> to vector<8x32xf32>
    %356 = arith.mulf %355, %274 : vector<8x32xf32>
    %357 = vector.extract_strided_slice %354 {offsets = [0, 0], sizes = [8, 32], strides = [1, 1]} : vector<8x64xf32> to vector<8x32xf32>
    %358 = vector.extract_strided_slice %348 {offsets = [0, 64], sizes = [8, 32], strides = [1, 1]} : vector<8x128xf32> to vector<8x32xf32>
    %359 = math.tanh %358 : vector<8x32xf32>
    %360 = arith.mulf %357, %359 : vector<8x32xf32>
    %361 = arith.addf %356, %360 : vector<8x32xf32>
    %cst_113 = arith.constant dense<0.000000e+00> : vector<8x128xf32>
    %362 = tpu.matmul %361, %345, %cst_113 {dimension_numbers = #tpu.dot_dimension_numbers<[1], [0], [0], [1], [0, 0, 1, 1], [], []>} : vector<8x32xf32>, vector<32x128xf32>, vector<8x128xf32> -> vector<8x128xf32>
    %363 = arith.addf %348, %362 : vector<8x128xf32>
    %364 = vector.extract_strided_slice %363 {offsets = [0, 96], sizes = [8, 32], strides = [1, 1]} : vector<8x128xf32> to vector<8x32xf32>
    %365 = arith.negf %364 : vector<8x32xf32>
    %366 = math.exp %365 : vector<8x32xf32>
    %cst_114 = arith.constant 1.000000e+00 : f32
    %367 = vector.broadcast %cst_114 : f32 to vector<8x32xf32>
    %368 = arith.addf %367, %366 : vector<8x32xf32>
    %369 = arith.divf %367, %368 : vector<8x32xf32>
    %370 = math.tanh %361 : vector<8x32xf32>
    %371 = arith.mulf %369, %370 : vector<8x32xf32>
    %372 = vector.extract_strided_slice %5 {offsets = [32, 0], sizes = [8, 128], strides = [1, 1]} : vector<40x128xf32> to vector<8x128xf32>
    %c16_115 = arith.constant 16 : index
    %c0_116 = arith.constant 0 : index
    %373 = vector.load %arg3[%c16_115, %c0_116] : memref<113x128xf32, #tpu.memory_space<vmem>>, vector<64x128xf32>
    %c80_117 = arith.constant 80 : index
    %c0_118 = arith.constant 0 : index
    %374 = vector.load %arg3[%c80_117, %c0_118] : memref<113x128xf32, #tpu.memory_space<vmem>>, vector<32x128xf32>
    %375 = tpu.concatenate %313, %303 in 1 : vector<8x32xf32>, vector<8x32xf32> -> vector<8x64xf32>
    %cst_119 = arith.constant dense<0.000000e+00> : vector<8x128xf32>
    %376 = tpu.matmul %375, %373, %cst_119 {dimension_numbers = #tpu.dot_dimension_numbers<[1], [0], [0], [1], [0, 0, 1, 1], [], []>} : vector<8x64xf32>, vector<64x128xf32>, vector<8x128xf32> -> vector<8x128xf32>
    %377 = arith.addf %372, %376 : vector<8x128xf32>
    %378 = vector.extract_strided_slice %377 {offsets = [0, 0], sizes = [8, 64], strides = [1, 1]} : vector<8x128xf32> to vector<8x64xf32>
    %379 = arith.negf %378 : vector<8x64xf32>
    %380 = math.exp %379 : vector<8x64xf32>
    %cst_120 = arith.constant 1.000000e+00 : f32
    %381 = vector.broadcast %cst_120 : f32 to vector<8x64xf32>
    %382 = arith.addf %381, %380 : vector<8x64xf32>
    %383 = arith.divf %381, %382 : vector<8x64xf32>
    %384 = vector.extract_strided_slice %383 {offsets = [0, 32], sizes = [8, 32], strides = [1, 1]} : vector<8x64xf32> to vector<8x32xf32>
    %385 = arith.mulf %384, %303 : vector<8x32xf32>
    %386 = vector.extract_strided_slice %383 {offsets = [0, 0], sizes = [8, 32], strides = [1, 1]} : vector<8x64xf32> to vector<8x32xf32>
    %387 = vector.extract_strided_slice %377 {offsets = [0, 64], sizes = [8, 32], strides = [1, 1]} : vector<8x128xf32> to vector<8x32xf32>
    %388 = math.tanh %387 : vector<8x32xf32>
    %389 = arith.mulf %386, %388 : vector<8x32xf32>
    %390 = arith.addf %385, %389 : vector<8x32xf32>
    %cst_121 = arith.constant dense<0.000000e+00> : vector<8x128xf32>
    %391 = tpu.matmul %390, %374, %cst_121 {dimension_numbers = #tpu.dot_dimension_numbers<[1], [0], [0], [1], [0, 0, 1, 1], [], []>} : vector<8x32xf32>, vector<32x128xf32>, vector<8x128xf32> -> vector<8x128xf32>
    %392 = arith.addf %377, %391 : vector<8x128xf32>
    %393 = vector.extract_strided_slice %392 {offsets = [0, 96], sizes = [8, 32], strides = [1, 1]} : vector<8x128xf32> to vector<8x32xf32>
    %394 = arith.negf %393 : vector<8x32xf32>
    %395 = math.exp %394 : vector<8x32xf32>
    %cst_122 = arith.constant 1.000000e+00 : f32
    %396 = vector.broadcast %cst_122 : f32 to vector<8x32xf32>
    %397 = arith.addf %396, %395 : vector<8x32xf32>
    %398 = arith.divf %396, %397 : vector<8x32xf32>
    %399 = math.tanh %390 : vector<8x32xf32>
    %400 = arith.mulf %398, %399 : vector<8x32xf32>
    %401 = vector.extract_strided_slice %13 {offsets = [32, 0], sizes = [8, 128], strides = [1, 1]} : vector<48x128xf32> to vector<8x128xf32>
    %c16_123 = arith.constant 16 : index
    %c0_124 = arith.constant 0 : index
    %402 = vector.load %arg4[%c16_123, %c0_124] : memref<113x128xf32, #tpu.memory_space<vmem>>, vector<64x128xf32>
    %c80_125 = arith.constant 80 : index
    %c0_126 = arith.constant 0 : index
    %403 = vector.load %arg4[%c80_125, %c0_126] : memref<113x128xf32, #tpu.memory_space<vmem>>, vector<32x128xf32>
    %404 = tpu.concatenate %342, %332 in 1 : vector<8x32xf32>, vector<8x32xf32> -> vector<8x64xf32>
    %cst_127 = arith.constant dense<0.000000e+00> : vector<8x128xf32>
    %405 = tpu.matmul %404, %402, %cst_127 {dimension_numbers = #tpu.dot_dimension_numbers<[1], [0], [0], [1], [0, 0, 1, 1], [], []>} : vector<8x64xf32>, vector<64x128xf32>, vector<8x128xf32> -> vector<8x128xf32>
    %406 = arith.addf %401, %405 : vector<8x128xf32>
    %407 = vector.extract_strided_slice %406 {offsets = [0, 0], sizes = [8, 64], strides = [1, 1]} : vector<8x128xf32> to vector<8x64xf32>
    %408 = arith.negf %407 : vector<8x64xf32>
    %409 = math.exp %408 : vector<8x64xf32>
    %cst_128 = arith.constant 1.000000e+00 : f32
    %410 = vector.broadcast %cst_128 : f32 to vector<8x64xf32>
    %411 = arith.addf %410, %409 : vector<8x64xf32>
    %412 = arith.divf %410, %411 : vector<8x64xf32>
    %413 = vector.extract_strided_slice %412 {offsets = [0, 32], sizes = [8, 32], strides = [1, 1]} : vector<8x64xf32> to vector<8x32xf32>
    %414 = arith.mulf %413, %332 : vector<8x32xf32>
    %415 = vector.extract_strided_slice %412 {offsets = [0, 0], sizes = [8, 32], strides = [1, 1]} : vector<8x64xf32> to vector<8x32xf32>
    %416 = vector.extract_strided_slice %406 {offsets = [0, 64], sizes = [8, 32], strides = [1, 1]} : vector<8x128xf32> to vector<8x32xf32>
    %417 = math.tanh %416 : vector<8x32xf32>
    %418 = arith.mulf %415, %417 : vector<8x32xf32>
    %419 = arith.addf %414, %418 : vector<8x32xf32>
    %cst_129 = arith.constant dense<0.000000e+00> : vector<8x128xf32>
    %420 = tpu.matmul %419, %403, %cst_129 {dimension_numbers = #tpu.dot_dimension_numbers<[1], [0], [0], [1], [0, 0, 1, 1], [], []>} : vector<8x32xf32>, vector<32x128xf32>, vector<8x128xf32> -> vector<8x128xf32>
    %421 = arith.addf %406, %420 : vector<8x128xf32>
    %422 = vector.extract_strided_slice %421 {offsets = [0, 96], sizes = [8, 32], strides = [1, 1]} : vector<8x128xf32> to vector<8x32xf32>
    %423 = arith.negf %422 : vector<8x32xf32>
    %424 = math.exp %423 : vector<8x32xf32>
    %cst_130 = arith.constant 1.000000e+00 : f32
    %425 = vector.broadcast %cst_130 : f32 to vector<8x32xf32>
    %426 = arith.addf %425, %424 : vector<8x32xf32>
    %427 = arith.divf %425, %426 : vector<8x32xf32>
    %428 = math.tanh %419 : vector<8x32xf32>
    %429 = arith.mulf %427, %428 : vector<8x32xf32>
    %430 = vector.extract_strided_slice %13 {offsets = [40, 0], sizes = [8, 128], strides = [1, 1]} : vector<48x128xf32> to vector<8x128xf32>
    %c16_131 = arith.constant 16 : index
    %c0_132 = arith.constant 0 : index
    %431 = vector.load %arg4[%c16_131, %c0_132] : memref<113x128xf32, #tpu.memory_space<vmem>>, vector<64x128xf32>
    %c80_133 = arith.constant 80 : index
    %c0_134 = arith.constant 0 : index
    %432 = vector.load %arg4[%c80_133, %c0_134] : memref<113x128xf32, #tpu.memory_space<vmem>>, vector<32x128xf32>
    %433 = tpu.concatenate %429, %419 in 1 : vector<8x32xf32>, vector<8x32xf32> -> vector<8x64xf32>
    %cst_135 = arith.constant dense<0.000000e+00> : vector<8x128xf32>
    %434 = tpu.matmul %433, %431, %cst_135 {dimension_numbers = #tpu.dot_dimension_numbers<[1], [0], [0], [1], [0, 0, 1, 1], [], []>} : vector<8x64xf32>, vector<64x128xf32>, vector<8x128xf32> -> vector<8x128xf32>
    %435 = arith.addf %430, %434 : vector<8x128xf32>
    %436 = vector.extract_strided_slice %435 {offsets = [0, 0], sizes = [8, 64], strides = [1, 1]} : vector<8x128xf32> to vector<8x64xf32>
    %437 = arith.negf %436 : vector<8x64xf32>
    %438 = math.exp %437 : vector<8x64xf32>
    %cst_136 = arith.constant 1.000000e+00 : f32
    %439 = vector.broadcast %cst_136 : f32 to vector<8x64xf32>
    %440 = arith.addf %439, %438 : vector<8x64xf32>
    %441 = arith.divf %439, %440 : vector<8x64xf32>
    %442 = vector.extract_strided_slice %441 {offsets = [0, 32], sizes = [8, 32], strides = [1, 1]} : vector<8x64xf32> to vector<8x32xf32>
    %443 = arith.mulf %442, %419 : vector<8x32xf32>
    %444 = vector.extract_strided_slice %441 {offsets = [0, 0], sizes = [8, 32], strides = [1, 1]} : vector<8x64xf32> to vector<8x32xf32>
    %445 = vector.extract_strided_slice %435 {offsets = [0, 64], sizes = [8, 32], strides = [1, 1]} : vector<8x128xf32> to vector<8x32xf32>
    %446 = math.tanh %445 : vector<8x32xf32>
    %447 = arith.mulf %444, %446 : vector<8x32xf32>
    %448 = arith.addf %443, %447 : vector<8x32xf32>
    %cst_137 = arith.constant dense<0.000000e+00> : vector<8x128xf32>
    %449 = tpu.matmul %448, %432, %cst_137 {dimension_numbers = #tpu.dot_dimension_numbers<[1], [0], [0], [1], [0, 0, 1, 1], [], []>} : vector<8x32xf32>, vector<32x128xf32>, vector<8x128xf32> -> vector<8x128xf32>
    %450 = arith.addf %435, %449 : vector<8x128xf32>
    %451 = vector.extract_strided_slice %450 {offsets = [0, 96], sizes = [8, 32], strides = [1, 1]} : vector<8x128xf32> to vector<8x32xf32>
    %452 = arith.negf %451 : vector<8x32xf32>
    %453 = math.exp %452 : vector<8x32xf32>
    %cst_138 = arith.constant 1.000000e+00 : f32
    %454 = vector.broadcast %cst_138 : f32 to vector<8x32xf32>
    %455 = arith.addf %454, %453 : vector<8x32xf32>
    %456 = arith.divf %454, %455 : vector<8x32xf32>
    %457 = math.tanh %448 : vector<8x32xf32>
    %458 = arith.mulf %456, %457 : vector<8x32xf32>
    %459 = tpu.concatenate %400, %458, %371 in 1 : vector<8x32xf32>, vector<8x32xf32>, vector<8x32xf32> -> vector<8x96xf32>
    %c0_139 = arith.constant 0 : index
    %c0_140 = arith.constant 0 : index
    %460 = vector.load %arg6[%c0_139, %c0_140] : memref<106x8xf32, #tpu.memory_space<vmem>>, vector<96x8xf32>
    %c96 = arith.constant 96 : index
    %c0_141 = arith.constant 0 : index
    %461 = vector.load %arg6[%c96, %c0_141] : memref<106x8xf32, #tpu.memory_space<vmem>>, vector<8x8xf32>
    %c104_142 = arith.constant 104 : index
    %c0_143 = arith.constant 0 : index
    %462 = vector.load %arg6[%c104_142, %c0_143] : memref<106x8xf32, #tpu.memory_space<vmem>>, vector<1x8xf32>
    %c105 = arith.constant 105 : index
    %c0_144 = arith.constant 0 : index
    %463 = vector.load %arg6[%c105, %c0_144] : memref<106x8xf32, #tpu.memory_space<vmem>>, vector<1x8xf32>
    %cst_145 = arith.constant dense<0.000000e+00> : vector<8x8xf32>
    %464 = tpu.matmul %459, %460, %cst_145 {dimension_numbers = #tpu.dot_dimension_numbers<[1], [0], [0], [1], [0, 0, 1, 1], [], []>} : vector<8x96xf32>, vector<96x8xf32>, vector<8x8xf32> -> vector<8x8xf32>
    %465 = vector.broadcast %462 : vector<1x8xf32> to vector<8x8xf32>
    %466 = arith.addf %464, %465 : vector<8x8xf32>
    %cst_146 = arith.constant 0.000000e+00 : f32
    %467 = vector.broadcast %cst_146 : f32 to vector<8x8xf32>
    %468 = arith.maximumf %466, %467 : vector<8x8xf32>
    %cst_147 = arith.constant dense<0.000000e+00> : vector<8x8xf32>
    %469 = tpu.matmul %468, %461, %cst_147 {dimension_numbers = #tpu.dot_dimension_numbers<[1], [0], [0], [1], [0, 0, 1, 1], [], []>} : vector<8x8xf32>, vector<8x8xf32>, vector<8x8xf32> -> vector<8x8xf32>
    %470 = vector.broadcast %463 : vector<1x8xf32> to vector<8x8xf32>
    %471 = arith.addf %469, %470 : vector<8x8xf32>
    %cst_148 = arith.constant dense<0xFF800000> : vector<8xf32>
    %472 = vector.multi_reduction <maximumf>, %471, %cst_148 [1] : vector<8x8xf32> to vector<8xf32>
    %473 = vector.shape_cast %472 : vector<8xf32> to vector<8x1xf32>
    %474 = vector.broadcast %473 : vector<8x1xf32> to vector<8x8xf32>
    %475 = arith.subf %471, %474 : vector<8x8xf32>
    %476 = math.exp %475 : vector<8x8xf32>
    %cst_149 = arith.constant dense<0.000000e+00> : vector<8xf32>
    %477 = vector.multi_reduction <add>, %476, %cst_149 [1] : vector<8x8xf32> to vector<8xf32>
    %478 = vector.shape_cast %477 : vector<8xf32> to vector<8x1xf32>
    %479 = vector.broadcast %478 : vector<8x1xf32> to vector<8x8xf32>
    %480 = arith.divf %476, %479 : vector<8x8xf32>
    %481 = vector.extract_strided_slice %480 {offsets = [0, 0], sizes = [2, 8], strides = [1, 1]} : vector<8x8xf32> to vector<2x8xf32>
    %c0_150 = arith.constant 0 : index
    %c0_151 = arith.constant 0 : index
    %482 = vector.load %arg7[%c0_150, %c0_151] : memref<2x8xf32, #tpu.memory_space<vmem>>, vector<2x8xf32>
    tpu.vector_store %arg7[%c0_150, %c0_151], %481 {strides = array<i32>} : memref<2x8xf32, #tpu.memory_space<vmem>>, vector<2x8xf32>,
    return
  }
}

</mosaic_0001>

<llo_original>
// kernel: parsing_forward.1
$region0: #{parsing_forward.1}
  #allocation0 [shape = 'u32[]', space=smem, size = 0x4, offset = 0x4, fixed_abs, tag = 'smem constant byte address 0x4 - core index']
  #allocation1 [shape = 'u32[144,128]{1,0:T(1,128)}', space=vmem, size = 0x12000, scoped, tag = 'internal scratch']
  %s0 = inlined_call_operand.vmem [shape: f32[40,16], index: 0, kind: input, shape index: {}]
  %s1 = inlined_call_operand.vmem [shape: f32[48,16], index: 1, kind: input, shape index: {}]
  %s2 = inlined_call_operand.vmem [shape: f32[32,8], index: 2, kind: input, shape index: {}]
  %s3 = inlined_call_operand.vmem [shape: f32[113,128], index: 3, kind: input, shape index: {}]
  %s4 = inlined_call_operand.hbm [shape: f32[113,128], index: 4, kind: input, shape index: {}]
  %s5 = inlined_call_operand.hbm [shape: f32[105,128], index: 5, kind: input, shape index: {}]
  %s6 = inlined_call_operand.hbm [shape: f32[106,8], index: 6, kind: input, shape index: {}]
  %s7 = inlined_call_operand.hbm [shape: f32[2,8], index: 7, kind: output, shape index: {}]
  %s8 = sld [smem:[#allocation0]]
  $region50: #{parsing_forward.1} parent=0
    _
  %s10 = ssub.s32 1, %s8
  %s11 = scalar_select 0, %s10, %s8
  $region1: #{parsing_forward.1} parent=0
    #allocation2 [shape = 'u8[61440]{0}', space=vmem, size = 0xf000, scoped, tag = 'input window, operand 4, single buffered']
    #allocation3 [shape = 's32[1]{0}', space=sflag, size = 0x4, scoped, tag = 'scoped memory for parsing_forward.1']
    #allocation4 [shape = 's32[1]{0}', space=sflag, size = 0x4, scoped, tag = 'scoped memory for parsing_forward.1']
    #allocation5 [shape = 'u8[57344]{0}', space=vmem, size = 0xe000, scoped, tag = 'input window, operand 5, single buffered']
    #allocation6 [shape = 's32[1]{0}', space=sflag, size = 0x4, scoped, tag = 'scoped memory for parsing_forward.1']
    #allocation7 [shape = 'u8[57344]{0}', space=vmem, size = 0xe000, scoped, tag = 'input window, operand 6, single buffered']
    #allocation8 [shape = 'u8[1024]{0}', space=vmem, size = 0x400, scoped, tag = 'output window, operand 0, single buffered']
    %12 = vsyncpa [#allocation3], 0
    %13 = vsyncpa [#allocation6], 0
    %14 = vsyncpa [#allocation4], 0
    // Predicated region
    $region2: #{parsing_forward.1} parent=1 // pred_check
      _
    $region3: #{parsing_forward.1} parent=1 // pred_check_branch
      %16 = sbr.rel (0) target = $region5
    $region4: #{parsing_forward.1} parent=1 // pred_region
      _
    $region5: #{parsing_forward.1} parent=1 // pred_fallthru
      _
    // Predicated region
    $region6: #{parsing_forward.1} parent=1 // pred_check
      _
    $region7: #{parsing_forward.1} parent=1 // pred_check_branch
      %18 = sbr.rel (0) target = $region9
    $region8: #{parsing_forward.1} parent=1 // pred_region
      _
    $region9: #{parsing_forward.1} parent=1 // pred_fallthru
      _
    // Predicated region
    $region10: #{parsing_forward.1} parent=1 // pred_check
      _
    $region11: #{parsing_forward.1} parent=1 // pred_check_branch
      %20 = sbr.rel (0) target = $region13
    $region12: #{parsing_forward.1} parent=1 // pred_region
      _
    $region13: #{parsing_forward.1} parent=1 // pred_fallthru
      _
    // Predicated region
    $region14: #{parsing_forward.1} parent=1 // pred_check
      _
    $region15: #{parsing_forward.1} parent=1 // pred_check_branch
      %22 = sbr.rel (0) target = $region17
    $region16: #{parsing_forward.1} parent=1 // pred_region
      _
    $region17: #{parsing_forward.1} parent=1 // pred_fallthru
      _
    // Predicated region
    $region18: #{parsing_forward.1} parent=1 // pred_check
      _
    $region19: #{parsing_forward.1} parent=1 // pred_check_branch
      %24 = sbr.rel (0) target = $region21
    $region20: #{parsing_forward.1} parent=1 // pred_region
      %s26 = ssub.s32 1920, 1920
      %27 = vsyncadd [#allocation3], %s26
      %s28 = sshll.u32 [#allocation2], 4
      %s29 = int_to_ptr.vmem [resolvable:$true] %s28
      %34 = dma.hbm_to_vmem [thread:$0]  %s4, 1920, %s29, [#allocation3], 128, 128, 8
    $region21: #{parsing_forward.1} parent=1 // pred_fallthru
      _
    // Predicated region
    $region22: #{parsing_forward.1} parent=1 // pred_check
      _
    $region23: #{parsing_forward.1} parent=1 // pred_check_branch
      %36 = sbr.rel (0) target = $region25
    $region24: #{parsing_forward.1} parent=1 // pred_region
      %s38 = ssub.s32 1792, 1792
      %39 = vsyncadd [#allocation6], %s38
      %s40 = sshll.u32 [#allocation5], 4
      %s41 = int_to_ptr.vmem [resolvable:$true] %s40
      %46 = dma.hbm_to_vmem [thread:$0]  %s5, 1792, %s41, [#allocation6], 128, 128, 8
    $region25: #{parsing_forward.1} parent=1 // pred_fallthru
      _
    // Predicated region
    $region26: #{parsing_forward.1} parent=1 // pred_check
      _
    $region27: #{parsing_forward.1} parent=1 // pred_check_branch
      %48 = sbr.rel (0) target = $region29
    $region28: #{parsing_forward.1} parent=1 // pred_region
      %s50 = ssub.s32 1792, 1792
      %51 = vsyncadd [#allocation6], %s50
      %s52 = sshll.u32 [#allocation7], 4
      %s53 = int_to_ptr.vmem [resolvable:$true] %s52
      %58 = dma.hbm_to_vmem [thread:$0]  %s6, 1792, %s53, [#allocation6], 128, 128, 8
    $region29: #{parsing_forward.1} parent=1 // pred_fallthru
      _
    // Predicated region
    $region30: #{parsing_forward.1} parent=1 // pred_check
      _
    $region31: #{parsing_forward.1} parent=1 // pred_check_branch
      %60 = sbr.rel (0) target = $region33
    $region32: #{parsing_forward.1} parent=1 // pred_region
      %61 = dma.done [#allocation3], 1920
    $region33: #{parsing_forward.1} parent=1 // pred_fallthru
      _
    // Predicated region
    $region34: #{parsing_forward.1} parent=1 // pred_check
      _
    $region35: #{parsing_forward.1} parent=1 // pred_check_branch
      %63 = sbr.rel (0) target = $region37
    $region36: #{parsing_forward.1} parent=1 // pred_region
      %64 = dma.done [#allocation6], 1792
    $region37: #{parsing_forward.1} parent=1 // pred_fallthru
      _
    // Predicated region
    $region38: #{parsing_forward.1} parent=1 // pred_check
      _
    $region39: #{parsing_forward.1} parent=1 // pred_check_branch
      %66 = sbr.rel (0) target = $region41
    $region40: #{parsing_forward.1} parent=1 // pred_region
      %67 = dma.done [#allocation6], 1792
    $region41: #{parsing_forward.1} parent=1 // pred_fallthru
      _
    %v68 = vld [vmem:[%s3] sm:$0xff]
    %v69 = vld [vmem:[%s3 + $0x8] sm:$0xff]
    %v70 = vld [vmem:[%s3 + $0x70] sm:$0x1]
    %v71 = vld [vmem:[%s0] sm:$0xff]
    %v72 = vld [vmem:[%s0 + $0x8] sm:$0xff]
    %v73 = vld [vmem:[%s0 + $0x10] sm:$0xff]
    %v74 = vld [vmem:[%s0 + $0x18] sm:$0xff]
    %v75 = vld [vmem:[%s0 + $0x20] sm:$0xff]
    %v76 = vlaneseq
    %v77 = vshrl.u32 %v76, 7
    %v78 = vsub.s32 0, %v77
    %v79 = vrot.slane %v70, %v78
    %vm80 = vcmask 130048
    %v82 = vsel %vm80, %v71, 0
    %v85 = vsel %vm80, %v72, 0
    %v88 = vsel %vm80, %v73, 0
    %v91 = vsel %vm80, %v74, 0
    %v94 = vsel %vm80, %v75, 0
    %96 = vmatprep.subr.mxu0 0.0
    %97 = vmatpush1.msra.mxu0 0.0
    %98 = vmatprep.subr.mxu0 0.0
    %99 = vmatpush1.msra.mxu0 0.0
    %100 = vmatprep.subr.mxu0 0.0
    %101 = vmatpush1.msra.mxu0 0.0
    %102 = vmatprep.subr.mxu0 0.0
    %103 = vmatpush1.msra.mxu0 0.0
    %104 = vmatprep.subr.mxu0 0.0
    %105 = vmatpush1.msra.mxu0 0.0
    %106 = vmatprep.subr.mxu0 0.0
    %107 = vmatpush1.msra.mxu0 0.0
    %108 = vmatprep.subr.mxu0 0.0
    %109 = vmatpush1.msra.mxu0 0.0
    %110 = vmatprep.subr.mxu0 0.0
    %111 = vmatpush1.msra.mxu0 0.0
    %112 = vmatprep.subr.mxu0 0.0
    %113 = vmatpush1.msra.mxu0 0.0
    %114 = vmatprep.subr.mxu0 0.0
    %115 = vmatpush1.msra.mxu0 0.0
    %116 = vmatprep.subr.mxu0 0.0
    %117 = vmatpush1.msra.mxu0 0.0
    %118 = vmatprep.subr.mxu0 0.0
    %119 = vmatpush1.msra.mxu0 0.0
    %120 = vmatprep.subr.mxu0 0.0
    %121 = vmatpush1.msra.mxu0 0.0
    %122 = vmatprep.subr.mxu0 0.0
    %123 = vmatpush1.msra.mxu0 0.0
    %124 = vmatprep.subr.mxu0 0.0
    %125 = vmatpush1.msra.mxu0 %v69
    %126 = vmatprep.subr.mxu0 0.0
    %127 = vmatpush1.msra.mxu0 %v68
    %128 = vmatprep.subr.mxu0 0.0
    %129 = vmatpush2.msra.mxu0 0.0
    %130 = vmatprep.subr.mxu0 0.0
    %131 = vmatpush2.msra.mxu0 0.0
    %132 = vmatprep.subr.mxu0 0.0
    %133 = vmatpush2.msra.mxu0 0.0
    %134 = vmatprep.subr.mxu0 0.0
    %135 = vmatpush2.msra.mxu0 0.0
    %136 = vmatprep.subr.mxu0 0.0
    %137 = vmatpush2.msra.mxu0 0.0
    %138 = vmatprep.subr.mxu0 0.0
    %139 = vmatpush2.msra.mxu0 0.0
    %140 = vmatprep.subr.mxu0 0.0
    %141 = vmatpush2.msra.mxu0 0.0
    %142 = vmatprep.subr.mxu0 0.0
    %143 = vmatpush2.msra.mxu0 0.0
    %144 = vmatprep.subr.mxu0 0.0
    %145 = vmatpush2.msra.mxu0 0.0
    %146 = vmatprep.subr.mxu0 0.0
    %147 = vmatpush2.msra.mxu0 0.0
    %148 = vmatprep.subr.mxu0 0.0
    %149 = vmatpush2.msra.mxu0 0.0
    %150 = vmatprep.subr.mxu0 0.0
    %151 = vmatpush2.msra.mxu0 0.0
    %152 = vmatprep.subr.mxu0 0.0
    %153 = vmatpush2.msra.mxu0 0.0
    %154 = vmatprep.subr.mxu0 0.0
    %155 = vmatpush2.msra.mxu0 0.0
    %156 = vmatprep.subr.mxu0 0.0
    %157 = vmatpush2.msra.mxu0 0.0
    %158 = vmatprep.subr.mxu0 0.0
    %159 = vmatpush2.msra.mxu0 0.0
    %160 = vmatprep.mubr.f32.mxu0 0.0
    %161 = vmatmul.mubr.f32.gmra.mxu0 %v82
    %v162 = vpop.f32.mrf.mxu0
    %v163 = vadd.f32 %v79, %v162
    %v164 = vpop.f32.mrf.mxu0
    %165 = vmatprep.mubr.f32.mxu0 0.0
    %166 = vmatmul.mubr.f32.gmra.mxu0 %v85
    %v167 = vpop.f32.mrf.mxu0
    %v168 = vadd.f32 %v79, %v167
    %v169 = vpop.f32.mrf.mxu0
    %170 = vmatprep.mubr.f32.mxu0 0.0
    %171 = vmatmul.mubr.f32.gmra.mxu0 %v88
    %v172 = vpop.f32.mrf.mxu0
    %v173 = vadd.f32 %v79, %v172
    %v174 = vpop.f32.mrf.mxu0
    %175 = vmatprep.mubr.f32.mxu0 0.0
    %176 = vmatmul.mubr.f32.gmra.mxu0 %v91
    %v177 = vpop.f32.mrf.mxu0
    %v178 = vadd.f32 %v79, %v177
    %v179 = vpop.f32.mrf.mxu0
    %180 = vmatprep.mubr.f32.mxu0 0.0
    %181 = vmatmul.mubr.f32.gmra.mxu0 %v94
    %v182 = vpop.f32.mrf.mxu0
    %v183 = vadd.f32 %v79, %v182
    %v184 = vpop.f32.mrf.mxu0
    %185 = vdwg.mxu0
    %v186 = vld [vmem:[#allocation2] sm:$0xff]
    %v187 = vld [vmem:[#allocation2 + $0x8] sm:$0xff]
    %v188 = vld [vmem:[#allocation2 + $0x70] sm:$0x1]
    %v189 = vld [vmem:[%s1] sm:$0xff]
    %v190 = vld [vmem:[%s1 + $0x8] sm:$0xff]
    %v191 = vld [vmem:[%s1 + $0x10] sm:$0xff]
    %v192 = vld [vmem:[%s1 + $0x18] sm:$0xff]
    %v193 = vld [vmem:[%s1 + $0x20] sm:$0xff]
    %v194 = vld [vmem:[%s1 + $0x28] sm:$0xff]
    %v195 = vlaneseq
    %v196 = vshrl.u32 %v195, 7
    %v197 = vsub.s32 0, %v196
    %v198 = vrot.slane %v188, %v197
    %v200 = vsel %vm80, %v189, 0
    %v203 = vsel %vm80, %v190, 0
    %v206 = vsel %vm80, %v191, 0
    %v209 = vsel %vm80, %v192, 0
    %v212 = vsel %vm80, %v193, 0
    %v215 = vsel %vm80, %v194, 0
    %217 = vmatprep.subr.mxu0 0.0
    %218 = vmatpush1.msra.mxu0 0.0
    %219 = vmatprep.subr.mxu0 0.0
    %220 = vmatpush1.msra.mxu0 0.0
    %221 = vmatprep.subr.mxu0 0.0
    %222 = vmatpush1.msra.mxu0 0.0
    %223 = vmatprep.subr.mxu0 0.0
    %224 = vmatpush1.msra.mxu0 0.0
    %225 = vmatprep.subr.mxu0 0.0
    %226 = vmatpush1.msra.mxu0 0.0
    %227 = vmatprep.subr.mxu0 0.0
    %228 = vmatpush1.msra.mxu0 0.0
    %229 = vmatprep.subr.mxu0 0.0
    %230 = vmatpush1.msra.mxu0 0.0
    %231 = vmatprep.subr.mxu0 0.0
    %232 = vmatpush1.msra.mxu0 0.0
    %233 = vmatprep.subr.mxu0 0.0
    %234 = vmatpush1.msra.mxu0 0.0
    %235 = vmatprep.subr.mxu0 0.0
    %236 = vmatpush1.msra.mxu0 0.0
    %237 = vmatprep.subr.mxu0 0.0
    %238 = vmatpush1.msra.mxu0 0.0
    %239 = vmatprep.subr.mxu0 0.0
    %240 = vmatpush1.msra.mxu0 0.0
    %241 = vmatprep.subr.mxu0 0.0
    %242 = vmatpush1.msra.mxu0 0.0
    %243 = vmatprep.subr.mxu0 0.0
    %244 = vmatpush1.msra.mxu0 0.0
    %245 = vmatprep.subr.mxu0 0.0
    %246 = vmatpush1.msra.mxu0 %v187
    %247 = vmatprep.subr.mxu0 0.0
    %248 = vmatpush1.msra.mxu0 %v186
    %249 = vmatprep.subr.mxu0 0.0
    %250 = vmatpush2.msra.mxu0 0.0
    %251 = vmatprep.subr.mxu0 0.0
    %252 = vmatpush2.msra.mxu0 0.0
    %253 = vmatprep.subr.mxu0 0.0
    %254 = vmatpush2.msra.mxu0 0.0
    %255 = vmatprep.subr.mxu0 0.0
    %256 = vmatpush2.msra.mxu0 0.0
    %257 = vmatprep.subr.mxu0 0.0
    %258 = vmatpush2.msra.mxu0 0.0
    %259 = vmatprep.subr.mxu0 0.0
    %260 = vmatpush2.msra.mxu0 0.0
    %261 = vmatprep.subr.mxu0 0.0
    %262 = vmatpush2.msra.mxu0 0.0
    %263 = vmatprep.subr.mxu0 0.0
    %264 = vmatpush2.msra.mxu0 0.0
    %265 = vmatprep.subr.mxu0 0.0
    %266 = vmatpush2.msra.mxu0 0.0
    %267 = vmatprep.subr.mxu0 0.0
    %268 = vmatpush2.msra.mxu0 0.0
    %269 = vmatprep.subr.mxu0 0.0
    %270 = vmatpush2.msra.mxu0 0.0
    %271 = vmatprep.subr.mxu0 0.0
    %272 = vmatpush2.msra.mxu0 0.0
    %273 = vmatprep.subr.mxu0 0.0
    %274 = vmatpush2.msra.mxu0 0.0
    %275 = vmatprep.subr.mxu0 0.0
    %276 = vmatpush2.msra.mxu0 0.0
    %277 = vmatprep.subr.mxu0 0.0
    %278 = vmatpush2.msra.mxu0 0.0
    %279 = vmatprep.subr.mxu0 0.0
    %280 = vmatpush2.msra.mxu0 0.0
    %281 = vmatprep.mubr.f32.mxu0 0.0
    %282 = vmatmul.mubr.f32.gmra.mxu0 %v200
    %v283 = vpop.f32.mrf.mxu0
    %v284 = vadd.f32 %v198, %v283
    %v285 = vpop.f32.mrf.mxu0
    %286 = vmatprep.mubr.f32.mxu0 0.0
    %287 = vmatmul.mubr.f32.gmra.mxu0 %v203
    %v288 = vpop.f32.mrf.mxu0
    %v289 = vadd.f32 %v198, %v288
    %v290 = vpop.f32.mrf.mxu0
    %291 = vmatprep.mubr.f32.mxu0 0.0
    %292 = vmatmul.mubr.f32.gmra.mxu0 %v206
    %v293 = vpop.f32.mrf.mxu0
    %v294 = vadd.f32 %v198, %v293
    %v295 = vpop.f32.mrf.mxu0
    %296 = vmatprep.mubr.f32.mxu0 0.0
    %297 = vmatmul.mubr.f32.gmra.mxu0 %v209
    %v298 = vpop.f32.mrf.mxu0
    %v299 = vadd.f32 %v198, %v298
    %v300 = vpop.f32.mrf.mxu0
    %301 = vmatprep.mubr.f32.mxu0 0.0
    %302 = vmatmul.mubr.f32.gmra.mxu0 %v212
    %v303 = vpop.f32.mrf.mxu0
    %v304 = vadd.f32 %v198, %v303
    %v305 = vpop.f32.mrf.mxu0
    %306 = vmatprep.mubr.f32.mxu0 0.0
    %307 = vmatmul.mubr.f32.gmra.mxu0 %v215
    %v308 = vpop.f32.mrf.mxu0
    %v309 = vadd.f32 %v198, %v308
    %v310 = vpop.f32.mrf.mxu0
    %311 = vdwg.mxu0
    %v312 = vld [vmem:[#allocation5] sm:$0xff]
    %v313 = vld [vmem:[#allocation5 + $0x68] sm:$0x1]
    %v314 = vld [vmem:[%s2] sm:$0xff]
    %v315 = vld [vmem:[%s2 + $0x8] sm:$0xff]
    %v316 = vld [vmem:[%s2 + $0x10] sm:$0xff]
    %v317 = vld [vmem:[%s2 + $0x18] sm:$0xff]
    %v318 = vlaneseq
    %v319 = vshrl.u32 %v318, 7
    %v320 = vsub.s32 0, %v319
    %v321 = vrot.slane %v313, %v320
    %vm322 = vcmask 64512
    %v324 = vsel %vm322, %v314, 0
    %v327 = vsel %vm322, %v315, 0
    %v330 = vsel %vm322, %v316, 0
    %v333 = vsel %vm322, %v317, 0
    %335 = vmatprep.subr.mxu0 0.0
    %336 = vmatpush1.msra.mxu0 0.0
    %337 = vmatprep.subr.mxu0 0.0
    %338 = vmatpush1.msra.mxu0 0.0
    %339 = vmatprep.subr.mxu0 0.0
    %340 = vmatpush1.msra.mxu0 0.0
    %341 = vmatprep.subr.mxu0 0.0
    %342 = vmatpush1.msra.mxu0 0.0
    %343 = vmatprep.subr.mxu0 0.0
    %344 = vmatpush1.msra.mxu0 0.0
    %345 = vmatprep.subr.mxu0 0.0
    %346 = vmatpush1.msra.mxu0 0.0
    %347 = vmatprep.subr.mxu0 0.0
    %348 = vmatpush1.msra.mxu0 0.0
    %349 = vmatprep.subr.mxu0 0.0
    %350 = vmatpush1.msra.mxu0 0.0
    %351 = vmatprep.subr.mxu0 0.0
    %352 = vmatpush1.msra.mxu0 0.0
    %353 = vmatprep.subr.mxu0 0.0
    %354 = vmatpush1.msra.mxu0 0.0
    %355 = vmatprep.subr.mxu0 0.0
    %356 = vmatpush1.msra.mxu0 0.0
    %357 = vmatprep.subr.mxu0 0.0
    %358 = vmatpush1.msra.mxu0 0.0
    %359 = vmatprep.subr.mxu0 0.0
    %360 = vmatpush1.msra.mxu0 0.0
    %361 = vmatprep.subr.mxu0 0.0
    %362 = vmatpush1.msra.mxu0 0.0
    %363 = vmatprep.subr.mxu0 0.0
    %364 = vmatpush1.msra.mxu0 0.0
    %365 = vmatprep.subr.mxu0 0.0
    %366 = vmatpush1.msra.mxu0 %v312
    %367 = vmatprep.subr.mxu0 0.0
    %368 = vmatpush2.msra.mxu0 0.0
    %369 = vmatprep.subr.mxu0 0.0
    %370 = vmatpush2.msra.mxu0 0.0
    %371 = vmatprep.subr.mxu0 0.0
    %372 = vmatpush2.msra.mxu0 0.0
    %373 = vmatprep.subr.mxu0 0.0
    %374 = vmatpush2.msra.mxu0 0.0
    %375 = vmatprep.subr.mxu0 0.0
    %376 = vmatpush2.msra.mxu0 0.0
    %377 = vmatprep.subr.mxu0 0.0
    %378 = vmatpush2.msra.mxu0 0.0
    %379 = vmatprep.subr.mxu0 0.0
    %380 = vmatpush2.msra.mxu0 0.0
    %381 = vmatprep.subr.mxu0 0.0
    %382 = vmatpush2.msra.mxu0 0.0
    %383 = vmatprep.subr.mxu0 0.0
    %384 = vmatpush2.msra.mxu0 0.0
    %385 = vmatprep.subr.mxu0 0.0
    %386 = vmatpush2.msra.mxu0 0.0
    %387 = vmatprep.subr.mxu0 0.0
    %388 = vmatpush2.msra.mxu0 0.0
    %389 = vmatprep.subr.mxu0 0.0
    %390 = vmatpush2.msra.mxu0 0.0
    %391 = vmatprep.subr.mxu0 0.0
    %392 = vmatpush2.msra.mxu0 0.0
    %393 = vmatprep.subr.mxu0 0.0
    %394 = vmatpush2.msra.mxu0 0.0
    %395 = vmatprep.subr.mxu0 0.0
    %396 = vmatpush2.msra.mxu0 0.0
    %397 = vmatprep.subr.mxu0 0.0
    %398 = vmatpush2.msra.mxu0 0.0
    %399 = vmatprep.mubr.f32.mxu0 0.0
    %400 = vmatmul.mubr.f32.gmra.mxu0 %v324
    %v401 = vpop.f32.mrf.mxu0
    %v402 = vadd.f32 %v321, %v401
    %v403 = vpop.f32.mrf.mxu0
    %404 = vmatprep.mubr.f32.mxu0 0.0
    %405 = vmatmul.mubr.f32.gmra.mxu0 %v327
    %v406 = vpop.f32.mrf.mxu0
    %v407 = vadd.f32 %v321, %v406
    %v408 = vpop.f32.mrf.mxu0
    %409 = vmatprep.mubr.f32.mxu0 0.0
    %410 = vmatmul.mubr.f32.gmra.mxu0 %v330
    %v411 = vpop.f32.mrf.mxu0
    %v412 = vadd.f32 %v321, %v411
    %v413 = vpop.f32.mrf.mxu0
    %414 = vmatprep.mubr.f32.mxu0 0.0
    %415 = vmatmul.mubr.f32.gmra.mxu0 %v333
    %v416 = vpop.f32.mrf.mxu0
    %v417 = vadd.f32 %v321, %v416
    %v418 = vpop.f32.mrf.mxu0
    %419 = vdwg.mxu0
    %v420 = vld [vmem:[%s3 + $0x10] sm:$0xff]
    %v421 = vld [vmem:[%s3 + $0x18] sm:$0xff]
    %v422 = vld [vmem:[%s3 + $0x20] sm:$0xff]
    %v423 = vld [vmem:[%s3 + $0x28] sm:$0xff]
    %v424 = vld [vmem:[%s3 + $0x30] sm:$0xff]
    %v425 = vld [vmem:[%s3 + $0x38] sm:$0xff]
    %v426 = vld [vmem:[%s3 + $0x40] sm:$0xff]
    %v427 = vld [vmem:[%s3 + $0x48] sm:$0xff]
    %v428 = vld [vmem:[%s3 + $0x50] sm:$0xff]
    %v429 = vld [vmem:[%s3 + $0x58] sm:$0xff]
    %v430 = vld [vmem:[%s3 + $0x60] sm:$0xff]
    %v431 = vld [vmem:[%s3 + $0x68] sm:$0xff]
    %vm432 = vcmask 523264
    %v434 = vsel %vm432, 0.0, 0
    %436 = vmatprep.subr.mxu0 0.0
    %437 = vmatpush1.msra.mxu0 0.0
    %438 = vmatprep.subr.mxu0 0.0
    %439 = vmatpush1.msra.mxu0 0.0
    %440 = vmatprep.subr.mxu0 0.0
    %441 = vmatpush1.msra.mxu0 0.0
    %442 = vmatprep.subr.mxu0 0.0
    %443 = vmatpush1.msra.mxu0 0.0
    %444 = vmatprep.subr.mxu0 0.0
    %445 = vmatpush1.msra.mxu0 0.0
    %446 = vmatprep.subr.mxu0 0.0
    %447 = vmatpush1.msra.mxu0 0.0
    %448 = vmatprep.subr.mxu0 0.0
    %449 = vmatpush1.msra.mxu0 0.0
    %450 = vmatprep.subr.mxu0 0.0
    %451 = vmatpush1.msra.mxu0 0.0
    %452 = vmatprep.subr.mxu0 0.0
    %453 = vmatpush1.msra.mxu0 %v427
    %454 = vmatprep.subr.mxu0 0.0
    %455 = vmatpush1.msra.mxu0 %v426
    %456 = vmatprep.subr.mxu0 0.0
    %457 = vmatpush1.msra.mxu0 %v425
    %458 = vmatprep.subr.mxu0 0.0
    %459 = vmatpush1.msra.mxu0 %v424
    %460 = vmatprep.subr.mxu0 0.0
    %461 = vmatpush1.msra.mxu0 %v423
    %462 = vmatprep.subr.mxu0 0.0
    %463 = vmatpush1.msra.mxu0 %v422
    %464 = vmatprep.subr.mxu0 0.0
    %465 = vmatpush1.msra.mxu0 %v421
    %466 = vmatprep.subr.mxu0 0.0
    %467 = vmatpush1.msra.mxu0 %v420
    %468 = vmatprep.subr.mxu0 0.0
    %469 = vmatpush2.msra.mxu0 0.0
    %470 = vmatprep.subr.mxu0 0.0
    %471 = vmatpush2.msra.mxu0 0.0
    %472 = vmatprep.subr.mxu0 0.0
    %473 = vmatpush2.msra.mxu0 0.0
    %474 = vmatprep.subr.mxu0 0.0
    %475 = vmatpush2.msra.mxu0 0.0
    %476 = vmatprep.subr.mxu0 0.0
    %477 = vmatpush2.msra.mxu0 0.0
    %478 = vmatprep.subr.mxu0 0.0
    %479 = vmatpush2.msra.mxu0 0.0
    %480 = vmatprep.subr.mxu0 0.0
    %481 = vmatpush2.msra.mxu0 0.0
    %482 = vmatprep.subr.mxu0 0.0
    %483 = vmatpush2.msra.mxu0 0.0
    %484 = vmatprep.subr.mxu0 0.0
    %485 = vmatpush2.msra.mxu0 0.0
    %486 = vmatprep.subr.mxu0 0.0
    %487 = vmatpush2.msra.mxu0 0.0
    %488 = vmatprep.subr.mxu0 0.0
    %489 = vmatpush2.msra.mxu0 0.0
    %490 = vmatprep.subr.mxu0 0.0
    %491 = vmatpush2.msra.mxu0 0.0
    %492 = vmatprep.subr.mxu0 0.0
    %493 = vmatpush2.msra.mxu0 0.0
    %494 = vmatprep.subr.mxu0 0.0
    %495 = vmatpush2.msra.mxu0 0.0
    %496 = vmatprep.subr.mxu0 0.0
    %497 = vmatpush2.msra.mxu0 0.0
    %498 = vmatprep.subr.mxu0 0.0
    %499 = vmatpush2.msra.mxu0 0.0
    %500 = vmatprep.mubr.f32.mxu0 0.0
    %501 = vmatmul.mubr.f32.gmra.mxu0 %v434
    %v502 = vpop.f32.mrf.mxu0
    %v503 = vadd.f32 0.0, %v502
    %v504 = vpop.f32.mrf.mxu0
    %505 = vdwg.mxu0
    %v506 = vadd.f32 %v163, %v503
    %v507 = vxor.u32 %v506, 2147483648
    %v508 = vmul.f32 %v507, 1.442695
    %v509 = vpow.pop %v508
    %v510 = vadd.f32 %v509, 1.0
    %v511 = vrcp.pop %v510
    %v512 = vmul.f32 1.0, %v511
    %v513 = vmul.f32 %v512, 0.0
    %v514 = vtanh.pop %v506
    %516 = vrot.lane.b32.xlu0 %v514, 64
    %v517 = vpop.permute.xlu0 %516
    %v519 = vmul.f32 %v512, %v517
    %521 = vrot.lane.b32.xlu0 %v519, 32
    %v522 = vpop.permute.xlu0 %521
    %v524 = vadd.f32 %v513, %v522
    %526 = vrot.lane.b32.xlu0 %v524, 96
    %v527 = vpop.permute.xlu0 %526
    %vm528 = vcmask 261120
    %v529 = vsel %vm528, %v527, 0
    %531 = vmatprep.subr.mxu0 0.0
    %532 = vmatpush1.msra.mxu0 0.0
    %533 = vmatprep.subr.mxu0 0.0
    %534 = vmatpush1.msra.mxu0 0.0
    %535 = vmatprep.subr.mxu0 0.0
    %536 = vmatpush1.msra.mxu0 0.0
    %537 = vmatprep.subr.mxu0 0.0
    %538 = vmatpush1.msra.mxu0 0.0
    %539 = vmatprep.subr.mxu0 0.0
    %540 = vmatpush1.msra.mxu0 0.0
    %541 = vmatprep.subr.mxu0 0.0
    %542 = vmatpush1.msra.mxu0 0.0
    %543 = vmatprep.subr.mxu0 0.0
    %544 = vmatpush1.msra.mxu0 0.0
    %545 = vmatprep.subr.mxu0 0.0
    %546 = vmatpush1.msra.mxu0 0.0
    %547 = vmatprep.subr.mxu0 0.0
    %548 = vmatpush1.msra.mxu0 0.0
    %549 = vmatprep.subr.mxu0 0.0
    %550 = vmatpush1.msra.mxu0 0.0
    %551 = vmatprep.subr.mxu0 0.0
    %552 = vmatpush1.msra.mxu0 0.0
    %553 = vmatprep.subr.mxu0 0.0
    %554 = vmatpush1.msra.mxu0 0.0
    %555 = vmatprep.subr.mxu0 0.0
    %556 = vmatpush1.msra.mxu0 %v431
    %557 = vmatprep.subr.mxu0 0.0
    %558 = vmatpush1.msra.mxu0 %v430
    %559 = vmatprep.subr.mxu0 0.0
    %560 = vmatpush1.msra.mxu0 %v429
    %561 = vmatprep.subr.mxu0 0.0
    %562 = vmatpush1.msra.mxu0 %v428
    %563 = vmatprep.subr.mxu0 0.0
    %564 = vmatpush2.msra.mxu0 0.0
    %565 = vmatprep.subr.mxu0 0.0
    %566 = vmatpush2.msra.mxu0 0.0
    %567 = vmatprep.subr.mxu0 0.0
    %568 = vmatpush2.msra.mxu0 0.0
    %569 = vmatprep.subr.mxu0 0.0
    %570 = vmatpush2.msra.mxu0 0.0
    %571 = vmatprep.subr.mxu0 0.0
    %572 = vmatpush2.msra.mxu0 0.0
    %573 = vmatprep.subr.mxu0 0.0
    %574 = vmatpush2.msra.mxu0 0.0
    %575 = vmatprep.subr.mxu0 0.0
    %576 = vmatpush2.msra.mxu0 0.0
    %577 = vmatprep.subr.mxu0 0.0
    %578 = vmatpush2.msra.mxu0 0.0
    %579 = vmatprep.subr.mxu0 0.0
    %580 = vmatpush2.msra.mxu0 0.0
    %581 = vmatprep.subr.mxu0 0.0
    %582 = vmatpush2.msra.mxu0 0.0
    %583 = vmatprep.subr.mxu0 0.0
    %584 = vmatpush2.msra.mxu0 0.0
    %585 = vmatprep.subr.mxu0 0.0
    %586 = vmatpush2.msra.mxu0 0.0
    %587 = vmatprep.subr.mxu0 0.0
    %588 = vmatpush2.msra.mxu0 0.0
    %589 = vmatprep.subr.mxu0 0.0
    %590 = vmatpush2.msra.mxu0 0.0
    %591 = vmatprep.subr.mxu0 0.0
    %592 = vmatpush2.msra.mxu0 0.0
    %593 = vmatprep.subr.mxu0 0.0
    %594 = vmatpush2.msra.mxu0 0.0
    %595 = vmatprep.mubr.f32.mxu0 0.0
    %596 = vmatmul.mubr.f32.gmra.mxu0 %v529
    %v597 = vpop.f32.mrf.mxu0
    %v598 = vadd.f32 0.0, %v597
    %v599 = vpop.f32.mrf.mxu0
    %600 = vdwg.mxu0
    %v601 = vadd.f32 %v506, %v598
    %v602 = vxor.u32 %v601, 2147483648
    %v603 = vmul.f32 %v602, 1.442695
    %v604 = vpow.pop %v603
    %v605 = vadd.f32 %v604, 1.0
    %v606 = vrcp.pop %v605
    %v607 = vmul.f32 1.0, %v606
    %v608 = vtanh.pop %v524
    %610 = vrot.lane.b32.xlu0 %v608, 64
    %v611 = vpop.permute.xlu0 %610
    %v613 = vmul.f32 %v607, %v611
    %v614 = vld [vmem:[#allocation2 + $0x10] sm:$0xff]
    %v615 = vld [vmem:[#allocation2 + $0x18] sm:$0xff]
    %v616 = vld [vmem:[#allocation2 + $0x20] sm:$0xff]
    %v617 = vld [vmem:[#allocation2 + $0x28] sm:$0xff]
    %v618 = vld [vmem:[#allocation2 + $0x30] sm:$0xff]
    %v619 = vld [vmem:[#allocation2 + $0x38] sm:$0xff]
    %v620 = vld [vmem:[#allocation2 + $0x40] sm:$0xff]
    %v621 = vld [vmem:[#allocation2 + $0x48] sm:$0xff]
    %v622 = vld [vmem:[#allocation2 + $0x50] sm:$0xff]
    %v623 = vld [vmem:[#allocation2 + $0x58] sm:$0xff]
    %v624 = vld [vmem:[#allocation2 + $0x60] sm:$0xff]
    %v625 = vld [vmem:[#allocation2 + $0x68] sm:$0xff]
    %626 = vmatprep.subr.mxu0 0.0
    %627 = vmatpush1.msra.mxu0 0.0
    %628 = vmatprep.subr.mxu0 0.0
    %629 = vmatpush1.msra.mxu0 0.0
    %630 = vmatprep.subr.mxu0 0.0
    %631 = vmatpush1.msra.mxu0 0.0
    %632 = vmatprep.subr.mxu0 0.0
    %633 = vmatpush1.msra.mxu0 0.0
    %634 = vmatprep.subr.mxu0 0.0
    %635 = vmatpush1.msra.mxu0 0.0
    %636 = vmatprep.subr.mxu0 0.0
    %637 = vmatpush1.msra.mxu0 0.0
    %638 = vmatprep.subr.mxu0 0.0
    %639 = vmatpush1.msra.mxu0 0.0
    %640 = vmatprep.subr.mxu0 0.0
    %641 = vmatpush1.msra.mxu0 0.0
    %642 = vmatprep.subr.mxu0 0.0
    %643 = vmatpush1.msra.mxu0 %v621
    %644 = vmatprep.subr.mxu0 0.0
    %645 = vmatpush1.msra.mxu0 %v620
    %646 = vmatprep.subr.mxu0 0.0
    %647 = vmatpush1.msra.mxu0 %v619
    %648 = vmatprep.subr.mxu0 0.0
    %649 = vmatpush1.msra.mxu0 %v618
    %650 = vmatprep.subr.mxu0 0.0
    %651 = vmatpush1.msra.mxu0 %v617
    %652 = vmatprep.subr.mxu0 0.0
    %653 = vmatpush1.msra.mxu0 %v616
    %654 = vmatprep.subr.mxu0 0.0
    %655 = vmatpush1.msra.mxu0 %v615
    %656 = vmatprep.subr.mxu0 0.0
    %657 = vmatpush1.msra.mxu0 %v614
    %658 = vmatprep.subr.mxu0 0.0
    %659 = vmatpush2.msra.mxu0 0.0
    %660 = vmatprep.subr.mxu0 0.0
    %661 = vmatpush2.msra.mxu0 0.0
    %662 = vmatprep.subr.mxu0 0.0
    %663 = vmatpush2.msra.mxu0 0.0
    %664 = vmatprep.subr.mxu0 0.0
    %665 = vmatpush2.msra.mxu0 0.0
    %666 = vmatprep.subr.mxu0 0.0
    %667 = vmatpush2.msra.mxu0 0.0
    %668 = vmatprep.subr.mxu0 0.0
    %669 = vmatpush2.msra.mxu0 0.0
    %670 = vmatprep.subr.mxu0 0.0
    %671 = vmatpush2.msra.mxu0 0.0
    %672 = vmatprep.subr.mxu0 0.0
    %673 = vmatpush2.msra.mxu0 0.0
    %674 = vmatprep.subr.mxu0 0.0
    %675 = vmatpush2.msra.mxu0 0.0
    %676 = vmatprep.subr.mxu0 0.0
    %677 = vmatpush2.msra.mxu0 0.0
    %678 = vmatprep.subr.mxu0 0.0
    %679 = vmatpush2.msra.mxu0 0.0
    %680 = vmatprep.subr.mxu0 0.0
    %681 = vmatpush2.msra.mxu0 0.0
    %682 = vmatprep.subr.mxu0 0.0
    %683 = vmatpush2.msra.mxu0 0.0
    %684 = vmatprep.subr.mxu0 0.0
    %685 = vmatpush2.msra.mxu0 0.0
    %686 = vmatprep.subr.mxu0 0.0
    %687 = vmatpush2.msra.mxu0 0.0
    %688 = vmatprep.subr.mxu0 0.0
    %689 = vmatpush2.msra.mxu0 0.0
    %690 = vmatprep.mubr.f32.mxu0 0.0
    %691 = vmatmul.mubr.f32.gmra.mxu0 %v434
    %v692 = vpop.f32.mrf.mxu0
    %v693 = vadd.f32 0.0, %v692
    %v694 = vpop.f32.mrf.mxu0
    %695 = vdwg.mxu0
    %v696 = vadd.f32 %v284, %v693
    %v697 = vxor.u32 %v696, 2147483648
    %v698 = vmul.f32 %v697, 1.442695
    %v699 = vpow.pop %v698
    %v700 = vadd.f32 %v699, 1.0
    %v701 = vrcp.pop %v700
    %v702 = vmul.f32 1.0, %v701
    %v703 = vmul.f32 %v702, 0.0
    %v704 = vtanh.pop %v696
    %706 = vrot.lane.b32.xlu0 %v704, 64
    %v707 = vpop.permute.xlu0 %706
    %v709 = vmul.f32 %v702, %v707
    %711 = vrot.lane.b32.xlu0 %v709, 32
    %v712 = vpop.permute.xlu0 %711
    %v714 = vadd.f32 %v703, %v712
    %716 = vrot.lane.b32.xlu0 %v714, 96
    %v717 = vpop.permute.xlu0 %716
    %v718 = vsel %vm528, %v717, 0
    %720 = vmatprep.subr.mxu0 0.0
    %721 = vmatpush1.msra.mxu0 0.0
    %722 = vmatprep.subr.mxu0 0.0
    %723 = vmatpush1.msra.mxu0 0.0
    %724 = vmatprep.subr.mxu0 0.0
    %725 = vmatpush1.msra.mxu0 0.0
    %726 = vmatprep.subr.mxu0 0.0
    %727 = vmatpush1.msra.mxu0 0.0
    %728 = vmatprep.subr.mxu0 0.0
    %729 = vmatpush1.msra.mxu0 0.0
    %730 = vmatprep.subr.mxu0 0.0
    %731 = vmatpush1.msra.mxu0 0.0
    %732 = vmatprep.subr.mxu0 0.0
    %733 = vmatpush1.msra.mxu0 0.0
    %734 = vmatprep.subr.mxu0 0.0
    %735 = vmatpush1.msra.mxu0 0.0
    %736 = vmatprep.subr.mxu0 0.0
    %737 = vmatpush1.msra.mxu0 0.0
    %738 = vmatprep.subr.mxu0 0.0
    %739 = vmatpush1.msra.mxu0 0.0
    %740 = vmatprep.subr.mxu0 0.0
    %741 = vmatpush1.msra.mxu0 0.0
    %742 = vmatprep.subr.mxu0 0.0
    %743 = vmatpush1.msra.mxu0 0.0
    %744 = vmatprep.subr.mxu0 0.0
    %745 = vmatpush1.msra.mxu0 %v625
    %746 = vmatprep.subr.mxu0 0.0
    %747 = vmatpush1.msra.mxu0 %v624
    %748 = vmatprep.subr.mxu0 0.0
    %749 = vmatpush1.msra.mxu0 %v623
    %750 = vmatprep.subr.mxu0 0.0
    %751 = vmatpush1.msra.mxu0 %v622
    %752 = vmatprep.subr.mxu0 0.0
    %753 = vmatpush2.msra.mxu0 0.0
    %754 = vmatprep.subr.mxu0 0.0
    %755 = vmatpush2.msra.mxu0 0.0
    %756 = vmatprep.subr.mxu0 0.0
    %757 = vmatpush2.msra.mxu0 0.0
    %758 = vmatprep.subr.mxu0 0.0
    %759 = vmatpush2.msra.mxu0 0.0
    %760 = vmatprep.subr.mxu0 0.0
    %761 = vmatpush2.msra.mxu0 0.0
    %762 = vmatprep.subr.mxu0 0.0
    %763 = vmatpush2.msra.mxu0 0.0
    %764 = vmatprep.subr.mxu0 0.0
    %765 = vmatpush2.msra.mxu0 0.0
    %766 = vmatprep.subr.mxu0 0.0
    %767 = vmatpush2.msra.mxu0 0.0
    %768 = vmatprep.subr.mxu0 0.0
    %769 = vmatpush2.msra.mxu0 0.0
    %770 = vmatprep.subr.mxu0 0.0
    %771 = vmatpush2.msra.mxu0 0.0
    %772 = vmatprep.subr.mxu0 0.0
    %773 = vmatpush2.msra.mxu0 0.0
    %774 = vmatprep.subr.mxu0 0.0
    %775 = vmatpush2.msra.mxu0 0.0
    %776 = vmatprep.subr.mxu0 0.0
    %777 = vmatpush2.msra.mxu0 0.0
    %778 = vmatprep.subr.mxu0 0.0
    %779 = vmatpush2.msra.mxu0 0.0
    %780 = vmatprep.subr.mxu0 0.0
    %781 = vmatpush2.msra.mxu0 0.0
    %782 = vmatprep.subr.mxu0 0.0
    %783 = vmatpush2.msra.mxu0 0.0
    %784 = vmatprep.mubr.f32.mxu0 0.0
    %785 = vmatmul.mubr.f32.gmra.mxu0 %v718
    %v786 = vpop.f32.mrf.mxu0
    %v787 = vadd.f32 0.0, %v786
    %v788 = vpop.f32.mrf.mxu0
    %789 = vdwg.mxu0
    %v790 = vadd.f32 %v696, %v787
    %v791 = vxor.u32 %v790, 2147483648
    %v792 = vmul.f32 %v791, 1.442695
    %v793 = vpow.pop %v792
    %v794 = vadd.f32 %v793, 1.0
    %v795 = vrcp.pop %v794
    %v796 = vmul.f32 1.0, %v795
    %v797 = vtanh.pop %v714
    %799 = vrot.lane.b32.xlu0 %v797, 64
    %v800 = vpop.permute.xlu0 %799
    %v802 = vmul.f32 %v796, %v800
    %v803 = vld [vmem:[#allocation5 + $0x8] sm:$0xff]
    %v804 = vld [vmem:[#allocation5 + $0x10] sm:$0xff]
    %v805 = vld [vmem:[#allocation5 + $0x18] sm:$0xff]
    %v806 = vld [vmem:[#allocation5 + $0x20] sm:$0xff]
    %v807 = vld [vmem:[#allocation5 + $0x28] sm:$0xff]
    %v808 = vld [vmem:[#allocation5 + $0x30] sm:$0xff]
    %v809 = vld [vmem:[#allocation5 + $0x38] sm:$0xff]
    %v810 = vld [vmem:[#allocation5 + $0x40] sm:$0xff]
    %v811 = vld [vmem:[#allocation5 + $0x48] sm:$0xff]
    %v812 = vld [vmem:[#allocation5 + $0x50] sm:$0xff]
    %v813 = vld [vmem:[#allocation5 + $0x58] sm:$0xff]
    %v814 = vld [vmem:[#allocation5 + $0x60] sm:$0xff]
    %815 = vmatprep.subr.mxu0 0.0
    %816 = vmatpush1.msra.mxu0 0.0
    %817 = vmatprep.subr.mxu0 0.0
    %818 = vmatpush1.msra.mxu0 0.0
    %819 = vmatprep.subr.mxu0 0.0
    %820 = vmatpush1.msra.mxu0 0.0
    %821 = vmatprep.subr.mxu0 0.0
    %822 = vmatpush1.msra.mxu0 0.0
    %823 = vmatprep.subr.mxu0 0.0
    %824 = vmatpush1.msra.mxu0 0.0
    %825 = vmatprep.subr.mxu0 0.0
    %826 = vmatpush1.msra.mxu0 0.0
    %827 = vmatprep.subr.mxu0 0.0
    %828 = vmatpush1.msra.mxu0 0.0
    %829 = vmatprep.subr.mxu0 0.0
    %830 = vmatpush1.msra.mxu0 0.0
    %831 = vmatprep.subr.mxu0 0.0
    %832 = vmatpush1.msra.mxu0 %v810
    %833 = vmatprep.subr.mxu0 0.0
    %834 = vmatpush1.msra.mxu0 %v809
    %835 = vmatprep.subr.mxu0 0.0
    %836 = vmatpush1.msra.mxu0 %v808
    %837 = vmatprep.subr.mxu0 0.0
    %838 = vmatpush1.msra.mxu0 %v807
    %839 = vmatprep.subr.mxu0 0.0
    %840 = vmatpush1.msra.mxu0 %v806
    %841 = vmatprep.subr.mxu0 0.0
    %842 = vmatpush1.msra.mxu0 %v805
    %843 = vmatprep.subr.mxu0 0.0
    %844 = vmatpush1.msra.mxu0 %v804
    %845 = vmatprep.subr.mxu0 0.0
    %846 = vmatpush1.msra.mxu0 %v803
    %847 = vmatprep.subr.mxu0 0.0
    %848 = vmatpush2.msra.mxu0 0.0
    %849 = vmatprep.subr.mxu0 0.0
    %850 = vmatpush2.msra.mxu0 0.0
    %851 = vmatprep.subr.mxu0 0.0
    %852 = vmatpush2.msra.mxu0 0.0
    %853 = vmatprep.subr.mxu0 0.0
    %854 = vmatpush2.msra.mxu0 0.0
    %855 = vmatprep.subr.mxu0 0.0
    %856 = vmatpush2.msra.mxu0 0.0
    %857 = vmatprep.subr.mxu0 0.0
    %858 = vmatpush2.msra.mxu0 0.0
    %859 = vmatprep.subr.mxu0 0.0
    %860 = vmatpush2.msra.mxu0 0.0
    %861 = vmatprep.subr.mxu0 0.0
    %862 = vmatpush2.msra.mxu0 0.0
    %863 = vmatprep.subr.mxu0 0.0
    %864 = vmatpush2.msra.mxu0 0.0
    %865 = vmatprep.subr.mxu0 0.0
    %866 = vmatpush2.msra.mxu0 0.0
    %867 = vmatprep.subr.mxu0 0.0
    %868 = vmatpush2.msra.mxu0 0.0
    %869 = vmatprep.subr.mxu0 0.0
    %870 = vmatpush2.msra.mxu0 0.0
    %871 = vmatprep.subr.mxu0 0.0
    %872 = vmatpush2.msra.mxu0 0.0
    %873 = vmatprep.subr.mxu0 0.0
    %874 = vmatpush2.msra.mxu0 0.0
    %875 = vmatprep.subr.mxu0 0.0
    %876 = vmatpush2.msra.mxu0 0.0
    %877 = vmatprep.subr.mxu0 0.0
    %878 = vmatpush2.msra.mxu0 0.0
    %879 = vmatprep.mubr.f32.mxu0 0.0
    %880 = vmatmul.mubr.f32.gmra.mxu0 %v434
    %v881 = vpop.f32.mrf.mxu0
    %v882 = vadd.f32 0.0, %v881
    %v883 = vpop.f32.mrf.mxu0
    %884 = vdwg.mxu0
    %v885 = vadd.f32 %v402, %v882
    %v886 = vxor.u32 %v885, 2147483648
    %v887 = vmul.f32 %v886, 1.442695
    %v888 = vpow.pop %v887
    %v889 = vadd.f32 %v888, 1.0
    %v890 = vrcp.pop %v889
    %v891 = vmul.f32 1.0, %v890
    %v892 = vmul.f32 %v891, 0.0
    %v893 = vtanh.pop %v885
    %895 = vrot.lane.b32.xlu0 %v893, 64
    %v896 = vpop.permute.xlu0 %895
    %v898 = vmul.f32 %v891, %v896
    %900 = vrot.lane.b32.xlu0 %v898, 32
    %v901 = vpop.permute.xlu0 %900
    %v903 = vadd.f32 %v892, %v901
    %905 = vrot.lane.b32.xlu0 %v903, 96
    %v906 = vpop.permute.xlu0 %905
    %v907 = vsel %vm528, %v906, 0
    %909 = vmatprep.subr.mxu0 0.0
    %910 = vmatpush1.msra.mxu0 0.0
    %911 = vmatprep.subr.mxu0 0.0
    %912 = vmatpush1.msra.mxu0 0.0
    %913 = vmatprep.subr.mxu0 0.0
    %914 = vmatpush1.msra.mxu0 0.0
    %915 = vmatprep.subr.mxu0 0.0
    %916 = vmatpush1.msra.mxu0 0.0
    %917 = vmatprep.subr.mxu0 0.0
    %918 = vmatpush1.msra.mxu0 0.0
    %919 = vmatprep.subr.mxu0 0.0
    %920 = vmatpush1.msra.mxu0 0.0
    %921 = vmatprep.subr.mxu0 0.0
    %922 = vmatpush1.msra.mxu0 0.0
    %923 = vmatprep.subr.mxu0 0.0
    %924 = vmatpush1.msra.mxu0 0.0
    %925 = vmatprep.subr.mxu0 0.0
    %926 = vmatpush1.msra.mxu0 0.0
    %927 = vmatprep.subr.mxu0 0.0
    %928 = vmatpush1.msra.mxu0 0.0
    %929 = vmatprep.subr.mxu0 0.0
    %930 = vmatpush1.msra.mxu0 0.0
    %931 = vmatprep.subr.mxu0 0.0
    %932 = vmatpush1.msra.mxu0 0.0
    %933 = vmatprep.subr.mxu0 0.0
    %934 = vmatpush1.msra.mxu0 %v814
    %935 = vmatprep.subr.mxu0 0.0
    %936 = vmatpush1.msra.mxu0 %v813
    %937 = vmatprep.subr.mxu0 0.0
    %938 = vmatpush1.msra.mxu0 %v812
    %939 = vmatprep.subr.mxu0 0.0
    %940 = vmatpush1.msra.mxu0 %v811
    %941 = vmatprep.subr.mxu0 0.0
    %942 = vmatpush2.msra.mxu0 0.0
    %943 = vmatprep.subr.mxu0 0.0
    %944 = vmatpush2.msra.mxu0 0.0
    %945 = vmatprep.subr.mxu0 0.0
    %946 = vmatpush2.msra.mxu0 0.0
    %947 = vmatprep.subr.mxu0 0.0
    %948 = vmatpush2.msra.mxu0 0.0
    %949 = vmatprep.subr.mxu0 0.0
    %950 = vmatpush2.msra.mxu0 0.0
    %951 = vmatprep.subr.mxu0 0.0
    %952 = vmatpush2.msra.mxu0 0.0
    %953 = vmatprep.subr.mxu0 0.0
    %954 = vmatpush2.msra.mxu0 0.0
    %955 = vmatprep.subr.mxu0 0.0
    %956 = vmatpush2.msra.mxu0 0.0
    %957 = vmatprep.subr.mxu0 0.0
    %958 = vmatpush2.msra.mxu0 0.0
    %959 = vmatprep.subr.mxu0 0.0
    %960 = vmatpush2.msra.mxu0 0.0
    %961 = vmatprep.subr.mxu0 0.0
    %962 = vmatpush2.msra.mxu0 0.0
    %963 = vmatprep.subr.mxu0 0.0
    %964 = vmatpush2.msra.mxu0 0.0
    %965 = vmatprep.subr.mxu0 0.0
    %966 = vmatpush2.msra.mxu0 0.0
    %967 = vmatprep.subr.mxu0 0.0
    %968 = vmatpush2.msra.mxu0 0.0
    %969 = vmatprep.subr.mxu0 0.0
    %970 = vmatpush2.msra.mxu0 0.0
    %971 = vmatprep.subr.mxu0 0.0
    %972 = vmatpush2.msra.mxu0 0.0
    %973 = vmatprep.mubr.f32.mxu0 0.0
    %974 = vmatmul.mubr.f32.gmra.mxu0 %v907
    %v975 = vpop.f32.mrf.mxu0
    %v976 = vadd.f32 0.0, %v975
    %v977 = vpop.f32.mrf.mxu0
    %978 = vdwg.mxu0
    %v979 = vadd.f32 %v885, %v976
    %v980 = vxor.u32 %v979, 2147483648
    %v981 = vmul.f32 %v980, 1.442695
    %v982 = vpow.pop %v981
    %v983 = vadd.f32 %v982, 1.0
    %v984 = vrcp.pop %v983
    %v985 = vmul.f32 1.0, %v984
    %v986 = vtanh.pop %v903
    %988 = vrot.lane.b32.xlu0 %v986, 64
    %v989 = vpop.permute.xlu0 %988
    %v991 = vmul.f32 %v985, %v989
    %993 = vrot.lane.b32.xlu0 %v613, 32
    %v994 = vpop.permute.xlu0 %993
    %v996 = vsel %vm528, %v994, %v524
    %v998 = vsel %vm432, %v996, 0
    %1000 = vmatprep.subr.mxu0 0.0
    %1001 = vmatpush1.msra.mxu0 0.0
    %1002 = vmatprep.subr.mxu0 0.0
    %1003 = vmatpush1.msra.mxu0 0.0
    %1004 = vmatprep.subr.mxu0 0.0
    %1005 = vmatpush1.msra.mxu0 0.0
    %1006 = vmatprep.subr.mxu0 0.0
    %1007 = vmatpush1.msra.mxu0 0.0
    %1008 = vmatprep.subr.mxu0 0.0
    %1009 = vmatpush1.msra.mxu0 0.0
    %1010 = vmatprep.subr.mxu0 0.0
    %1011 = vmatpush1.msra.mxu0 0.0
    %1012 = vmatprep.subr.mxu0 0.0
    %1013 = vmatpush1.msra.mxu0 0.0
    %1014 = vmatprep.subr.mxu0 0.0
    %1015 = vmatpush1.msra.mxu0 0.0
    %1016 = vmatprep.subr.mxu0 0.0
    %1017 = vmatpush1.msra.mxu0 %v427
    %1018 = vmatprep.subr.mxu0 0.0
    %1019 = vmatpush1.msra.mxu0 %v426
    %1020 = vmatprep.subr.mxu0 0.0
    %1021 = vmatpush1.msra.mxu0 %v425
    %1022 = vmatprep.subr.mxu0 0.0
    %1023 = vmatpush1.msra.mxu0 %v424
    %1024 = vmatprep.subr.mxu0 0.0
    %1025 = vmatpush1.msra.mxu0 %v423
    %1026 = vmatprep.subr.mxu0 0.0
    %1027 = vmatpush1.msra.mxu0 %v422
    %1028 = vmatprep.subr.mxu0 0.0
    %1029 = vmatpush1.msra.mxu0 %v421
    %1030 = vmatprep.subr.mxu0 0.0
    %1031 = vmatpush1.msra.mxu0 %v420
    %1032 = vmatprep.subr.mxu0 0.0
    %1033 = vmatpush2.msra.mxu0 0.0
    %1034 = vmatprep.subr.mxu0 0.0
    %1035 = vmatpush2.msra.mxu0 0.0
    %1036 = vmatprep.subr.mxu0 0.0
    %1037 = vmatpush2.msra.mxu0 0.0
    %1038 = vmatprep.subr.mxu0 0.0
    %1039 = vmatpush2.msra.mxu0 0.0
    %1040 = vmatprep.subr.mxu0 0.0
    %1041 = vmatpush2.msra.mxu0 0.0
    %1042 = vmatprep.subr.mxu0 0.0
    %1043 = vmatpush2.msra.mxu0 0.0
    %1044 = vmatprep.subr.mxu0 0.0
    %1045 = vmatpush2.msra.mxu0 0.0
    %1046 = vmatprep.subr.mxu0 0.0
    %1047 = vmatpush2.msra.mxu0 0.0
    %1048 = vmatprep.subr.mxu0 0.0
    %1049 = vmatpush2.msra.mxu0 0.0
    %1050 = vmatprep.subr.mxu0 0.0
    %1051 = vmatpush2.msra.mxu0 0.0
    %1052 = vmatprep.subr.mxu0 0.0
    %1053 = vmatpush2.msra.mxu0 0.0
    %1054 = vmatprep.subr.mxu0 0.0
    %1055 = vmatpush2.msra.mxu0 0.0
    %1056 = vmatprep.subr.mxu0 0.0
    %1057 = vmatpush2.msra.mxu0 0.0
    %1058 = vmatprep.subr.mxu0 0.0
    %1059 = vmatpush2.msra.mxu0 0.0
    %1060 = vmatprep.subr.mxu0 0.0
    %1061 = vmatpush2.msra.mxu0 0.0
    %1062 = vmatprep.subr.mxu0 0.0
    %1063 = vmatpush2.msra.mxu0 0.0
    %1064 = vmatprep.mubr.f32.mxu0 0.0
    %1065 = vmatmul.mubr.f32.gmra.mxu0 %v998
    %v1066 = vpop.f32.mrf.mxu0
    %v1067 = vadd.f32 0.0, %v1066
    %v1068 = vpop.f32.mrf.mxu0
    %1069 = vdwg.mxu0
    %v1070 = vadd.f32 %v168, %v1067
    %v1071 = vxor.u32 %v1070, 2147483648
    %v1072 = vmul.f32 %v1071, 1.442695
    %v1073 = vpow.pop %v1072
    %v1074 = vadd.f32 %v1073, 1.0
    %v1075 = vrcp.pop %v1074
    %v1076 = vmul.f32 1.0, %v1075
    %v1077 = vmul.f32 %v1076, %v524
    %v1078 = vtanh.pop %v1070
    %1080 = vrot.lane.b32.xlu0 %v1078, 64
    %v1081 = vpop.permute.xlu0 %1080
    %v1083 = vmul.f32 %v1076, %v1081
    %1085 = vrot.lane.b32.xlu0 %v1083, 32
    %v1086 = vpop.permute.xlu0 %1085
    %v1088 = vadd.f32 %v1077, %v1086
    %1090 = vrot.lane.b32.xlu0 %v1088, 96
    %v1091 = vpop.permute.xlu0 %1090
    %v1092 = vsel %vm528, %v1091, 0
    %1094 = vmatprep.subr.mxu0 0.0
    %1095 = vmatpush1.msra.mxu0 0.0
    %1096 = vmatprep.subr.mxu0 0.0
    %1097 = vmatpush1.msra.mxu0 0.0
    %1098 = vmatprep.subr.mxu0 0.0
    %1099 = vmatpush1.msra.mxu0 0.0
    %1100 = vmatprep.subr.mxu0 0.0
    %1101 = vmatpush1.msra.mxu0 0.0
    %1102 = vmatprep.subr.mxu0 0.0
    %1103 = vmatpush1.msra.mxu0 0.0
    %1104 = vmatprep.subr.mxu0 0.0
    %1105 = vmatpush1.msra.mxu0 0.0
    %1106 = vmatprep.subr.mxu0 0.0
    %1107 = vmatpush1.msra.mxu0 0.0
    %1108 = vmatprep.subr.mxu0 0.0
    %1109 = vmatpush1.msra.mxu0 0.0
    %1110 = vmatprep.subr.mxu0 0.0
    %1111 = vmatpush1.msra.mxu0 0.0
    %1112 = vmatprep.subr.mxu0 0.0
    %1113 = vmatpush1.msra.mxu0 0.0
    %1114 = vmatprep.subr.mxu0 0.0
    %1115 = vmatpush1.msra.mxu0 0.0
    %1116 = vmatprep.subr.mxu0 0.0
    %1117 = vmatpush1.msra.mxu0 0.0
    %1118 = vmatprep.subr.mxu0 0.0
    %1119 = vmatpush1.msra.mxu0 %v431
    %1120 = vmatprep.subr.mxu0 0.0
    %1121 = vmatpush1.msra.mxu0 %v430
    %1122 = vmatprep.subr.mxu0 0.0
    %1123 = vmatpush1.msra.mxu0 %v429
    %1124 = vmatprep.subr.mxu0 0.0
    %1125 = vmatpush1.msra.mxu0 %v428
    %1126 = vmatprep.subr.mxu0 0.0
    %1127 = vmatpush2.msra.mxu0 0.0
    %1128 = vmatprep.subr.mxu0 0.0
    %1129 = vmatpush2.msra.mxu0 0.0
    %1130 = vmatprep.subr.mxu0 0.0
    %1131 = vmatpush2.msra.mxu0 0.0
    %1132 = vmatprep.subr.mxu0 0.0
    %1133 = vmatpush2.msra.mxu0 0.0
    %1134 = vmatprep.subr.mxu0 0.0
    %1135 = vmatpush2.msra.mxu0 0.0
    %1136 = vmatprep.subr.mxu0 0.0
    %1137 = vmatpush2.msra.mxu0 0.0
    %1138 = vmatprep.subr.mxu0 0.0
    %1139 = vmatpush2.msra.mxu0 0.0
    %1140 = vmatprep.subr.mxu0 0.0
    %1141 = vmatpush2.msra.mxu0 0.0
    %1142 = vmatprep.subr.mxu0 0.0
    %1143 = vmatpush2.msra.mxu0 0.0
    %1144 = vmatprep.subr.mxu0 0.0
    %1145 = vmatpush2.msra.mxu0 0.0
    %1146 = vmatprep.subr.mxu0 0.0
    %1147 = vmatpush2.msra.mxu0 0.0
    %1148 = vmatprep.subr.mxu0 0.0
    %1149 = vmatpush2.msra.mxu0 0.0
    %1150 = vmatprep.subr.mxu0 0.0
    %1151 = vmatpush2.msra.mxu0 0.0
    %1152 = vmatprep.subr.mxu0 0.0
    %1153 = vmatpush2.msra.mxu0 0.0
    %1154 = vmatprep.subr.mxu0 0.0
    %1155 = vmatpush2.msra.mxu0 0.0
    %1156 = vmatprep.subr.mxu0 0.0
    %1157 = vmatpush2.msra.mxu0 0.0
    %1158 = vmatprep.mubr.f32.mxu0 0.0
    %1159 = vmatmul.mubr.f32.gmra.mxu0 %v1092
    %v1160 = vpop.f32.mrf.mxu0
    %v1161 = vadd.f32 0.0, %v1160
    %v1162 = vpop.f32.mrf.mxu0
    %1163 = vdwg.mxu0
    %v1164 = vadd.f32 %v1070, %v1161
    %v1165 = vxor.u32 %v1164, 2147483648
    %v1166 = vmul.f32 %v1165, 1.442695
    %v1167 = vpow.pop %v1166
    %v1168 = vadd.f32 %v1167, 1.0
    %v1169 = vrcp.pop %v1168
    %v1170 = vmul.f32 1.0, %v1169
    %v1171 = vtanh.pop %v1088
    %1173 = vrot.lane.b32.xlu0 %v1171, 64
    %v1174 = vpop.permute.xlu0 %1173
    %v1176 = vmul.f32 %v1170, %v1174
    %1178 = vrot.lane.b32.xlu0 %v802, 32
    %v1179 = vpop.permute.xlu0 %1178
    %v1181 = vsel %vm528, %v1179, %v714
    %v1183 = vsel %vm432, %v1181, 0
    %1185 = vmatprep.subr.mxu0 0.0
    %1186 = vmatpush1.msra.mxu0 0.0
    %1187 = vmatprep.subr.mxu0 0.0
    %1188 = vmatpush1.msra.mxu0 0.0
    %1189 = vmatprep.subr.mxu0 0.0
    %1190 = vmatpush1.msra.mxu0 0.0
    %1191 = vmatprep.subr.mxu0 0.0
    %1192 = vmatpush1.msra.mxu0 0.0
    %1193 = vmatprep.subr.mxu0 0.0
    %1194 = vmatpush1.msra.mxu0 0.0
    %1195 = vmatprep.subr.mxu0 0.0
    %1196 = vmatpush1.msra.mxu0 0.0
    %1197 = vmatprep.subr.mxu0 0.0
    %1198 = vmatpush1.msra.mxu0 0.0
    %1199 = vmatprep.subr.mxu0 0.0
    %1200 = vmatpush1.msra.mxu0 0.0
    %1201 = vmatprep.subr.mxu0 0.0
    %1202 = vmatpush1.msra.mxu0 %v621
    %1203 = vmatprep.subr.mxu0 0.0
    %1204 = vmatpush1.msra.mxu0 %v620
    %1205 = vmatprep.subr.mxu0 0.0
    %1206 = vmatpush1.msra.mxu0 %v619
    %1207 = vmatprep.subr.mxu0 0.0
    %1208 = vmatpush1.msra.mxu0 %v618
    %1209 = vmatprep.subr.mxu0 0.0
    %1210 = vmatpush1.msra.mxu0 %v617
    %1211 = vmatprep.subr.mxu0 0.0
    %1212 = vmatpush1.msra.mxu0 %v616
    %1213 = vmatprep.subr.mxu0 0.0
    %1214 = vmatpush1.msra.mxu0 %v615
    %1215 = vmatprep.subr.mxu0 0.0
    %1216 = vmatpush1.msra.mxu0 %v614
    %1217 = vmatprep.subr.mxu0 0.0
    %1218 = vmatpush2.msra.mxu0 0.0
    %1219 = vmatprep.subr.mxu0 0.0
    %1220 = vmatpush2.msra.mxu0 0.0
    %1221 = vmatprep.subr.mxu0 0.0
    %1222 = vmatpush2.msra.mxu0 0.0
    %1223 = vmatprep.subr.mxu0 0.0
    %1224 = vmatpush2.msra.mxu0 0.0
    %1225 = vmatprep.subr.mxu0 0.0
    %1226 = vmatpush2.msra.mxu0 0.0
    %1227 = vmatprep.subr.mxu0 0.0
    %1228 = vmatpush2.msra.mxu0 0.0
    %1229 = vmatprep.subr.mxu0 0.0
    %1230 = vmatpush2.msra.mxu0 0.0
    %1231 = vmatprep.subr.mxu0 0.0
    %1232 = vmatpush2.msra.mxu0 0.0
    %1233 = vmatprep.subr.mxu0 0.0
    %1234 = vmatpush2.msra.mxu0 0.0
    %1235 = vmatprep.subr.mxu0 0.0
    %1236 = vmatpush2.msra.mxu0 0.0
    %1237 = vmatprep.subr.mxu0 0.0
    %1238 = vmatpush2.msra.mxu0 0.0
    %1239 = vmatprep.subr.mxu0 0.0
    %1240 = vmatpush2.msra.mxu0 0.0
    %1241 = vmatprep.subr.mxu0 0.0
    %1242 = vmatpush2.msra.mxu0 0.0
    %1243 = vmatprep.subr.mxu0 0.0
    %1244 = vmatpush2.msra.mxu0 0.0
    %1245 = vmatprep.subr.mxu0 0.0
    %1246 = vmatpush2.msra.mxu0 0.0
    %1247 = vmatprep.subr.mxu0 0.0
    %1248 = vmatpush2.msra.mxu0 0.0
    %1249 = vmatprep.mubr.f32.mxu0 0.0
    %1250 = vmatmul.mubr.f32.gmra.mxu0 %v1183
    %v1251 = vpop.f32.mrf.mxu0
    %v1252 = vadd.f32 0.0, %v1251
    %v1253 = vpop.f32.mrf.mxu0
    %1254 = vdwg.mxu0
    %v1255 = vadd.f32 %v289, %v1252
    %v1256 = vxor.u32 %v1255, 2147483648
    %v1257 = vmul.f32 %v1256, 1.442695
    %v1258 = vpow.pop %v1257
    %v1259 = vadd.f32 %v1258, 1.0
    %v1260 = vrcp.pop %v1259
    %v1261 = vmul.f32 1.0, %v1260
    %v1262 = vmul.f32 %v1261, %v714
    %v1263 = vtanh.pop %v1255
    %1265 = vrot.lane.b32.xlu0 %v1263, 64
    %v1266 = vpop.permute.xlu0 %1265
    %v1268 = vmul.f32 %v1261, %v1266
    %1270 = vrot.lane.b32.xlu0 %v1268, 32
    %v1271 = vpop.permute.xlu0 %1270
    %v1273 = vadd.f32 %v1262, %v1271
    %1275 = vrot.lane.b32.xlu0 %v1273, 96
    %v1276 = vpop.permute.xlu0 %1275
    %v1277 = vsel %vm528, %v1276, 0
    %1279 = vmatprep.subr.mxu0 0.0
    %1280 = vmatpush1.msra.mxu0 0.0
    %1281 = vmatprep.subr.mxu0 0.0
    %1282 = vmatpush1.msra.mxu0 0.0
    %1283 = vmatprep.subr.mxu0 0.0
    %1284 = vmatpush1.msra.mxu0 0.0
    %1285 = vmatprep.subr.mxu0 0.0
    %1286 = vmatpush1.msra.mxu0 0.0
    %1287 = vmatprep.subr.mxu0 0.0
    %1288 = vmatpush1.msra.mxu0 0.0
    %1289 = vmatprep.subr.mxu0 0.0
    %1290 = vmatpush1.msra.mxu0 0.0
    %1291 = vmatprep.subr.mxu0 0.0
    %1292 = vmatpush1.msra.mxu0 0.0
    %1293 = vmatprep.subr.mxu0 0.0
    %1294 = vmatpush1.msra.mxu0 0.0
    %1295 = vmatprep.subr.mxu0 0.0
    %1296 = vmatpush1.msra.mxu0 0.0
    %1297 = vmatprep.subr.mxu0 0.0
    %1298 = vmatpush1.msra.mxu0 0.0
    %1299 = vmatprep.subr.mxu0 0.0
    %1300 = vmatpush1.msra.mxu0 0.0
    %1301 = vmatprep.subr.mxu0 0.0
    %1302 = vmatpush1.msra.mxu0 0.0
    %1303 = vmatprep.subr.mxu0 0.0
    %1304 = vmatpush1.msra.mxu0 %v625
    %1305 = vmatprep.subr.mxu0 0.0
    %1306 = vmatpush1.msra.mxu0 %v624
    %1307 = vmatprep.subr.mxu0 0.0
    %1308 = vmatpush1.msra.mxu0 %v623
    %1309 = vmatprep.subr.mxu0 0.0
    %1310 = vmatpush1.msra.mxu0 %v622
    %1311 = vmatprep.subr.mxu0 0.0
    %1312 = vmatpush2.msra.mxu0 0.0
    %1313 = vmatprep.subr.mxu0 0.0
    %1314 = vmatpush2.msra.mxu0 0.0
    %1315 = vmatprep.subr.mxu0 0.0
    %1316 = vmatpush2.msra.mxu0 0.0
    %1317 = vmatprep.subr.mxu0 0.0
    %1318 = vmatpush2.msra.mxu0 0.0
    %1319 = vmatprep.subr.mxu0 0.0
    %1320 = vmatpush2.msra.mxu0 0.0
    %1321 = vmatprep.subr.mxu0 0.0
    %1322 = vmatpush2.msra.mxu0 0.0
    %1323 = vmatprep.subr.mxu0 0.0
    %1324 = vmatpush2.msra.mxu0 0.0
    %1325 = vmatprep.subr.mxu0 0.0
    %1326 = vmatpush2.msra.mxu0 0.0
    %1327 = vmatprep.subr.mxu0 0.0
    %1328 = vmatpush2.msra.mxu0 0.0
    %1329 = vmatprep.subr.mxu0 0.0
    %1330 = vmatpush2.msra.mxu0 0.0
    %1331 = vmatprep.subr.mxu0 0.0
    %1332 = vmatpush2.msra.mxu0 0.0
    %1333 = vmatprep.subr.mxu0 0.0
    %1334 = vmatpush2.msra.mxu0 0.0
    %1335 = vmatprep.subr.mxu0 0.0
    %1336 = vmatpush2.msra.mxu0 0.0
    %1337 = vmatprep.subr.mxu0 0.0
    %1338 = vmatpush2.msra.mxu0 0.0
    %1339 = vmatprep.subr.mxu0 0.0
    %1340 = vmatpush2.msra.mxu0 0.0
    %1341 = vmatprep.subr.mxu0 0.0
    %1342 = vmatpush2.msra.mxu0 0.0
    %1343 = vmatprep.mubr.f32.mxu0 0.0
    %1344 = vmatmul.mubr.f32.gmra.mxu0 %v1277
    %v1345 = vpop.f32.mrf.mxu0
    %v1346 = vadd.f32 0.0, %v1345
    %v1347 = vpop.f32.mrf.mxu0
    %1348 = vdwg.mxu0
    %v1349 = vadd.f32 %v1255, %v1346
    %v1350 = vxor.u32 %v1349, 2147483648
    %v1351 = vmul.f32 %v1350, 1.442695
    %v1352 = vpow.pop %v1351
    %v1353 = vadd.f32 %v1352, 1.0
    %v1354 = vrcp.pop %v1353
    %v1355 = vmul.f32 1.0, %v1354
    %v1356 = vtanh.pop %v1273
    %1358 = vrot.lane.b32.xlu0 %v1356, 64
    %v1359 = vpop.permute.xlu0 %1358
    %v1361 = vmul.f32 %v1355, %v1359
    %1363 = vrot.lane.b32.xlu0 %v991, 32
    %v1364 = vpop.permute.xlu0 %1363
    %v1366 = vsel %vm528, %v1364, %v903
    %v1368 = vsel %vm432, %v1366, 0
    %1370 = vmatprep.subr.mxu0 0.0
    %1371 = vmatpush1.msra.mxu0 0.0
    %1372 = vmatprep.subr.mxu0 0.0
    %1373 = vmatpush1.msra.mxu0 0.0
    %1374 = vmatprep.subr.mxu0 0.0
    %1375 = vmatpush1.msra.mxu0 0.0
    %1376 = vmatprep.subr.mxu0 0.0
    %1377 = vmatpush1.msra.mxu0 0.0
    %1378 = vmatprep.subr.mxu0 0.0
    %1379 = vmatpush1.msra.mxu0 0.0
    %1380 = vmatprep.subr.mxu0 0.0
    %1381 = vmatpush1.msra.mxu0 0.0
    %1382 = vmatprep.subr.mxu0 0.0
    %1383 = vmatpush1.msra.mxu0 0.0
    %1384 = vmatprep.subr.mxu0 0.0
    %1385 = vmatpush1.msra.mxu0 0.0
    %1386 = vmatprep.subr.mxu0 0.0
    %1387 = vmatpush1.msra.mxu0 %v810
    %1388 = vmatprep.subr.mxu0 0.0
    %1389 = vmatpush1.msra.mxu0 %v809
    %1390 = vmatprep.subr.mxu0 0.0
    %1391 = vmatpush1.msra.mxu0 %v808
    %1392 = vmatprep.subr.mxu0 0.0
    %1393 = vmatpush1.msra.mxu0 %v807
    %1394 = vmatprep.subr.mxu0 0.0
    %1395 = vmatpush1.msra.mxu0 %v806
    %1396 = vmatprep.subr.mxu0 0.0
    %1397 = vmatpush1.msra.mxu0 %v805
    %1398 = vmatprep.subr.mxu0 0.0
    %1399 = vmatpush1.msra.mxu0 %v804
    %1400 = vmatprep.subr.mxu0 0.0
    %1401 = vmatpush1.msra.mxu0 %v803
    %1402 = vmatprep.subr.mxu0 0.0
    %1403 = vmatpush2.msra.mxu0 0.0
    %1404 = vmatprep.subr.mxu0 0.0
    %1405 = vmatpush2.msra.mxu0 0.0
    %1406 = vmatprep.subr.mxu0 0.0
    %1407 = vmatpush2.msra.mxu0 0.0
    %1408 = vmatprep.subr.mxu0 0.0
    %1409 = vmatpush2.msra.mxu0 0.0
    %1410 = vmatprep.subr.mxu0 0.0
    %1411 = vmatpush2.msra.mxu0 0.0
    %1412 = vmatprep.subr.mxu0 0.0
    %1413 = vmatpush2.msra.mxu0 0.0
    %1414 = vmatprep.subr.mxu0 0.0
    %1415 = vmatpush2.msra.mxu0 0.0
    %1416 = vmatprep.subr.mxu0 0.0
    %1417 = vmatpush2.msra.mxu0 0.0
    %1418 = vmatprep.subr.mxu0 0.0
    %1419 = vmatpush2.msra.mxu0 0.0
    %1420 = vmatprep.subr.mxu0 0.0
    %1421 = vmatpush2.msra.mxu0 0.0
    %1422 = vmatprep.subr.mxu0 0.0
    %1423 = vmatpush2.msra.mxu0 0.0
    %1424 = vmatprep.subr.mxu0 0.0
    %1425 = vmatpush2.msra.mxu0 0.0
    %1426 = vmatprep.subr.mxu0 0.0
    %1427 = vmatpush2.msra.mxu0 0.0
    %1428 = vmatprep.subr.mxu0 0.0
    %1429 = vmatpush2.msra.mxu0 0.0
    %1430 = vmatprep.subr.mxu0 0.0
    %1431 = vmatpush2.msra.mxu0 0.0
    %1432 = vmatprep.subr.mxu0 0.0
    %1433 = vmatpush2.msra.mxu0 0.0
    %1434 = vmatprep.mubr.f32.mxu0 0.0
    %1435 = vmatmul.mubr.f32.gmra.mxu0 %v1368
    %v1436 = vpop.f32.mrf.mxu0
    %v1437 = vadd.f32 0.0, %v1436
    %v1438 = vpop.f32.mrf.mxu0
    %1439 = vdwg.mxu0
    %v1440 = vadd.f32 %v407, %v1437
    %v1441 = vxor.u32 %v1440, 2147483648
    %v1442 = vmul.f32 %v1441, 1.442695
    %v1443 = vpow.pop %v1442
    %v1444 = vadd.f32 %v1443, 1.0
    %v1445 = vrcp.pop %v1444
    %v1446 = vmul.f32 1.0, %v1445
    %v1447 = vmul.f32 %v1446, %v903
    %v1448 = vtanh.pop %v1440
    %1450 = vrot.lane.b32.xlu0 %v1448, 64
    %v1451 = vpop.permute.xlu0 %1450
    %v1453 = vmul.f32 %v1446, %v1451
    %1455 = vrot.lane.b32.xlu0 %v1453, 32
    %v1456 = vpop.permute.xlu0 %1455
    %v1458 = vadd.f32 %v1447, %v1456
    %1460 = vrot.lane.b32.xlu0 %v1458, 96
    %v1461 = vpop.permute.xlu0 %1460
    %v1462 = vsel %vm528, %v1461, 0
    %1464 = vmatprep.subr.mxu0 0.0
    %1465 = vmatpush1.msra.mxu0 0.0
    %1466 = vmatprep.subr.mxu0 0.0
    %1467 = vmatpush1.msra.mxu0 0.0
    %1468 = vmatprep.subr.mxu0 0.0
    %1469 = vmatpush1.msra.mxu0 0.0
    %1470 = vmatprep.subr.mxu0 0.0
    %1471 = vmatpush1.msra.mxu0 0.0
    %1472 = vmatprep.subr.mxu0 0.0
    %1473 = vmatpush1.msra.mxu0 0.0
    %1474 = vmatprep.subr.mxu0 0.0
    %1475 = vmatpush1.msra.mxu0 0.0
    %1476 = vmatprep.subr.mxu0 0.0
    %1477 = vmatpush1.msra.mxu0 0.0
    %1478 = vmatprep.subr.mxu0 0.0
    %1479 = vmatpush1.msra.mxu0 0.0
    %1480 = vmatprep.subr.mxu0 0.0
    %1481 = vmatpush1.msra.mxu0 0.0
    %1482 = vmatprep.subr.mxu0 0.0
    %1483 = vmatpush1.msra.mxu0 0.0
    %1484 = vmatprep.subr.mxu0 0.0
    %1485 = vmatpush1.msra.mxu0 0.0
    %1486 = vmatprep.subr.mxu0 0.0
    %1487 = vmatpush1.msra.mxu0 0.0
    %1488 = vmatprep.subr.mxu0 0.0
    %1489 = vmatpush1.msra.mxu0 %v814
    %1490 = vmatprep.subr.mxu0 0.0
    %1491 = vmatpush1.msra.mxu0 %v813
    %1492 = vmatprep.subr.mxu0 0.0
    %1493 = vmatpush1.msra.mxu0 %v812
    %1494 = vmatprep.subr.mxu0 0.0
    %1495 = vmatpush1.msra.mxu0 %v811
    %1496 = vmatprep.subr.mxu0 0.0
    %1497 = vmatpush2.msra.mxu0 0.0
    %1498 = vmatprep.subr.mxu0 0.0
    %1499 = vmatpush2.msra.mxu0 0.0
    %1500 = vmatprep.subr.mxu0 0.0
    %1501 = vmatpush2.msra.mxu0 0.0
    %1502 = vmatprep.subr.mxu0 0.0
    %1503 = vmatpush2.msra.mxu0 0.0
    %1504 = vmatprep.subr.mxu0 0.0
    %1505 = vmatpush2.msra.mxu0 0.0
    %1506 = vmatprep.subr.mxu0 0.0
    %1507 = vmatpush2.msra.mxu0 0.0
    %1508 = vmatprep.subr.mxu0 0.0
    %1509 = vmatpush2.msra.mxu0 0.0
    %1510 = vmatprep.subr.mxu0 0.0
    %1511 = vmatpush2.msra.mxu0 0.0
    %1512 = vmatprep.subr.mxu0 0.0
    %1513 = vmatpush2.msra.mxu0 0.0
    %1514 = vmatprep.subr.mxu0 0.0
    %1515 = vmatpush2.msra.mxu0 0.0
    %1516 = vmatprep.subr.mxu0 0.0
    %1517 = vmatpush2.msra.mxu0 0.0
    %1518 = vmatprep.subr.mxu0 0.0
    %1519 = vmatpush2.msra.mxu0 0.0
    %1520 = vmatprep.subr.mxu0 0.0
    %1521 = vmatpush2.msra.mxu0 0.0
    %1522 = vmatprep.subr.mxu0 0.0
    %1523 = vmatpush2.msra.mxu0 0.0
    %1524 = vmatprep.subr.mxu0 0.0
    %1525 = vmatpush2.msra.mxu0 0.0
    %1526 = vmatprep.subr.mxu0 0.0
    %1527 = vmatpush2.msra.mxu0 0.0
    %1528 = vmatprep.mubr.f32.mxu0 0.0
    %1529 = vmatmul.mubr.f32.gmra.mxu0 %v1462
    %v1530 = vpop.f32.mrf.mxu0
    %v1531 = vadd.f32 0.0, %v1530
    %v1532 = vpop.f32.mrf.mxu0
    %1533 = vdwg.mxu0
    %v1534 = vadd.f32 %v1440, %v1531
    %v1535 = vxor.u32 %v1534, 2147483648
    %v1536 = vmul.f32 %v1535, 1.442695
    %v1537 = vpow.pop %v1536
    %v1538 = vadd.f32 %v1537, 1.0
    %v1539 = vrcp.pop %v1538
    %v1540 = vmul.f32 1.0, %v1539
    %v1541 = vtanh.pop %v1458
    %1543 = vrot.lane.b32.xlu0 %v1541, 64
    %v1544 = vpop.permute.xlu0 %1543
    %v1546 = vmul.f32 %v1540, %v1544
    %1548 = vrot.lane.b32.xlu0 %v1176, 32
    %v1549 = vpop.permute.xlu0 %1548
    %v1551 = vsel %vm528, %v1549, %v1088
    %v1553 = vsel %vm432, %v1551, 0
    %1555 = vmatprep.subr.mxu0 0.0
    %1556 = vmatpush1.msra.mxu0 0.0
    %1557 = vmatprep.subr.mxu0 0.0
    %1558 = vmatpush1.msra.mxu0 0.0
    %1559 = vmatprep.subr.mxu0 0.0
    %1560 = vmatpush1.msra.mxu0 0.0
    %1561 = vmatprep.subr.mxu0 0.0
    %1562 = vmatpush1.msra.mxu0 0.0
    %1563 = vmatprep.subr.mxu0 0.0
    %1564 = vmatpush1.msra.mxu0 0.0
    %1565 = vmatprep.subr.mxu0 0.0
    %1566 = vmatpush1.msra.mxu0 0.0
    %1567 = vmatprep.subr.mxu0 0.0
    %1568 = vmatpush1.msra.mxu0 0.0
    %1569 = vmatprep.subr.mxu0 0.0
    %1570 = vmatpush1.msra.mxu0 0.0
    %1571 = vmatprep.subr.mxu0 0.0
    %1572 = vmatpush1.msra.mxu0 %v427
    %1573 = vmatprep.subr.mxu0 0.0
    %1574 = vmatpush1.msra.mxu0 %v426
    %1575 = vmatprep.subr.mxu0 0.0
    %1576 = vmatpush1.msra.mxu0 %v425
    %1577 = vmatprep.subr.mxu0 0.0
    %1578 = vmatpush1.msra.mxu0 %v424
    %1579 = vmatprep.subr.mxu0 0.0
    %1580 = vmatpush1.msra.mxu0 %v423
    %1581 = vmatprep.subr.mxu0 0.0
    %1582 = vmatpush1.msra.mxu0 %v422
    %1583 = vmatprep.subr.mxu0 0.0
    %1584 = vmatpush1.msra.mxu0 %v421
    %1585 = vmatprep.subr.mxu0 0.0
    %1586 = vmatpush1.msra.mxu0 %v420
    %1587 = vmatprep.subr.mxu0 0.0
    %1588 = vmatpush2.msra.mxu0 0.0
    %1589 = vmatprep.subr.mxu0 0.0
    %1590 = vmatpush2.msra.mxu0 0.0
    %1591 = vmatprep.subr.mxu0 0.0
    %1592 = vmatpush2.msra.mxu0 0.0
    %1593 = vmatprep.subr.mxu0 0.0
    %1594 = vmatpush2.msra.mxu0 0.0
    %1595 = vmatprep.subr.mxu0 0.0
    %1596 = vmatpush2.msra.mxu0 0.0
    %1597 = vmatprep.subr.mxu0 0.0
    %1598 = vmatpush2.msra.mxu0 0.0
    %1599 = vmatprep.subr.mxu0 0.0
    %1600 = vmatpush2.msra.mxu0 0.0
    %1601 = vmatprep.subr.mxu0 0.0
    %1602 = vmatpush2.msra.mxu0 0.0
    %1603 = vmatprep.subr.mxu0 0.0
    %1604 = vmatpush2.msra.mxu0 0.0
    %1605 = vmatprep.subr.mxu0 0.0
    %1606 = vmatpush2.msra.mxu0 0.0
    %1607 = vmatprep.subr.mxu0 0.0
    %1608 = vmatpush2.msra.mxu0 0.0
    %1609 = vmatprep.subr.mxu0 0.0
    %1610 = vmatpush2.msra.mxu0 0.0
    %1611 = vmatprep.subr.mxu0 0.0
    %1612 = vmatpush2.msra.mxu0 0.0
    %1613 = vmatprep.subr.mxu0 0.0
    %1614 = vmatpush2.msra.mxu0 0.0
    %1615 = vmatprep.subr.mxu0 0.0
    %1616 = vmatpush2.msra.mxu0 0.0
    %1617 = vmatprep.subr.mxu0 0.0
    %1618 = vmatpush2.msra.mxu0 0.0
    %1619 = vmatprep.mubr.f32.mxu0 0.0
    %1620 = vmatmul.mubr.f32.gmra.mxu0 %v1553
    %v1621 = vpop.f32.mrf.mxu0
    %v1622 = vadd.f32 0.0, %v1621
    %v1623 = vpop.f32.mrf.mxu0
    %1624 = vdwg.mxu0
    %v1625 = vadd.f32 %v173, %v1622
    %v1626 = vxor.u32 %v1625, 2147483648
    %v1627 = vmul.f32 %v1626, 1.442695
    %v1628 = vpow.pop %v1627
    %v1629 = vadd.f32 %v1628, 1.0
    %v1630 = vrcp.pop %v1629
    %v1631 = vmul.f32 1.0, %v1630
    %v1632 = vmul.f32 %v1631, %v1088
    %v1633 = vtanh.pop %v1625
    %1635 = vrot.lane.b32.xlu0 %v1633, 64
    %v1636 = vpop.permute.xlu0 %1635
    %v1638 = vmul.f32 %v1631, %v1636
    %1640 = vrot.lane.b32.xlu0 %v1638, 32
    %v1641 = vpop.permute.xlu0 %1640
    %v1643 = vadd.f32 %v1632, %v1641
    %1645 = vrot.lane.b32.xlu0 %v1643, 96
    %v1646 = vpop.permute.xlu0 %1645
    %v1647 = vsel %vm528, %v1646, 0
    %1649 = vmatprep.subr.mxu0 0.0
    %1650 = vmatpush1.msra.mxu0 0.0
    %1651 = vmatprep.subr.mxu0 0.0
    %1652 = vmatpush1.msra.mxu0 0.0
    %1653 = vmatprep.subr.mxu0 0.0
    %1654 = vmatpush1.msra.mxu0 0.0
    %1655 = vmatprep.subr.mxu0 0.0
    %1656 = vmatpush1.msra.mxu0 0.0
    %1657 = vmatprep.subr.mxu0 0.0
    %1658 = vmatpush1.msra.mxu0 0.0
    %1659 = vmatprep.subr.mxu0 0.0
    %1660 = vmatpush1.msra.mxu0 0.0
    %1661 = vmatprep.subr.mxu0 0.0
    %1662 = vmatpush1.msra.mxu0 0.0
    %1663 = vmatprep.subr.mxu0 0.0
    %1664 = vmatpush1.msra.mxu0 0.0
    %1665 = vmatprep.subr.mxu0 0.0
    %1666 = vmatpush1.msra.mxu0 0.0
    %1667 = vmatprep.subr.mxu0 0.0
    %1668 = vmatpush1.msra.mxu0 0.0
    %1669 = vmatprep.subr.mxu0 0.0
    %1670 = vmatpush1.msra.mxu0 0.0
    %1671 = vmatprep.subr.mxu0 0.0
    %1672 = vmatpush1.msra.mxu0 0.0
    %1673 = vmatprep.subr.mxu0 0.0
    %1674 = vmatpush1.msra.mxu0 %v431
    %1675 = vmatprep.subr.mxu0 0.0
    %1676 = vmatpush1.msra.mxu0 %v430
    %1677 = vmatprep.subr.mxu0 0.0
    %1678 = vmatpush1.msra.mxu0 %v429
    %1679 = vmatprep.subr.mxu0 0.0
    %1680 = vmatpush1.msra.mxu0 %v428
    %1681 = vmatprep.subr.mxu0 0.0
    %1682 = vmatpush2.msra.mxu0 0.0
    %1683 = vmatprep.subr.mxu0 0.0
    %1684 = vmatpush2.msra.mxu0 0.0
    %1685 = vmatprep.subr.mxu0 0.0
    %1686 = vmatpush2.msra.mxu0 0.0
    %1687 = vmatprep.subr.mxu0 0.0
    %1688 = vmatpush2.msra.mxu0 0.0
    %1689 = vmatprep.subr.mxu0 0.0
    %1690 = vmatpush2.msra.mxu0 0.0
    %1691 = vmatprep.subr.mxu0 0.0
    %1692 = vmatpush2.msra.mxu0 0.0
    %1693 = vmatprep.subr.mxu0 0.0
    %1694 = vmatpush2.msra.mxu0 0.0
    %1695 = vmatprep.subr.mxu0 0.0
    %1696 = vmatpush2.msra.mxu0 0.0
    %1697 = vmatprep.subr.mxu0 0.0
    %1698 = vmatpush2.msra.mxu0 0.0
    %1699 = vmatprep.subr.mxu0 0.0
    %1700 = vmatpush2.msra.mxu0 0.0
    %1701 = vmatprep.subr.mxu0 0.0
    %1702 = vmatpush2.msra.mxu0 0.0
    %1703 = vmatprep.subr.mxu0 0.0
    %1704 = vmatpush2.msra.mxu0 0.0
    %1705 = vmatprep.subr.mxu0 0.0
    %1706 = vmatpush2.msra.mxu0 0.0
    %1707 = vmatprep.subr.mxu0 0.0
    %1708 = vmatpush2.msra.mxu0 0.0
    %1709 = vmatprep.subr.mxu0 0.0
    %1710 = vmatpush2.msra.mxu0 0.0
    %1711 = vmatprep.subr.mxu0 0.0
    %1712 = vmatpush2.msra.mxu0 0.0
    %1713 = vmatprep.mubr.f32.mxu0 0.0
    %1714 = vmatmul.mubr.f32.gmra.mxu0 %v1647
    %v1715 = vpop.f32.mrf.mxu0
    %v1716 = vadd.f32 0.0, %v1715
    %v1717 = vpop.f32.mrf.mxu0
    %1718 = vdwg.mxu0
    %v1719 = vadd.f32 %v1625, %v1716
    %v1720 = vxor.u32 %v1719, 2147483648
    %v1721 = vmul.f32 %v1720, 1.442695
    %v1722 = vpow.pop %v1721
    %v1723 = vadd.f32 %v1722, 1.0
    %v1724 = vrcp.pop %v1723
    %v1725 = vmul.f32 1.0, %v1724
    %v1726 = vtanh.pop %v1643
    %1728 = vrot.lane.b32.xlu0 %v1726, 64
    %v1729 = vpop.permute.xlu0 %1728
    %v1731 = vmul.f32 %v1725, %v1729
    %1733 = vrot.lane.b32.xlu0 %v1361, 32
    %v1734 = vpop.permute.xlu0 %1733
    %v1736 = vsel %vm528, %v1734, %v1273
    %v1738 = vsel %vm432, %v1736, 0
    %1740 = vmatprep.subr.mxu0 0.0
    %1741 = vmatpush1.msra.mxu0 0.0
    %1742 = vmatprep.subr.mxu0 0.0
    %1743 = vmatpush1.msra.mxu0 0.0
    %1744 = vmatprep.subr.mxu0 0.0
    %1745 = vmatpush1.msra.mxu0 0.0
    %1746 = vmatprep.subr.mxu0 0.0
    %1747 = vmatpush1.msra.mxu0 0.0
    %1748 = vmatprep.subr.mxu0 0.0
    %1749 = vmatpush1.msra.mxu0 0.0
    %1750 = vmatprep.subr.mxu0 0.0
    %1751 = vmatpush1.msra.mxu0 0.0
    %1752 = vmatprep.subr.mxu0 0.0
    %1753 = vmatpush1.msra.mxu0 0.0
    %1754 = vmatprep.subr.mxu0 0.0
    %1755 = vmatpush1.msra.mxu0 0.0
    %1756 = vmatprep.subr.mxu0 0.0
    %1757 = vmatpush1.msra.mxu0 %v621
    %1758 = vmatprep.subr.mxu0 0.0
    %1759 = vmatpush1.msra.mxu0 %v620
    %1760 = vmatprep.subr.mxu0 0.0
    %1761 = vmatpush1.msra.mxu0 %v619
    %1762 = vmatprep.subr.mxu0 0.0
    %1763 = vmatpush1.msra.mxu0 %v618
    %1764 = vmatprep.subr.mxu0 0.0
    %1765 = vmatpush1.msra.mxu0 %v617
    %1766 = vmatprep.subr.mxu0 0.0
    %1767 = vmatpush1.msra.mxu0 %v616
    %1768 = vmatprep.subr.mxu0 0.0
    %1769 = vmatpush1.msra.mxu0 %v615
    %1770 = vmatprep.subr.mxu0 0.0
    %1771 = vmatpush1.msra.mxu0 %v614
    %1772 = vmatprep.subr.mxu0 0.0
    %1773 = vmatpush2.msra.mxu0 0.0
    %1774 = vmatprep.subr.mxu0 0.0
    %1775 = vmatpush2.msra.mxu0 0.0
    %1776 = vmatprep.subr.mxu0 0.0
    %1777 = vmatpush2.msra.mxu0 0.0
    %1778 = vmatprep.subr.mxu0 0.0
    %1779 = vmatpush2.msra.mxu0 0.0
    %1780 = vmatprep.subr.mxu0 0.0
    %1781 = vmatpush2.msra.mxu0 0.0
    %1782 = vmatprep.subr.mxu0 0.0
    %1783 = vmatpush2.msra.mxu0 0.0
    %1784 = vmatprep.subr.mxu0 0.0
    %1785 = vmatpush2.msra.mxu0 0.0
    %1786 = vmatprep.subr.mxu0 0.0
    %1787 = vmatpush2.msra.mxu0 0.0
    %1788 = vmatprep.subr.mxu0 0.0
    %1789 = vmatpush2.msra.mxu0 0.0
    %1790 = vmatprep.subr.mxu0 0.0
    %1791 = vmatpush2.msra.mxu0 0.0
    %1792 = vmatprep.subr.mxu0 0.0
    %1793 = vmatpush2.msra.mxu0 0.0
    %1794 = vmatprep.subr.mxu0 0.0
    %1795 = vmatpush2.msra.mxu0 0.0
    %1796 = vmatprep.subr.mxu0 0.0
    %1797 = vmatpush2.msra.mxu0 0.0
    %1798 = vmatprep.subr.mxu0 0.0
    %1799 = vmatpush2.msra.mxu0 0.0
    %1800 = vmatprep.subr.mxu0 0.0
    %1801 = vmatpush2.msra.mxu0 0.0
    %1802 = vmatprep.subr.mxu0 0.0
    %1803 = vmatpush2.msra.mxu0 0.0
    %1804 = vmatprep.mubr.f32.mxu0 0.0
    %1805 = vmatmul.mubr.f32.gmra.mxu0 %v1738
    %v1806 = vpop.f32.mrf.mxu0
    %v1807 = vadd.f32 0.0, %v1806
    %v1808 = vpop.f32.mrf.mxu0
    %1809 = vdwg.mxu0
    %v1810 = vadd.f32 %v294, %v1807
    %v1811 = vxor.u32 %v1810, 2147483648
    %v1812 = vmul.f32 %v1811, 1.442695
    %v1813 = vpow.pop %v1812
    %v1814 = vadd.f32 %v1813, 1.0
    %v1815 = vrcp.pop %v1814
    %v1816 = vmul.f32 1.0, %v1815
    %v1817 = vmul.f32 %v1816, %v1273
    %v1818 = vtanh.pop %v1810
    %1820 = vrot.lane.b32.xlu0 %v1818, 64
    %v1821 = vpop.permute.xlu0 %1820
    %v1823 = vmul.f32 %v1816, %v1821
    %1825 = vrot.lane.b32.xlu0 %v1823, 32
    %v1826 = vpop.permute.xlu0 %1825
    %v1828 = vadd.f32 %v1817, %v1826
    %1830 = vrot.lane.b32.xlu0 %v1828, 96
    %v1831 = vpop.permute.xlu0 %1830
    %v1832 = vsel %vm528, %v1831, 0
    %1834 = vmatprep.subr.mxu0 0.0
    %1835 = vmatpush1.msra.mxu0 0.0
    %1836 = vmatprep.subr.mxu0 0.0
    %1837 = vmatpush1.msra.mxu0 0.0
    %1838 = vmatprep.subr.mxu0 0.0
    %1839 = vmatpush1.msra.mxu0 0.0
    %1840 = vmatprep.subr.mxu0 0.0
    %1841 = vmatpush1.msra.mxu0 0.0
    %1842 = vmatprep.subr.mxu0 0.0
    %1843 = vmatpush1.msra.mxu0 0.0
    %1844 = vmatprep.subr.mxu0 0.0
    %1845 = vmatpush1.msra.mxu0 0.0
    %1846 = vmatprep.subr.mxu0 0.0
    %1847 = vmatpush1.msra.mxu0 0.0
    %1848 = vmatprep.subr.mxu0 0.0
    %1849 = vmatpush1.msra.mxu0 0.0
    %1850 = vmatprep.subr.mxu0 0.0
    %1851 = vmatpush1.msra.mxu0 0.0
    %1852 = vmatprep.subr.mxu0 0.0
    %1853 = vmatpush1.msra.mxu0 0.0
    %1854 = vmatprep.subr.mxu0 0.0
    %1855 = vmatpush1.msra.mxu0 0.0
    %1856 = vmatprep.subr.mxu0 0.0
    %1857 = vmatpush1.msra.mxu0 0.0
    %1858 = vmatprep.subr.mxu0 0.0
    %1859 = vmatpush1.msra.mxu0 %v625
    %1860 = vmatprep.subr.mxu0 0.0
    %1861 = vmatpush1.msra.mxu0 %v624
    %1862 = vmatprep.subr.mxu0 0.0
    %1863 = vmatpush1.msra.mxu0 %v623
    %1864 = vmatprep.subr.mxu0 0.0
    %1865 = vmatpush1.msra.mxu0 %v622
    %1866 = vmatprep.subr.mxu0 0.0
    %1867 = vmatpush2.msra.mxu0 0.0
    %1868 = vmatprep.subr.mxu0 0.0
    %1869 = vmatpush2.msra.mxu0 0.0
    %1870 = vmatprep.subr.mxu0 0.0
    %1871 = vmatpush2.msra.mxu0 0.0
    %1872 = vmatprep.subr.mxu0 0.0
    %1873 = vmatpush2.msra.mxu0 0.0
    %1874 = vmatprep.subr.mxu0 0.0
    %1875 = vmatpush2.msra.mxu0 0.0
    %1876 = vmatprep.subr.mxu0 0.0
    %1877 = vmatpush2.msra.mxu0 0.0
    %1878 = vmatprep.subr.mxu0 0.0
    %1879 = vmatpush2.msra.mxu0 0.0
    %1880 = vmatprep.subr.mxu0 0.0
    %1881 = vmatpush2.msra.mxu0 0.0
    %1882 = vmatprep.subr.mxu0 0.0
    %1883 = vmatpush2.msra.mxu0 0.0
    %1884 = vmatprep.subr.mxu0 0.0
    %1885 = vmatpush2.msra.mxu0 0.0
    %1886 = vmatprep.subr.mxu0 0.0
    %1887 = vmatpush2.msra.mxu0 0.0
    %1888 = vmatprep.subr.mxu0 0.0
    %1889 = vmatpush2.msra.mxu0 0.0
    %1890 = vmatprep.subr.mxu0 0.0
    %1891 = vmatpush2.msra.mxu0 0.0
    %1892 = vmatprep.subr.mxu0 0.0
    %1893 = vmatpush2.msra.mxu0 0.0
    %1894 = vmatprep.subr.mxu0 0.0
    %1895 = vmatpush2.msra.mxu0 0.0
    %1896 = vmatprep.subr.mxu0 0.0
    %1897 = vmatpush2.msra.mxu0 0.0
    %1898 = vmatprep.mubr.f32.mxu0 0.0
    %1899 = vmatmul.mubr.f32.gmra.mxu0 %v1832
    %v1900 = vpop.f32.mrf.mxu0
    %v1901 = vadd.f32 0.0, %v1900
    %v1902 = vpop.f32.mrf.mxu0
    %1903 = vdwg.mxu0
    %v1904 = vadd.f32 %v1810, %v1901
    %v1905 = vxor.u32 %v1904, 2147483648
    %v1906 = vmul.f32 %v1905, 1.442695
    %v1907 = vpow.pop %v1906
    %v1908 = vadd.f32 %v1907, 1.0
    %v1909 = vrcp.pop %v1908
    %v1910 = vmul.f32 1.0, %v1909
    %v1911 = vtanh.pop %v1828
    %1913 = vrot.lane.b32.xlu0 %v1911, 64
    %v1914 = vpop.permute.xlu0 %1913
    %v1916 = vmul.f32 %v1910, %v1914
    %1918 = vrot.lane.b32.xlu0 %v1546, 32
    %v1919 = vpop.permute.xlu0 %1918
    %v1921 = vsel %vm528, %v1919, %v1458
    %v1923 = vsel %vm432, %v1921, 0
    %1925 = vmatprep.subr.mxu0 0.0
    %1926 = vmatpush1.msra.mxu0 0.0
    %1927 = vmatprep.subr.mxu0 0.0
    %1928 = vmatpush1.msra.mxu0 0.0
    %1929 = vmatprep.subr.mxu0 0.0
    %1930 = vmatpush1.msra.mxu0 0.0
    %1931 = vmatprep.subr.mxu0 0.0
    %1932 = vmatpush1.msra.mxu0 0.0
    %1933 = vmatprep.subr.mxu0 0.0
    %1934 = vmatpush1.msra.mxu0 0.0
    %1935 = vmatprep.subr.mxu0 0.0
    %1936 = vmatpush1.msra.mxu0 0.0
    %1937 = vmatprep.subr.mxu0 0.0
    %1938 = vmatpush1.msra.mxu0 0.0
    %1939 = vmatprep.subr.mxu0 0.0
    %1940 = vmatpush1.msra.mxu0 0.0
    %1941 = vmatprep.subr.mxu0 0.0
    %1942 = vmatpush1.msra.mxu0 %v810
    %1943 = vmatprep.subr.mxu0 0.0
    %1944 = vmatpush1.msra.mxu0 %v809
    %1945 = vmatprep.subr.mxu0 0.0
    %1946 = vmatpush1.msra.mxu0 %v808
    %1947 = vmatprep.subr.mxu0 0.0
    %1948 = vmatpush1.msra.mxu0 %v807
    %1949 = vmatprep.subr.mxu0 0.0
    %1950 = vmatpush1.msra.mxu0 %v806
    %1951 = vmatprep.subr.mxu0 0.0
    %1952 = vmatpush1.msra.mxu0 %v805
    %1953 = vmatprep.subr.mxu0 0.0
    %1954 = vmatpush1.msra.mxu0 %v804
    %1955 = vmatprep.subr.mxu0 0.0
    %1956 = vmatpush1.msra.mxu0 %v803
    %1957 = vmatprep.subr.mxu0 0.0
    %1958 = vmatpush2.msra.mxu0 0.0
    %1959 = vmatprep.subr.mxu0 0.0
    %1960 = vmatpush2.msra.mxu0 0.0
    %1961 = vmatprep.subr.mxu0 0.0
    %1962 = vmatpush2.msra.mxu0 0.0
    %1963 = vmatprep.subr.mxu0 0.0
    %1964 = vmatpush2.msra.mxu0 0.0
    %1965 = vmatprep.subr.mxu0 0.0
    %1966 = vmatpush2.msra.mxu0 0.0
    %1967 = vmatprep.subr.mxu0 0.0
    %1968 = vmatpush2.msra.mxu0 0.0
    %1969 = vmatprep.subr.mxu0 0.0
    %1970 = vmatpush2.msra.mxu0 0.0
    %1971 = vmatprep.subr.mxu0 0.0
    %1972 = vmatpush2.msra.mxu0 0.0
    %1973 = vmatprep.subr.mxu0 0.0
    %1974 = vmatpush2.msra.mxu0 0.0
    %1975 = vmatprep.subr.mxu0 0.0
    %1976 = vmatpush2.msra.mxu0 0.0
    %1977 = vmatprep.subr.mxu0 0.0
    %1978 = vmatpush2.msra.mxu0 0.0
    %1979 = vmatprep.subr.mxu0 0.0
    %1980 = vmatpush2.msra.mxu0 0.0
    %1981 = vmatprep.subr.mxu0 0.0
    %1982 = vmatpush2.msra.mxu0 0.0
    %1983 = vmatprep.subr.mxu0 0.0
    %1984 = vmatpush2.msra.mxu0 0.0
    %1985 = vmatprep.subr.mxu0 0.0
    %1986 = vmatpush2.msra.mxu0 0.0
    %1987 = vmatprep.subr.mxu0 0.0
    %1988 = vmatpush2.msra.mxu0 0.0
    %1989 = vmatprep.mubr.f32.mxu0 0.0
    %1990 = vmatmul.mubr.f32.gmra.mxu0 %v1923
    %v1991 = vpop.f32.mrf.mxu0
    %v1992 = vadd.f32 0.0, %v1991
    %v1993 = vpop.f32.mrf.mxu0
    %1994 = vdwg.mxu0
    %v1995 = vadd.f32 %v412, %v1992
    %v1996 = vxor.u32 %v1995, 2147483648
    %v1997 = vmul.f32 %v1996, 1.442695
    %v1998 = vpow.pop %v1997
    %v1999 = vadd.f32 %v1998, 1.0
    %v2000 = vrcp.pop %v1999
    %v2001 = vmul.f32 1.0, %v2000
    %v2002 = vmul.f32 %v2001, %v1458
    %v2003 = vtanh.pop %v1995
    %2005 = vrot.lane.b32.xlu0 %v2003, 64
    %v2006 = vpop.permute.xlu0 %2005
    %v2008 = vmul.f32 %v2001, %v2006
    %2010 = vrot.lane.b32.xlu0 %v2008, 32
    %v2011 = vpop.permute.xlu0 %2010
    %v2013 = vadd.f32 %v2002, %v2011
    %2015 = vrot.lane.b32.xlu0 %v2013, 96
    %v2016 = vpop.permute.xlu0 %2015
    %v2017 = vsel %vm528, %v2016, 0
    %2019 = vmatprep.subr.mxu0 0.0
    %2020 = vmatpush1.msra.mxu0 0.0
    %2021 = vmatprep.subr.mxu0 0.0
    %2022 = vmatpush1.msra.mxu0 0.0
    %2023 = vmatprep.subr.mxu0 0.0
    %2024 = vmatpush1.msra.mxu0 0.0
    %2025 = vmatprep.subr.mxu0 0.0
    %2026 = vmatpush1.msra.mxu0 0.0
    %2027 = vmatprep.subr.mxu0 0.0
    %2028 = vmatpush1.msra.mxu0 0.0
    %2029 = vmatprep.subr.mxu0 0.0
    %2030 = vmatpush1.msra.mxu0 0.0
    %2031 = vmatprep.subr.mxu0 0.0
    %2032 = vmatpush1.msra.mxu0 0.0
    %2033 = vmatprep.subr.mxu0 0.0
    %2034 = vmatpush1.msra.mxu0 0.0
    %2035 = vmatprep.subr.mxu0 0.0
    %2036 = vmatpush1.msra.mxu0 0.0
    %2037 = vmatprep.subr.mxu0 0.0
    %2038 = vmatpush1.msra.mxu0 0.0
    %2039 = vmatprep.subr.mxu0 0.0
    %2040 = vmatpush1.msra.mxu0 0.0
    %2041 = vmatprep.subr.mxu0 0.0
    %2042 = vmatpush1.msra.mxu0 0.0
    %2043 = vmatprep.subr.mxu0 0.0
    %2044 = vmatpush1.msra.mxu0 %v814
    %2045 = vmatprep.subr.mxu0 0.0
    %2046 = vmatpush1.msra.mxu0 %v813
    %2047 = vmatprep.subr.mxu0 0.0
    %2048 = vmatpush1.msra.mxu0 %v812
    %2049 = vmatprep.subr.mxu0 0.0
    %2050 = vmatpush1.msra.mxu0 %v811
    %2051 = vmatprep.subr.mxu0 0.0
    %2052 = vmatpush2.msra.mxu0 0.0
    %2053 = vmatprep.subr.mxu0 0.0
    %2054 = vmatpush2.msra.mxu0 0.0
    %2055 = vmatprep.subr.mxu0 0.0
    %2056 = vmatpush2.msra.mxu0 0.0
    %2057 = vmatprep.subr.mxu0 0.0
    %2058 = vmatpush2.msra.mxu0 0.0
    %2059 = vmatprep.subr.mxu0 0.0
    %2060 = vmatpush2.msra.mxu0 0.0
    %2061 = vmatprep.subr.mxu0 0.0
    %2062 = vmatpush2.msra.mxu0 0.0
    %2063 = vmatprep.subr.mxu0 0.0
    %2064 = vmatpush2.msra.mxu0 0.0
    %2065 = vmatprep.subr.mxu0 0.0
    %2066 = vmatpush2.msra.mxu0 0.0
    %2067 = vmatprep.subr.mxu0 0.0
    %2068 = vmatpush2.msra.mxu0 0.0
    %2069 = vmatprep.subr.mxu0 0.0
    %2070 = vmatpush2.msra.mxu0 0.0
    %2071 = vmatprep.subr.mxu0 0.0
    %2072 = vmatpush2.msra.mxu0 0.0
    %2073 = vmatprep.subr.mxu0 0.0
    %2074 = vmatpush2.msra.mxu0 0.0
    %2075 = vmatprep.subr.mxu0 0.0
    %2076 = vmatpush2.msra.mxu0 0.0
    %2077 = vmatprep.subr.mxu0 0.0
    %2078 = vmatpush2.msra.mxu0 0.0
    %2079 = vmatprep.subr.mxu0 0.0
    %2080 = vmatpush2.msra.mxu0 0.0
    %2081 = vmatprep.subr.mxu0 0.0
    %2082 = vmatpush2.msra.mxu0 0.0
    %2083 = vmatprep.mubr.f32.mxu0 0.0
    %2084 = vmatmul.mubr.f32.gmra.mxu0 %v2017
    %v2085 = vpop.f32.mrf.mxu0
    %v2086 = vadd.f32 0.0, %v2085
    %v2087 = vpop.f32.mrf.mxu0
    %2088 = vdwg.mxu0
    %v2089 = vadd.f32 %v1995, %v2086
    %v2090 = vxor.u32 %v2089, 2147483648
    %v2091 = vmul.f32 %v2090, 1.442695
    %v2092 = vpow.pop %v2091
    %v2093 = vadd.f32 %v2092, 1.0
    %v2094 = vrcp.pop %v2093
    %v2095 = vmul.f32 1.0, %v2094
    %v2096 = vtanh.pop %v2013
    %2098 = vrot.lane.b32.xlu0 %v2096, 64
    %v2099 = vpop.permute.xlu0 %2098
    %v2101 = vmul.f32 %v2095, %v2099
    %2103 = vrot.lane.b32.xlu0 %v1731, 32
    %v2104 = vpop.permute.xlu0 %2103
    %v2106 = vsel %vm528, %v2104, %v1643
    %v2108 = vsel %vm432, %v2106, 0
    %2110 = vmatprep.subr.mxu0 0.0
    %2111 = vmatpush1.msra.mxu0 0.0
    %2112 = vmatprep.subr.mxu0 0.0
    %2113 = vmatpush1.msra.mxu0 0.0
    %2114 = vmatprep.subr.mxu0 0.0
    %2115 = vmatpush1.msra.mxu0 0.0
    %2116 = vmatprep.subr.mxu0 0.0
    %2117 = vmatpush1.msra.mxu0 0.0
    %2118 = vmatprep.subr.mxu0 0.0
    %2119 = vmatpush1.msra.mxu0 0.0
    %2120 = vmatprep.subr.mxu0 0.0
    %2121 = vmatpush1.msra.mxu0 0.0
    %2122 = vmatprep.subr.mxu0 0.0
    %2123 = vmatpush1.msra.mxu0 0.0
    %2124 = vmatprep.subr.mxu0 0.0
    %2125 = vmatpush1.msra.mxu0 0.0
    %2126 = vmatprep.subr.mxu0 0.0
    %2127 = vmatpush1.msra.mxu0 %v427
    %2128 = vmatprep.subr.mxu0 0.0
    %2129 = vmatpush1.msra.mxu0 %v426
    %2130 = vmatprep.subr.mxu0 0.0
    %2131 = vmatpush1.msra.mxu0 %v425
    %2132 = vmatprep.subr.mxu0 0.0
    %2133 = vmatpush1.msra.mxu0 %v424
    %2134 = vmatprep.subr.mxu0 0.0
    %2135 = vmatpush1.msra.mxu0 %v423
    %2136 = vmatprep.subr.mxu0 0.0
    %2137 = vmatpush1.msra.mxu0 %v422
    %2138 = vmatprep.subr.mxu0 0.0
    %2139 = vmatpush1.msra.mxu0 %v421
    %2140 = vmatprep.subr.mxu0 0.0
    %2141 = vmatpush1.msra.mxu0 %v420
    %2142 = vmatprep.subr.mxu0 0.0
    %2143 = vmatpush2.msra.mxu0 0.0
    %2144 = vmatprep.subr.mxu0 0.0
    %2145 = vmatpush2.msra.mxu0 0.0
    %2146 = vmatprep.subr.mxu0 0.0
    %2147 = vmatpush2.msra.mxu0 0.0
    %2148 = vmatprep.subr.mxu0 0.0
    %2149 = vmatpush2.msra.mxu0 0.0
    %2150 = vmatprep.subr.mxu0 0.0
    %2151 = vmatpush2.msra.mxu0 0.0
    %2152 = vmatprep.subr.mxu0 0.0
    %2153 = vmatpush2.msra.mxu0 0.0
    %2154 = vmatprep.subr.mxu0 0.0
    %2155 = vmatpush2.msra.mxu0 0.0
    %2156 = vmatprep.subr.mxu0 0.0
    %2157 = vmatpush2.msra.mxu0 0.0
    %2158 = vmatprep.subr.mxu0 0.0
    %2159 = vmatpush2.msra.mxu0 0.0
    %2160 = vmatprep.subr.mxu0 0.0
    %2161 = vmatpush2.msra.mxu0 0.0
    %2162 = vmatprep.subr.mxu0 0.0
    %2163 = vmatpush2.msra.mxu0 0.0
    %2164 = vmatprep.subr.mxu0 0.0
    %2165 = vmatpush2.msra.mxu0 0.0
    %2166 = vmatprep.subr.mxu0 0.0
    %2167 = vmatpush2.msra.mxu0 0.0
    %2168 = vmatprep.subr.mxu0 0.0
    %2169 = vmatpush2.msra.mxu0 0.0
    %2170 = vmatprep.subr.mxu0 0.0
    %2171 = vmatpush2.msra.mxu0 0.0
    %2172 = vmatprep.subr.mxu0 0.0
    %2173 = vmatpush2.msra.mxu0 0.0
    %2174 = vmatprep.mubr.f32.mxu0 0.0
    %2175 = vmatmul.mubr.f32.gmra.mxu0 %v2108
    %v2176 = vpop.f32.mrf.mxu0
    %v2177 = vadd.f32 0.0, %v2176
    %v2178 = vpop.f32.mrf.mxu0
    %2179 = vdwg.mxu0
    %v2180 = vadd.f32 %v178, %v2177
    %v2181 = vxor.u32 %v2180, 2147483648
    %v2182 = vmul.f32 %v2181, 1.442695
    %v2183 = vpow.pop %v2182
    %v2184 = vadd.f32 %v2183, 1.0
    %v2185 = vrcp.pop %v2184
    %v2186 = vmul.f32 1.0, %v2185
    %v2187 = vmul.f32 %v2186, %v1643
    %v2188 = vtanh.pop %v2180
    %2190 = vrot.lane.b32.xlu0 %v2188, 64
    %v2191 = vpop.permute.xlu0 %2190
    %v2193 = vmul.f32 %v2186, %v2191
    %2195 = vrot.lane.b32.xlu0 %v2193, 32
    %v2196 = vpop.permute.xlu0 %2195
    %v2198 = vadd.f32 %v2187, %v2196
    %2200 = vrot.lane.b32.xlu0 %v2198, 96
    %v2201 = vpop.permute.xlu0 %2200
    %v2202 = vsel %vm528, %v2201, 0
    %2204 = vmatprep.subr.mxu0 0.0
    %2205 = vmatpush1.msra.mxu0 0.0
    %2206 = vmatprep.subr.mxu0 0.0
    %2207 = vmatpush1.msra.mxu0 0.0
    %2208 = vmatprep.subr.mxu0 0.0
    %2209 = vmatpush1.msra.mxu0 0.0
    %2210 = vmatprep.subr.mxu0 0.0
    %2211 = vmatpush1.msra.mxu0 0.0
    %2212 = vmatprep.subr.mxu0 0.0
    %2213 = vmatpush1.msra.mxu0 0.0
    %2214 = vmatprep.subr.mxu0 0.0
    %2215 = vmatpush1.msra.mxu0 0.0
    %2216 = vmatprep.subr.mxu0 0.0
    %2217 = vmatpush1.msra.mxu0 0.0
    %2218 = vmatprep.subr.mxu0 0.0
    %2219 = vmatpush1.msra.mxu0 0.0
    %2220 = vmatprep.subr.mxu0 0.0
    %2221 = vmatpush1.msra.mxu0 0.0
    %2222 = vmatprep.subr.mxu0 0.0
    %2223 = vmatpush1.msra.mxu0 0.0
    %2224 = vmatprep.subr.mxu0 0.0
    %2225 = vmatpush1.msra.mxu0 0.0
    %2226 = vmatprep.subr.mxu0 0.0
    %2227 = vmatpush1.msra.mxu0 0.0
    %2228 = vmatprep.subr.mxu0 0.0
    %2229 = vmatpush1.msra.mxu0 %v431
    %2230 = vmatprep.subr.mxu0 0.0
    %2231 = vmatpush1.msra.mxu0 %v430
    %2232 = vmatprep.subr.mxu0 0.0
    %2233 = vmatpush1.msra.mxu0 %v429
    %2234 = vmatprep.subr.mxu0 0.0
    %2235 = vmatpush1.msra.mxu0 %v428
    %2236 = vmatprep.subr.mxu0 0.0
    %2237 = vmatpush2.msra.mxu0 0.0
    %2238 = vmatprep.subr.mxu0 0.0
    %2239 = vmatpush2.msra.mxu0 0.0
    %2240 = vmatprep.subr.mxu0 0.0
    %2241 = vmatpush2.msra.mxu0 0.0
    %2242 = vmatprep.subr.mxu0 0.0
    %2243 = vmatpush2.msra.mxu0 0.0
    %2244 = vmatprep.subr.mxu0 0.0
    %2245 = vmatpush2.msra.mxu0 0.0
    %2246 = vmatprep.subr.mxu0 0.0
    %2247 = vmatpush2.msra.mxu0 0.0
    %2248 = vmatprep.subr.mxu0 0.0
    %2249 = vmatpush2.msra.mxu0 0.0
    %2250 = vmatprep.subr.mxu0 0.0
    %2251 = vmatpush2.msra.mxu0 0.0
    %2252 = vmatprep.subr.mxu0 0.0
    %2253 = vmatpush2.msra.mxu0 0.0
    %2254 = vmatprep.subr.mxu0 0.0
    %2255 = vmatpush2.msra.mxu0 0.0
    %2256 = vmatprep.subr.mxu0 0.0
    %2257 = vmatpush2.msra.mxu0 0.0
    %2258 = vmatprep.subr.mxu0 0.0
    %2259 = vmatpush2.msra.mxu0 0.0
    %2260 = vmatprep.subr.mxu0 0.0
    %2261 = vmatpush2.msra.mxu0 0.0
    %2262 = vmatprep.subr.mxu0 0.0
    %2263 = vmatpush2.msra.mxu0 0.0
    %2264 = vmatprep.subr.mxu0 0.0
    %2265 = vmatpush2.msra.mxu0 0.0
    %2266 = vmatprep.subr.mxu0 0.0
    %2267 = vmatpush2.msra.mxu0 0.0
    %2268 = vmatprep.mubr.f32.mxu0 0.0
    %2269 = vmatmul.mubr.f32.gmra.mxu0 %v2202
    %v2270 = vpop.f32.mrf.mxu0
    %v2271 = vadd.f32 0.0, %v2270
    %v2272 = vpop.f32.mrf.mxu0
    %2273 = vdwg.mxu0
    %v2274 = vadd.f32 %v2180, %v2271
    %v2275 = vxor.u32 %v2274, 2147483648
    %v2276 = vmul.f32 %v2275, 1.442695
    %v2277 = vpow.pop %v2276
    %v2278 = vadd.f32 %v2277, 1.0
    %v2279 = vrcp.pop %v2278
    %v2280 = vmul.f32 1.0, %v2279
    %v2281 = vtanh.pop %v2198
    %2283 = vrot.lane.b32.xlu0 %v2281, 64
    %v2284 = vpop.permute.xlu0 %2283
    %v2286 = vmul.f32 %v2280, %v2284
    %2288 = vrot.lane.b32.xlu0 %v1916, 32
    %v2289 = vpop.permute.xlu0 %2288
    %v2291 = vsel %vm528, %v2289, %v1828
    %v2293 = vsel %vm432, %v2291, 0
    %2295 = vmatprep.subr.mxu0 0.0
    %2296 = vmatpush1.msra.mxu0 0.0
    %2297 = vmatprep.subr.mxu0 0.0
    %2298 = vmatpush1.msra.mxu0 0.0
    %2299 = vmatprep.subr.mxu0 0.0
    %2300 = vmatpush1.msra.mxu0 0.0
    %2301 = vmatprep.subr.mxu0 0.0
    %2302 = vmatpush1.msra.mxu0 0.0
    %2303 = vmatprep.subr.mxu0 0.0
    %2304 = vmatpush1.msra.mxu0 0.0
    %2305 = vmatprep.subr.mxu0 0.0
    %2306 = vmatpush1.msra.mxu0 0.0
    %2307 = vmatprep.subr.mxu0 0.0
    %2308 = vmatpush1.msra.mxu0 0.0
    %2309 = vmatprep.subr.mxu0 0.0
    %2310 = vmatpush1.msra.mxu0 0.0
    %2311 = vmatprep.subr.mxu0 0.0
    %2312 = vmatpush1.msra.mxu0 %v621
    %2313 = vmatprep.subr.mxu0 0.0
    %2314 = vmatpush1.msra.mxu0 %v620
    %2315 = vmatprep.subr.mxu0 0.0
    %2316 = vmatpush1.msra.mxu0 %v619
    %2317 = vmatprep.subr.mxu0 0.0
    %2318 = vmatpush1.msra.mxu0 %v618
    %2319 = vmatprep.subr.mxu0 0.0
    %2320 = vmatpush1.msra.mxu0 %v617
    %2321 = vmatprep.subr.mxu0 0.0
    %2322 = vmatpush1.msra.mxu0 %v616
    %2323 = vmatprep.subr.mxu0 0.0
    %2324 = vmatpush1.msra.mxu0 %v615
    %2325 = vmatprep.subr.mxu0 0.0
    %2326 = vmatpush1.msra.mxu0 %v614
    %2327 = vmatprep.subr.mxu0 0.0
    %2328 = vmatpush2.msra.mxu0 0.0
    %2329 = vmatprep.subr.mxu0 0.0
    %2330 = vmatpush2.msra.mxu0 0.0
    %2331 = vmatprep.subr.mxu0 0.0
    %2332 = vmatpush2.msra.mxu0 0.0
    %2333 = vmatprep.subr.mxu0 0.0
    %2334 = vmatpush2.msra.mxu0 0.0
    %2335 = vmatprep.subr.mxu0 0.0
    %2336 = vmatpush2.msra.mxu0 0.0
    %2337 = vmatprep.subr.mxu0 0.0
    %2338 = vmatpush2.msra.mxu0 0.0
    %2339 = vmatprep.subr.mxu0 0.0
    %2340 = vmatpush2.msra.mxu0 0.0
    %2341 = vmatprep.subr.mxu0 0.0
    %2342 = vmatpush2.msra.mxu0 0.0
    %2343 = vmatprep.subr.mxu0 0.0
    %2344 = vmatpush2.msra.mxu0 0.0
    %2345 = vmatprep.subr.mxu0 0.0
    %2346 = vmatpush2.msra.mxu0 0.0
    %2347 = vmatprep.subr.mxu0 0.0
    %2348 = vmatpush2.msra.mxu0 0.0
    %2349 = vmatprep.subr.mxu0 0.0
    %2350 = vmatpush2.msra.mxu0 0.0
    %2351 = vmatprep.subr.mxu0 0.0
    %2352 = vmatpush2.msra.mxu0 0.0
    %2353 = vmatprep.subr.mxu0 0.0
    %2354 = vmatpush2.msra.mxu0 0.0
    %2355 = vmatprep.subr.mxu0 0.0
    %2356 = vmatpush2.msra.mxu0 0.0
    %2357 = vmatprep.subr.mxu0 0.0
    %2358 = vmatpush2.msra.mxu0 0.0
    %2359 = vmatprep.mubr.f32.mxu0 0.0
    %2360 = vmatmul.mubr.f32.gmra.mxu0 %v2293
    %v2361 = vpop.f32.mrf.mxu0
    %v2362 = vadd.f32 0.0, %v2361
    %v2363 = vpop.f32.mrf.mxu0
    %2364 = vdwg.mxu0
    %v2365 = vadd.f32 %v299, %v2362
    %v2366 = vxor.u32 %v2365, 2147483648
    %v2367 = vmul.f32 %v2366, 1.442695
    %v2368 = vpow.pop %v2367
    %v2369 = vadd.f32 %v2368, 1.0
    %v2370 = vrcp.pop %v2369
    %v2371 = vmul.f32 1.0, %v2370
    %v2372 = vmul.f32 %v2371, %v1828
    %v2373 = vtanh.pop %v2365
    %2375 = vrot.lane.b32.xlu0 %v2373, 64
    %v2376 = vpop.permute.xlu0 %2375
    %v2378 = vmul.f32 %v2371, %v2376
    %2380 = vrot.lane.b32.xlu0 %v2378, 32
    %v2381 = vpop.permute.xlu0 %2380
    %v2383 = vadd.f32 %v2372, %v2381
    %2385 = vrot.lane.b32.xlu0 %v2383, 96
    %v2386 = vpop.permute.xlu0 %2385
    %v2387 = vsel %vm528, %v2386, 0
    %2389 = vmatprep.subr.mxu0 0.0
    %2390 = vmatpush1.msra.mxu0 0.0
    %2391 = vmatprep.subr.mxu0 0.0
    %2392 = vmatpush1.msra.mxu0 0.0
    %2393 = vmatprep.subr.mxu0 0.0
    %2394 = vmatpush1.msra.mxu0 0.0
    %2395 = vmatprep.subr.mxu0 0.0
    %2396 = vmatpush1.msra.mxu0 0.0
    %2397 = vmatprep.subr.mxu0 0.0
    %2398 = vmatpush1.msra.mxu0 0.0
    %2399 = vmatprep.subr.mxu0 0.0
    %2400 = vmatpush1.msra.mxu0 0.0
    %2401 = vmatprep.subr.mxu0 0.0
    %2402 = vmatpush1.msra.mxu0 0.0
    %2403 = vmatprep.subr.mxu0 0.0
    %2404 = vmatpush1.msra.mxu0 0.0
    %2405 = vmatprep.subr.mxu0 0.0
    %2406 = vmatpush1.msra.mxu0 0.0
    %2407 = vmatprep.subr.mxu0 0.0
    %2408 = vmatpush1.msra.mxu0 0.0
    %2409 = vmatprep.subr.mxu0 0.0
    %2410 = vmatpush1.msra.mxu0 0.0
    %2411 = vmatprep.subr.mxu0 0.0
    %2412 = vmatpush1.msra.mxu0 0.0
    %2413 = vmatprep.subr.mxu0 0.0
    %2414 = vmatpush1.msra.mxu0 %v625
    %2415 = vmatprep.subr.mxu0 0.0
    %2416 = vmatpush1.msra.mxu0 %v624
    %2417 = vmatprep.subr.mxu0 0.0
    %2418 = vmatpush1.msra.mxu0 %v623
    %2419 = vmatprep.subr.mxu0 0.0
    %2420 = vmatpush1.msra.mxu0 %v622
    %2421 = vmatprep.subr.mxu0 0.0
    %2422 = vmatpush2.msra.mxu0 0.0
    %2423 = vmatprep.subr.mxu0 0.0
    %2424 = vmatpush2.msra.mxu0 0.0
    %2425 = vmatprep.subr.mxu0 0.0
    %2426 = vmatpush2.msra.mxu0 0.0
    %2427 = vmatprep.subr.mxu0 0.0
    %2428 = vmatpush2.msra.mxu0 0.0
    %2429 = vmatprep.subr.mxu0 0.0
    %2430 = vmatpush2.msra.mxu0 0.0
    %2431 = vmatprep.subr.mxu0 0.0
    %2432 = vmatpush2.msra.mxu0 0.0
    %2433 = vmatprep.subr.mxu0 0.0
    %2434 = vmatpush2.msra.mxu0 0.0
    %2435 = vmatprep.subr.mxu0 0.0
    %2436 = vmatpush2.msra.mxu0 0.0
    %2437 = vmatprep.subr.mxu0 0.0
    %2438 = vmatpush2.msra.mxu0 0.0
    %2439 = vmatprep.subr.mxu0 0.0
    %2440 = vmatpush2.msra.mxu0 0.0
    %2441 = vmatprep.subr.mxu0 0.0
    %2442 = vmatpush2.msra.mxu0 0.0
    %2443 = vmatprep.subr.mxu0 0.0
    %2444 = vmatpush2.msra.mxu0 0.0
    %2445 = vmatprep.subr.mxu0 0.0
    %2446 = vmatpush2.msra.mxu0 0.0
    %2447 = vmatprep.subr.mxu0 0.0
    %2448 = vmatpush2.msra.mxu0 0.0
    %2449 = vmatprep.subr.mxu0 0.0
    %2450 = vmatpush2.msra.mxu0 0.0
    %2451 = vmatprep.subr.mxu0 0.0
    %2452 = vmatpush2.msra.mxu0 0.0
    %2453 = vmatprep.mubr.f32.mxu0 0.0
    %2454 = vmatmul.mubr.f32.gmra.mxu0 %v2387
    %v2455 = vpop.f32.mrf.mxu0
    %v2456 = vadd.f32 0.0, %v2455
    %v2457 = vpop.f32.mrf.mxu0
    %2458 = vdwg.mxu0
    %v2459 = vadd.f32 %v2365, %v2456
    %v2460 = vxor.u32 %v2459, 2147483648
    %v2461 = vmul.f32 %v2460, 1.442695
    %v2462 = vpow.pop %v2461
    %v2463 = vadd.f32 %v2462, 1.0
    %v2464 = vrcp.pop %v2463
    %v2465 = vmul.f32 1.0, %v2464
    %v2466 = vtanh.pop %v2383
    %2468 = vrot.lane.b32.xlu0 %v2466, 64
    %v2469 = vpop.permute.xlu0 %2468
    %v2471 = vmul.f32 %v2465, %v2469
    %2473 = vrot.lane.b32.xlu0 %v2101, 32
    %v2474 = vpop.permute.xlu0 %2473
    %v2476 = vsel %vm528, %v2474, %v2013
    %v2478 = vsel %vm432, %v2476, 0
    %2480 = vmatprep.subr.mxu0 0.0
    %2481 = vmatpush1.msra.mxu0 0.0
    %2482 = vmatprep.subr.mxu0 0.0
    %2483 = vmatpush1.msra.mxu0 0.0
    %2484 = vmatprep.subr.mxu0 0.0
    %2485 = vmatpush1.msra.mxu0 0.0
    %2486 = vmatprep.subr.mxu0 0.0
    %2487 = vmatpush1.msra.mxu0 0.0
    %2488 = vmatprep.subr.mxu0 0.0
    %2489 = vmatpush1.msra.mxu0 0.0
    %2490 = vmatprep.subr.mxu0 0.0
    %2491 = vmatpush1.msra.mxu0 0.0
    %2492 = vmatprep.subr.mxu0 0.0
    %2493 = vmatpush1.msra.mxu0 0.0
    %2494 = vmatprep.subr.mxu0 0.0
    %2495 = vmatpush1.msra.mxu0 0.0
    %2496 = vmatprep.subr.mxu0 0.0
    %2497 = vmatpush1.msra.mxu0 %v810
    %2498 = vmatprep.subr.mxu0 0.0
    %2499 = vmatpush1.msra.mxu0 %v809
    %2500 = vmatprep.subr.mxu0 0.0
    %2501 = vmatpush1.msra.mxu0 %v808
    %2502 = vmatprep.subr.mxu0 0.0
    %2503 = vmatpush1.msra.mxu0 %v807
    %2504 = vmatprep.subr.mxu0 0.0
    %2505 = vmatpush1.msra.mxu0 %v806
    %2506 = vmatprep.subr.mxu0 0.0
    %2507 = vmatpush1.msra.mxu0 %v805
    %2508 = vmatprep.subr.mxu0 0.0
    %2509 = vmatpush1.msra.mxu0 %v804
    %2510 = vmatprep.subr.mxu0 0.0
    %2511 = vmatpush1.msra.mxu0 %v803
    %2512 = vmatprep.subr.mxu0 0.0
    %2513 = vmatpush2.msra.mxu0 0.0
    %2514 = vmatprep.subr.mxu0 0.0
    %2515 = vmatpush2.msra.mxu0 0.0
    %2516 = vmatprep.subr.mxu0 0.0
    %2517 = vmatpush2.msra.mxu0 0.0
    %2518 = vmatprep.subr.mxu0 0.0
    %2519 = vmatpush2.msra.mxu0 0.0
    %2520 = vmatprep.subr.mxu0 0.0
    %2521 = vmatpush2.msra.mxu0 0.0
    %2522 = vmatprep.subr.mxu0 0.0
    %2523 = vmatpush2.msra.mxu0 0.0
    %2524 = vmatprep.subr.mxu0 0.0
    %2525 = vmatpush2.msra.mxu0 0.0
    %2526 = vmatprep.subr.mxu0 0.0
    %2527 = vmatpush2.msra.mxu0 0.0
    %2528 = vmatprep.subr.mxu0 0.0
    %2529 = vmatpush2.msra.mxu0 0.0
    %2530 = vmatprep.subr.mxu0 0.0
    %2531 = vmatpush2.msra.mxu0 0.0
    %2532 = vmatprep.subr.mxu0 0.0
    %2533 = vmatpush2.msra.mxu0 0.0
    %2534 = vmatprep.subr.mxu0 0.0
    %2535 = vmatpush2.msra.mxu0 0.0
    %2536 = vmatprep.subr.mxu0 0.0
    %2537 = vmatpush2.msra.mxu0 0.0
    %2538 = vmatprep.subr.mxu0 0.0
    %2539 = vmatpush2.msra.mxu0 0.0
    %2540 = vmatprep.subr.mxu0 0.0
    %2541 = vmatpush2.msra.mxu0 0.0
    %2542 = vmatprep.subr.mxu0 0.0
    %2543 = vmatpush2.msra.mxu0 0.0
    %2544 = vmatprep.mubr.f32.mxu0 0.0
    %2545 = vmatmul.mubr.f32.gmra.mxu0 %v2478
    %v2546 = vpop.f32.mrf.mxu0
    %v2547 = vadd.f32 0.0, %v2546
    %v2548 = vpop.f32.mrf.mxu0
    %2549 = vdwg.mxu0
    %v2550 = vadd.f32 %v417, %v2547
    %v2551 = vxor.u32 %v2550, 2147483648
    %v2552 = vmul.f32 %v2551, 1.442695
    %v2553 = vpow.pop %v2552
    %v2554 = vadd.f32 %v2553, 1.0
    %v2555 = vrcp.pop %v2554
    %v2556 = vmul.f32 1.0, %v2555
    %v2557 = vmul.f32 %v2556, %v2013
    %v2558 = vtanh.pop %v2550
    %2560 = vrot.lane.b32.xlu0 %v2558, 64
    %v2561 = vpop.permute.xlu0 %2560
    %v2563 = vmul.f32 %v2556, %v2561
    %2565 = vrot.lane.b32.xlu0 %v2563, 32
    %v2566 = vpop.permute.xlu0 %2565
    %v2568 = vadd.f32 %v2557, %v2566
    %2570 = vrot.lane.b32.xlu0 %v2568, 96
    %v2571 = vpop.permute.xlu0 %2570
    %v2572 = vsel %vm528, %v2571, 0
    %2574 = vmatprep.subr.mxu0 0.0
    %2575 = vmatpush1.msra.mxu0 0.0
    %2576 = vmatprep.subr.mxu0 0.0
    %2577 = vmatpush1.msra.mxu0 0.0
    %2578 = vmatprep.subr.mxu0 0.0
    %2579 = vmatpush1.msra.mxu0 0.0
    %2580 = vmatprep.subr.mxu0 0.0
    %2581 = vmatpush1.msra.mxu0 0.0
    %2582 = vmatprep.subr.mxu0 0.0
    %2583 = vmatpush1.msra.mxu0 0.0
    %2584 = vmatprep.subr.mxu0 0.0
    %2585 = vmatpush1.msra.mxu0 0.0
    %2586 = vmatprep.subr.mxu0 0.0
    %2587 = vmatpush1.msra.mxu0 0.0
    %2588 = vmatprep.subr.mxu0 0.0
    %2589 = vmatpush1.msra.mxu0 0.0
    %2590 = vmatprep.subr.mxu0 0.0
    %2591 = vmatpush1.msra.mxu0 0.0
    %2592 = vmatprep.subr.mxu0 0.0
    %2593 = vmatpush1.msra.mxu0 0.0
    %2594 = vmatprep.subr.mxu0 0.0
    %2595 = vmatpush1.msra.mxu0 0.0
    %2596 = vmatprep.subr.mxu0 0.0
    %2597 = vmatpush1.msra.mxu0 0.0
    %2598 = vmatprep.subr.mxu0 0.0
    %2599 = vmatpush1.msra.mxu0 %v814
    %2600 = vmatprep.subr.mxu0 0.0
    %2601 = vmatpush1.msra.mxu0 %v813
    %2602 = vmatprep.subr.mxu0 0.0
    %2603 = vmatpush1.msra.mxu0 %v812
    %2604 = vmatprep.subr.mxu0 0.0
    %2605 = vmatpush1.msra.mxu0 %v811
    %2606 = vmatprep.subr.mxu0 0.0
    %2607 = vmatpush2.msra.mxu0 0.0
    %2608 = vmatprep.subr.mxu0 0.0
    %2609 = vmatpush2.msra.mxu0 0.0
    %2610 = vmatprep.subr.mxu0 0.0
    %2611 = vmatpush2.msra.mxu0 0.0
    %2612 = vmatprep.subr.mxu0 0.0
    %2613 = vmatpush2.msra.mxu0 0.0
    %2614 = vmatprep.subr.mxu0 0.0
    %2615 = vmatpush2.msra.mxu0 0.0
    %2616 = vmatprep.subr.mxu0 0.0
    %2617 = vmatpush2.msra.mxu0 0.0
    %2618 = vmatprep.subr.mxu0 0.0
    %2619 = vmatpush2.msra.mxu0 0.0
    %2620 = vmatprep.subr.mxu0 0.0
    %2621 = vmatpush2.msra.mxu0 0.0
    %2622 = vmatprep.subr.mxu0 0.0
    %2623 = vmatpush2.msra.mxu0 0.0
    %2624 = vmatprep.subr.mxu0 0.0
    %2625 = vmatpush2.msra.mxu0 0.0
    %2626 = vmatprep.subr.mxu0 0.0
    %2627 = vmatpush2.msra.mxu0 0.0
    %2628 = vmatprep.subr.mxu0 0.0
    %2629 = vmatpush2.msra.mxu0 0.0
    %2630 = vmatprep.subr.mxu0 0.0
    %2631 = vmatpush2.msra.mxu0 0.0
    %2632 = vmatprep.subr.mxu0 0.0
    %2633 = vmatpush2.msra.mxu0 0.0
    %2634 = vmatprep.subr.mxu0 0.0
    %2635 = vmatpush2.msra.mxu0 0.0
    %2636 = vmatprep.subr.mxu0 0.0
    %2637 = vmatpush2.msra.mxu0 0.0
    %2638 = vmatprep.mubr.f32.mxu0 0.0
    %2639 = vmatmul.mubr.f32.gmra.mxu0 %v2572
    %v2640 = vpop.f32.mrf.mxu0
    %v2641 = vadd.f32 0.0, %v2640
    %v2642 = vpop.f32.mrf.mxu0
    %2643 = vdwg.mxu0
    %v2644 = vadd.f32 %v2550, %v2641
    %v2645 = vxor.u32 %v2644, 2147483648
    %v2646 = vmul.f32 %v2645, 1.442695
    %v2647 = vpow.pop %v2646
    %v2648 = vadd.f32 %v2647, 1.0
    %v2649 = vrcp.pop %v2648
    %v2650 = vmul.f32 1.0, %v2649
    %v2651 = vtanh.pop %v2568
    %2653 = vrot.lane.b32.xlu0 %v2651, 64
    %v2654 = vpop.permute.xlu0 %2653
    %v2656 = vmul.f32 %v2650, %v2654
    %2658 = vrot.lane.b32.xlu0 %v2286, 32
    %v2659 = vpop.permute.xlu0 %2658
    %v2661 = vsel %vm528, %v2659, %v2198
    %v2663 = vsel %vm432, %v2661, 0
    %2665 = vmatprep.subr.mxu0 0.0
    %2666 = vmatpush1.msra.mxu0 0.0
    %2667 = vmatprep.subr.mxu0 0.0
    %2668 = vmatpush1.msra.mxu0 0.0
    %2669 = vmatprep.subr.mxu0 0.0
    %2670 = vmatpush1.msra.mxu0 0.0
    %2671 = vmatprep.subr.mxu0 0.0
    %2672 = vmatpush1.msra.mxu0 0.0
    %2673 = vmatprep.subr.mxu0 0.0
    %2674 = vmatpush1.msra.mxu0 0.0
    %2675 = vmatprep.subr.mxu0 0.0
    %2676 = vmatpush1.msra.mxu0 0.0
    %2677 = vmatprep.subr.mxu0 0.0
    %2678 = vmatpush1.msra.mxu0 0.0
    %2679 = vmatprep.subr.mxu0 0.0
    %2680 = vmatpush1.msra.mxu0 0.0
    %2681 = vmatprep.subr.mxu0 0.0
    %2682 = vmatpush1.msra.mxu0 %v427
    %2683 = vmatprep.subr.mxu0 0.0
    %2684 = vmatpush1.msra.mxu0 %v426
    %2685 = vmatprep.subr.mxu0 0.0
    %2686 = vmatpush1.msra.mxu0 %v425
    %2687 = vmatprep.subr.mxu0 0.0
    %2688 = vmatpush1.msra.mxu0 %v424
    %2689 = vmatprep.subr.mxu0 0.0
    %2690 = vmatpush1.msra.mxu0 %v423
    %2691 = vmatprep.subr.mxu0 0.0
    %2692 = vmatpush1.msra.mxu0 %v422
    %2693 = vmatprep.subr.mxu0 0.0
    %2694 = vmatpush1.msra.mxu0 %v421
    %2695 = vmatprep.subr.mxu0 0.0
    %2696 = vmatpush1.msra.mxu0 %v420
    %2697 = vmatprep.subr.mxu0 0.0
    %2698 = vmatpush2.msra.mxu0 0.0
    %2699 = vmatprep.subr.mxu0 0.0
    %2700 = vmatpush2.msra.mxu0 0.0
    %2701 = vmatprep.subr.mxu0 0.0
    %2702 = vmatpush2.msra.mxu0 0.0
    %2703 = vmatprep.subr.mxu0 0.0
    %2704 = vmatpush2.msra.mxu0 0.0
    %2705 = vmatprep.subr.mxu0 0.0
    %2706 = vmatpush2.msra.mxu0 0.0
    %2707 = vmatprep.subr.mxu0 0.0
    %2708 = vmatpush2.msra.mxu0 0.0
    %2709 = vmatprep.subr.mxu0 0.0
    %2710 = vmatpush2.msra.mxu0 0.0
    %2711 = vmatprep.subr.mxu0 0.0
    %2712 = vmatpush2.msra.mxu0 0.0
    %2713 = vmatprep.subr.mxu0 0.0
    %2714 = vmatpush2.msra.mxu0 0.0
    %2715 = vmatprep.subr.mxu0 0.0
    %2716 = vmatpush2.msra.mxu0 0.0
    %2717 = vmatprep.subr.mxu0 0.0
    %2718 = vmatpush2.msra.mxu0 0.0
    %2719 = vmatprep.subr.mxu0 0.0
    %2720 = vmatpush2.msra.mxu0 0.0
    %2721 = vmatprep.subr.mxu0 0.0
    %2722 = vmatpush2.msra.mxu0 0.0
    %2723 = vmatprep.subr.mxu0 0.0
    %2724 = vmatpush2.msra.mxu0 0.0
    %2725 = vmatprep.subr.mxu0 0.0
    %2726 = vmatpush2.msra.mxu0 0.0
    %2727 = vmatprep.subr.mxu0 0.0
    %2728 = vmatpush2.msra.mxu0 0.0
    %2729 = vmatprep.mubr.f32.mxu0 0.0
    %2730 = vmatmul.mubr.f32.gmra.mxu0 %v2663
    %v2731 = vpop.f32.mrf.mxu0
    %v2732 = vadd.f32 0.0, %v2731
    %v2733 = vpop.f32.mrf.mxu0
    %2734 = vdwg.mxu0
    %v2735 = vadd.f32 %v183, %v2732
    %v2736 = vxor.u32 %v2735, 2147483648
    %v2737 = vmul.f32 %v2736, 1.442695
    %v2738 = vpow.pop %v2737
    %v2739 = vadd.f32 %v2738, 1.0
    %v2740 = vrcp.pop %v2739
    %v2741 = vmul.f32 1.0, %v2740
    %v2742 = vmul.f32 %v2741, %v2198
    %v2743 = vtanh.pop %v2735
    %2745 = vrot.lane.b32.xlu0 %v2743, 64
    %v2746 = vpop.permute.xlu0 %2745
    %v2748 = vmul.f32 %v2741, %v2746
    %2750 = vrot.lane.b32.xlu0 %v2748, 32
    %v2751 = vpop.permute.xlu0 %2750
    %v2753 = vadd.f32 %v2742, %v2751
    %2755 = vrot.lane.b32.xlu0 %v2753, 96
    %v2756 = vpop.permute.xlu0 %2755
    %v2757 = vsel %vm528, %v2756, 0
    %2759 = vmatprep.subr.mxu0 0.0
    %2760 = vmatpush1.msra.mxu0 0.0
    %2761 = vmatprep.subr.mxu0 0.0
    %2762 = vmatpush1.msra.mxu0 0.0
    %2763 = vmatprep.subr.mxu0 0.0
    %2764 = vmatpush1.msra.mxu0 0.0
    %2765 = vmatprep.subr.mxu0 0.0
    %2766 = vmatpush1.msra.mxu0 0.0
    %2767 = vmatprep.subr.mxu0 0.0
    %2768 = vmatpush1.msra.mxu0 0.0
    %2769 = vmatprep.subr.mxu0 0.0
    %2770 = vmatpush1.msra.mxu0 0.0
    %2771 = vmatprep.subr.mxu0 0.0
    %2772 = vmatpush1.msra.mxu0 0.0
    %2773 = vmatprep.subr.mxu0 0.0
    %2774 = vmatpush1.msra.mxu0 0.0
    %2775 = vmatprep.subr.mxu0 0.0
    %2776 = vmatpush1.msra.mxu0 0.0
    %2777 = vmatprep.subr.mxu0 0.0
    %2778 = vmatpush1.msra.mxu0 0.0
    %2779 = vmatprep.subr.mxu0 0.0
    %2780 = vmatpush1.msra.mxu0 0.0
    %2781 = vmatprep.subr.mxu0 0.0
    %2782 = vmatpush1.msra.mxu0 0.0
    %2783 = vmatprep.subr.mxu0 0.0
    %2784 = vmatpush1.msra.mxu0 %v431
    %2785 = vmatprep.subr.mxu0 0.0
    %2786 = vmatpush1.msra.mxu0 %v430
    %2787 = vmatprep.subr.mxu0 0.0
    %2788 = vmatpush1.msra.mxu0 %v429
    %2789 = vmatprep.subr.mxu0 0.0
    %2790 = vmatpush1.msra.mxu0 %v428
    %2791 = vmatprep.subr.mxu0 0.0
    %2792 = vmatpush2.msra.mxu0 0.0
    %2793 = vmatprep.subr.mxu0 0.0
    %2794 = vmatpush2.msra.mxu0 0.0
    %2795 = vmatprep.subr.mxu0 0.0
    %2796 = vmatpush2.msra.mxu0 0.0
    %2797 = vmatprep.subr.mxu0 0.0
    %2798 = vmatpush2.msra.mxu0 0.0
    %2799 = vmatprep.subr.mxu0 0.0
    %2800 = vmatpush2.msra.mxu0 0.0
    %2801 = vmatprep.subr.mxu0 0.0
    %2802 = vmatpush2.msra.mxu0 0.0
    %2803 = vmatprep.subr.mxu0 0.0
    %2804 = vmatpush2.msra.mxu0 0.0
    %2805 = vmatprep.subr.mxu0 0.0
    %2806 = vmatpush2.msra.mxu0 0.0
    %2807 = vmatprep.subr.mxu0 0.0
    %2808 = vmatpush2.msra.mxu0 0.0
    %2809 = vmatprep.subr.mxu0 0.0
    %2810 = vmatpush2.msra.mxu0 0.0
    %2811 = vmatprep.subr.mxu0 0.0
    %2812 = vmatpush2.msra.mxu0 0.0
    %2813 = vmatprep.subr.mxu0 0.0
    %2814 = vmatpush2.msra.mxu0 0.0
    %2815 = vmatprep.subr.mxu0 0.0
    %2816 = vmatpush2.msra.mxu0 0.0
    %2817 = vmatprep.subr.mxu0 0.0
    %2818 = vmatpush2.msra.mxu0 0.0
    %2819 = vmatprep.subr.mxu0 0.0
    %2820 = vmatpush2.msra.mxu0 0.0
    %2821 = vmatprep.subr.mxu0 0.0
    %2822 = vmatpush2.msra.mxu0 0.0
    %2823 = vmatprep.mubr.f32.mxu0 0.0
    %2824 = vmatmul.mubr.f32.gmra.mxu0 %v2757
    %v2825 = vpop.f32.mrf.mxu0
    %v2826 = vadd.f32 0.0, %v2825
    %v2827 = vpop.f32.mrf.mxu0
    %2828 = vdwg.mxu0
    %v2829 = vadd.f32 %v2735, %v2826
    %v2830 = vxor.u32 %v2829, 2147483648
    %v2831 = vmul.f32 %v2830, 1.442695
    %v2832 = vpow.pop %v2831
    %v2833 = vadd.f32 %v2832, 1.0
    %v2834 = vrcp.pop %v2833
    %v2835 = vmul.f32 1.0, %v2834
    %v2836 = vtanh.pop %v2753
    %2838 = vrot.lane.b32.xlu0 %v2836, 64
    %v2839 = vpop.permute.xlu0 %2838
    %v2841 = vmul.f32 %v2835, %v2839
    %2843 = vrot.lane.b32.xlu0 %v2471, 32
    %v2844 = vpop.permute.xlu0 %2843
    %v2846 = vsel %vm528, %v2844, %v2383
    %v2848 = vsel %vm432, %v2846, 0
    %2850 = vmatprep.subr.mxu0 0.0
    %2851 = vmatpush1.msra.mxu0 0.0
    %2852 = vmatprep.subr.mxu0 0.0
    %2853 = vmatpush1.msra.mxu0 0.0
    %2854 = vmatprep.subr.mxu0 0.0
    %2855 = vmatpush1.msra.mxu0 0.0
    %2856 = vmatprep.subr.mxu0 0.0
    %2857 = vmatpush1.msra.mxu0 0.0
    %2858 = vmatprep.subr.mxu0 0.0
    %2859 = vmatpush1.msra.mxu0 0.0
    %2860 = vmatprep.subr.mxu0 0.0
    %2861 = vmatpush1.msra.mxu0 0.0
    %2862 = vmatprep.subr.mxu0 0.0
    %2863 = vmatpush1.msra.mxu0 0.0
    %2864 = vmatprep.subr.mxu0 0.0
    %2865 = vmatpush1.msra.mxu0 0.0
    %2866 = vmatprep.subr.mxu0 0.0
    %2867 = vmatpush1.msra.mxu0 %v621
    %2868 = vmatprep.subr.mxu0 0.0
    %2869 = vmatpush1.msra.mxu0 %v620
    %2870 = vmatprep.subr.mxu0 0.0
    %2871 = vmatpush1.msra.mxu0 %v619
    %2872 = vmatprep.subr.mxu0 0.0
    %2873 = vmatpush1.msra.mxu0 %v618
    %2874 = vmatprep.subr.mxu0 0.0
    %2875 = vmatpush1.msra.mxu0 %v617
    %2876 = vmatprep.subr.mxu0 0.0
    %2877 = vmatpush1.msra.mxu0 %v616
    %2878 = vmatprep.subr.mxu0 0.0
    %2879 = vmatpush1.msra.mxu0 %v615
    %2880 = vmatprep.subr.mxu0 0.0
    %2881 = vmatpush1.msra.mxu0 %v614
    %2882 = vmatprep.subr.mxu0 0.0
    %2883 = vmatpush2.msra.mxu0 0.0
    %2884 = vmatprep.subr.mxu0 0.0
    %2885 = vmatpush2.msra.mxu0 0.0
    %2886 = vmatprep.subr.mxu0 0.0
    %2887 = vmatpush2.msra.mxu0 0.0
    %2888 = vmatprep.subr.mxu0 0.0
    %2889 = vmatpush2.msra.mxu0 0.0
    %2890 = vmatprep.subr.mxu0 0.0
    %2891 = vmatpush2.msra.mxu0 0.0
    %2892 = vmatprep.subr.mxu0 0.0
    %2893 = vmatpush2.msra.mxu0 0.0
    %2894 = vmatprep.subr.mxu0 0.0
    %2895 = vmatpush2.msra.mxu0 0.0
    %2896 = vmatprep.subr.mxu0 0.0
    %2897 = vmatpush2.msra.mxu0 0.0
    %2898 = vmatprep.subr.mxu0 0.0
    %2899 = vmatpush2.msra.mxu0 0.0
    %2900 = vmatprep.subr.mxu0 0.0
    %2901 = vmatpush2.msra.mxu0 0.0
    %2902 = vmatprep.subr.mxu0 0.0
    %2903 = vmatpush2.msra.mxu0 0.0
    %2904 = vmatprep.subr.mxu0 0.0
    %2905 = vmatpush2.msra.mxu0 0.0
    %2906 = vmatprep.subr.mxu0 0.0
    %2907 = vmatpush2.msra.mxu0 0.0
    %2908 = vmatprep.subr.mxu0 0.0
    %2909 = vmatpush2.msra.mxu0 0.0
    %2910 = vmatprep.subr.mxu0 0.0
    %2911 = vmatpush2.msra.mxu0 0.0
    %2912 = vmatprep.subr.mxu0 0.0
    %2913 = vmatpush2.msra.mxu0 0.0
    %2914 = vmatprep.mubr.f32.mxu0 0.0
    %2915 = vmatmul.mubr.f32.gmra.mxu0 %v2848
    %v2916 = vpop.f32.mrf.mxu0
    %v2917 = vadd.f32 0.0, %v2916
    %v2918 = vpop.f32.mrf.mxu0
    %2919 = vdwg.mxu0
    %v2920 = vadd.f32 %v304, %v2917
    %v2921 = vxor.u32 %v2920, 2147483648
    %v2922 = vmul.f32 %v2921, 1.442695
    %v2923 = vpow.pop %v2922
    %v2924 = vadd.f32 %v2923, 1.0
    %v2925 = vrcp.pop %v2924
    %v2926 = vmul.f32 1.0, %v2925
    %v2927 = vmul.f32 %v2926, %v2383
    %v2928 = vtanh.pop %v2920
    %2930 = vrot.lane.b32.xlu0 %v2928, 64
    %v2931 = vpop.permute.xlu0 %2930
    %v2933 = vmul.f32 %v2926, %v2931
    %2935 = vrot.lane.b32.xlu0 %v2933, 32
    %v2936 = vpop.permute.xlu0 %2935
    %v2938 = vadd.f32 %v2927, %v2936
    %2940 = vrot.lane.b32.xlu0 %v2938, 96
    %v2941 = vpop.permute.xlu0 %2940
    %v2942 = vsel %vm528, %v2941, 0
    %2944 = vmatprep.subr.mxu0 0.0
    %2945 = vmatpush1.msra.mxu0 0.0
    %2946 = vmatprep.subr.mxu0 0.0
    %2947 = vmatpush1.msra.mxu0 0.0
    %2948 = vmatprep.subr.mxu0 0.0
    %2949 = vmatpush1.msra.mxu0 0.0
    %2950 = vmatprep.subr.mxu0 0.0
    %2951 = vmatpush1.msra.mxu0 0.0
    %2952 = vmatprep.subr.mxu0 0.0
    %2953 = vmatpush1.msra.mxu0 0.0
    %2954 = vmatprep.subr.mxu0 0.0
    %2955 = vmatpush1.msra.mxu0 0.0
    %2956 = vmatprep.subr.mxu0 0.0
    %2957 = vmatpush1.msra.mxu0 0.0
    %2958 = vmatprep.subr.mxu0 0.0
    %2959 = vmatpush1.msra.mxu0 0.0
    %2960 = vmatprep.subr.mxu0 0.0
    %2961 = vmatpush1.msra.mxu0 0.0
    %2962 = vmatprep.subr.mxu0 0.0
    %2963 = vmatpush1.msra.mxu0 0.0
    %2964 = vmatprep.subr.mxu0 0.0
    %2965 = vmatpush1.msra.mxu0 0.0
    %2966 = vmatprep.subr.mxu0 0.0
    %2967 = vmatpush1.msra.mxu0 0.0
    %2968 = vmatprep.subr.mxu0 0.0
    %2969 = vmatpush1.msra.mxu0 %v625
    %2970 = vmatprep.subr.mxu0 0.0
    %2971 = vmatpush1.msra.mxu0 %v624
    %2972 = vmatprep.subr.mxu0 0.0
    %2973 = vmatpush1.msra.mxu0 %v623
    %2974 = vmatprep.subr.mxu0 0.0
    %2975 = vmatpush1.msra.mxu0 %v622
    %2976 = vmatprep.subr.mxu0 0.0
    %2977 = vmatpush2.msra.mxu0 0.0
    %2978 = vmatprep.subr.mxu0 0.0
    %2979 = vmatpush2.msra.mxu0 0.0
    %2980 = vmatprep.subr.mxu0 0.0
    %2981 = vmatpush2.msra.mxu0 0.0
    %2982 = vmatprep.subr.mxu0 0.0
    %2983 = vmatpush2.msra.mxu0 0.0
    %2984 = vmatprep.subr.mxu0 0.0
    %2985 = vmatpush2.msra.mxu0 0.0
    %2986 = vmatprep.subr.mxu0 0.0
    %2987 = vmatpush2.msra.mxu0 0.0
    %2988 = vmatprep.subr.mxu0 0.0
    %2989 = vmatpush2.msra.mxu0 0.0
    %2990 = vmatprep.subr.mxu0 0.0
    %2991 = vmatpush2.msra.mxu0 0.0
    %2992 = vmatprep.subr.mxu0 0.0
    %2993 = vmatpush2.msra.mxu0 0.0
    %2994 = vmatprep.subr.mxu0 0.0
    %2995 = vmatpush2.msra.mxu0 0.0
    %2996 = vmatprep.subr.mxu0 0.0
    %2997 = vmatpush2.msra.mxu0 0.0
    %2998 = vmatprep.subr.mxu0 0.0
    %2999 = vmatpush2.msra.mxu0 0.0
    %3000 = vmatprep.subr.mxu0 0.0
    %3001 = vmatpush2.msra.mxu0 0.0
    %3002 = vmatprep.subr.mxu0 0.0
    %3003 = vmatpush2.msra.mxu0 0.0
    %3004 = vmatprep.subr.mxu0 0.0
    %3005 = vmatpush2.msra.mxu0 0.0
    %3006 = vmatprep.subr.mxu0 0.0
    %3007 = vmatpush2.msra.mxu0 0.0
    %3008 = vmatprep.mubr.f32.mxu0 0.0
    %3009 = vmatmul.mubr.f32.gmra.mxu0 %v2942
    %v3010 = vpop.f32.mrf.mxu0
    %v3011 = vadd.f32 0.0, %v3010
    %v3012 = vpop.f32.mrf.mxu0
    %3013 = vdwg.mxu0
    %v3014 = vadd.f32 %v2920, %v3011
    %v3015 = vxor.u32 %v3014, 2147483648
    %v3016 = vmul.f32 %v3015, 1.442695
    %v3017 = vpow.pop %v3016
    %v3018 = vadd.f32 %v3017, 1.0
    %v3019 = vrcp.pop %v3018
    %v3020 = vmul.f32 1.0, %v3019
    %v3021 = vtanh.pop %v2938
    %3023 = vrot.lane.b32.xlu0 %v3021, 64
    %v3024 = vpop.permute.xlu0 %3023
    %v3026 = vmul.f32 %v3020, %v3024
    %3028 = vrot.lane.b32.xlu0 %v3026, 32
    %v3029 = vpop.permute.xlu0 %3028
    %v3031 = vsel %vm528, %v3029, %v2938
    %v3033 = vsel %vm432, %v3031, 0
    %3035 = vmatprep.subr.mxu0 0.0
    %3036 = vmatpush1.msra.mxu0 0.0
    %3037 = vmatprep.subr.mxu0 0.0
    %3038 = vmatpush1.msra.mxu0 0.0
    %3039 = vmatprep.subr.mxu0 0.0
    %3040 = vmatpush1.msra.mxu0 0.0
    %3041 = vmatprep.subr.mxu0 0.0
    %3042 = vmatpush1.msra.mxu0 0.0
    %3043 = vmatprep.subr.mxu0 0.0
    %3044 = vmatpush1.msra.mxu0 0.0
    %3045 = vmatprep.subr.mxu0 0.0
    %3046 = vmatpush1.msra.mxu0 0.0
    %3047 = vmatprep.subr.mxu0 0.0
    %3048 = vmatpush1.msra.mxu0 0.0
    %3049 = vmatprep.subr.mxu0 0.0
    %3050 = vmatpush1.msra.mxu0 0.0
    %3051 = vmatprep.subr.mxu0 0.0
    %3052 = vmatpush1.msra.mxu0 %v621
    %3053 = vmatprep.subr.mxu0 0.0
    %3054 = vmatpush1.msra.mxu0 %v620
    %3055 = vmatprep.subr.mxu0 0.0
    %3056 = vmatpush1.msra.mxu0 %v619
    %3057 = vmatprep.subr.mxu0 0.0
    %3058 = vmatpush1.msra.mxu0 %v618
    %3059 = vmatprep.subr.mxu0 0.0
    %3060 = vmatpush1.msra.mxu0 %v617
    %3061 = vmatprep.subr.mxu0 0.0
    %3062 = vmatpush1.msra.mxu0 %v616
    %3063 = vmatprep.subr.mxu0 0.0
    %3064 = vmatpush1.msra.mxu0 %v615
    %3065 = vmatprep.subr.mxu0 0.0
    %3066 = vmatpush1.msra.mxu0 %v614
    %3067 = vmatprep.subr.mxu0 0.0
    %3068 = vmatpush2.msra.mxu0 0.0
    %3069 = vmatprep.subr.mxu0 0.0
    %3070 = vmatpush2.msra.mxu0 0.0
    %3071 = vmatprep.subr.mxu0 0.0
    %3072 = vmatpush2.msra.mxu0 0.0
    %3073 = vmatprep.subr.mxu0 0.0
    %3074 = vmatpush2.msra.mxu0 0.0
    %3075 = vmatprep.subr.mxu0 0.0
    %3076 = vmatpush2.msra.mxu0 0.0
    %3077 = vmatprep.subr.mxu0 0.0
    %3078 = vmatpush2.msra.mxu0 0.0
    %3079 = vmatprep.subr.mxu0 0.0
    %3080 = vmatpush2.msra.mxu0 0.0
    %3081 = vmatprep.subr.mxu0 0.0
    %3082 = vmatpush2.msra.mxu0 0.0
    %3083 = vmatprep.subr.mxu0 0.0
    %3084 = vmatpush2.msra.mxu0 0.0
    %3085 = vmatprep.subr.mxu0 0.0
    %3086 = vmatpush2.msra.mxu0 0.0
    %3087 = vmatprep.subr.mxu0 0.0
    %3088 = vmatpush2.msra.mxu0 0.0
    %3089 = vmatprep.subr.mxu0 0.0
    %3090 = vmatpush2.msra.mxu0 0.0
    %3091 = vmatprep.subr.mxu0 0.0
    %3092 = vmatpush2.msra.mxu0 0.0
    %3093 = vmatprep.subr.mxu0 0.0
    %3094 = vmatpush2.msra.mxu0 0.0
    %3095 = vmatprep.subr.mxu0 0.0
    %3096 = vmatpush2.msra.mxu0 0.0
    %3097 = vmatprep.subr.mxu0 0.0
    %3098 = vmatpush2.msra.mxu0 0.0
    %3099 = vmatprep.mubr.f32.mxu0 0.0
    %3100 = vmatmul.mubr.f32.gmra.mxu0 %v3033
    %v3101 = vpop.f32.mrf.mxu0
    %v3102 = vadd.f32 0.0, %v3101
    %v3103 = vpop.f32.mrf.mxu0
    %3104 = vdwg.mxu0
    %v3105 = vadd.f32 %v309, %v3102
    %v3106 = vxor.u32 %v3105, 2147483648
    %v3107 = vmul.f32 %v3106, 1.442695
    %v3108 = vpow.pop %v3107
    %v3109 = vadd.f32 %v3108, 1.0
    %v3110 = vrcp.pop %v3109
    %v3111 = vmul.f32 1.0, %v3110
    %v3112 = vmul.f32 %v3111, %v2938
    %v3113 = vtanh.pop %v3105
    %3115 = vrot.lane.b32.xlu0 %v3113, 64
    %v3116 = vpop.permute.xlu0 %3115
    %v3118 = vmul.f32 %v3111, %v3116
    %3120 = vrot.lane.b32.xlu0 %v3118, 32
    %v3121 = vpop.permute.xlu0 %3120
    %v3123 = vadd.f32 %v3112, %v3121
    %3125 = vrot.lane.b32.xlu0 %v3123, 96
    %v3126 = vpop.permute.xlu0 %3125
    %v3127 = vsel %vm528, %v3126, 0
    %3129 = vmatprep.subr.mxu0 0.0
    %3130 = vmatpush1.msra.mxu0 0.0
    %3131 = vmatprep.subr.mxu0 0.0
    %3132 = vmatpush1.msra.mxu0 0.0
    %3133 = vmatprep.subr.mxu0 0.0
    %3134 = vmatpush1.msra.mxu0 0.0
    %3135 = vmatprep.subr.mxu0 0.0
    %3136 = vmatpush1.msra.mxu0 0.0
    %3137 = vmatprep.subr.mxu0 0.0
    %3138 = vmatpush1.msra.mxu0 0.0
    %3139 = vmatprep.subr.mxu0 0.0
    %3140 = vmatpush1.msra.mxu0 0.0
    %3141 = vmatprep.subr.mxu0 0.0
    %3142 = vmatpush1.msra.mxu0 0.0
    %3143 = vmatprep.subr.mxu0 0.0
    %3144 = vmatpush1.msra.mxu0 0.0
    %3145 = vmatprep.subr.mxu0 0.0
    %3146 = vmatpush1.msra.mxu0 0.0
    %3147 = vmatprep.subr.mxu0 0.0
    %3148 = vmatpush1.msra.mxu0 0.0
    %3149 = vmatprep.subr.mxu0 0.0
    %3150 = vmatpush1.msra.mxu0 0.0
    %3151 = vmatprep.subr.mxu0 0.0
    %3152 = vmatpush1.msra.mxu0 0.0
    %3153 = vmatprep.subr.mxu0 0.0
    %3154 = vmatpush1.msra.mxu0 %v625
    %3155 = vmatprep.subr.mxu0 0.0
    %3156 = vmatpush1.msra.mxu0 %v624
    %3157 = vmatprep.subr.mxu0 0.0
    %3158 = vmatpush1.msra.mxu0 %v623
    %3159 = vmatprep.subr.mxu0 0.0
    %3160 = vmatpush1.msra.mxu0 %v622
    %3161 = vmatprep.subr.mxu0 0.0
    %3162 = vmatpush2.msra.mxu0 0.0
    %3163 = vmatprep.subr.mxu0 0.0
    %3164 = vmatpush2.msra.mxu0 0.0
    %3165 = vmatprep.subr.mxu0 0.0
    %3166 = vmatpush2.msra.mxu0 0.0
    %3167 = vmatprep.subr.mxu0 0.0
    %3168 = vmatpush2.msra.mxu0 0.0
    %3169 = vmatprep.subr.mxu0 0.0
    %3170 = vmatpush2.msra.mxu0 0.0
    %3171 = vmatprep.subr.mxu0 0.0
    %3172 = vmatpush2.msra.mxu0 0.0
    %3173 = vmatprep.subr.mxu0 0.0
    %3174 = vmatpush2.msra.mxu0 0.0
    %3175 = vmatprep.subr.mxu0 0.0
    %3176 = vmatpush2.msra.mxu0 0.0
    %3177 = vmatprep.subr.mxu0 0.0
    %3178 = vmatpush2.msra.mxu0 0.0
    %3179 = vmatprep.subr.mxu0 0.0
    %3180 = vmatpush2.msra.mxu0 0.0
    %3181 = vmatprep.subr.mxu0 0.0
    %3182 = vmatpush2.msra.mxu0 0.0
    %3183 = vmatprep.subr.mxu0 0.0
    %3184 = vmatpush2.msra.mxu0 0.0
    %3185 = vmatprep.subr.mxu0 0.0
    %3186 = vmatpush2.msra.mxu0 0.0
    %3187 = vmatprep.subr.mxu0 0.0
    %3188 = vmatpush2.msra.mxu0 0.0
    %3189 = vmatprep.subr.mxu0 0.0
    %3190 = vmatpush2.msra.mxu0 0.0
    %3191 = vmatprep.subr.mxu0 0.0
    %3192 = vmatpush2.msra.mxu0 0.0
    %3193 = vmatprep.mubr.f32.mxu0 0.0
    %3194 = vmatmul.mubr.f32.gmra.mxu0 %v3127
    %v3195 = vpop.f32.mrf.mxu0
    %v3196 = vadd.f32 0.0, %v3195
    %v3197 = vpop.f32.mrf.mxu0
    %3198 = vdwg.mxu0
    %v3199 = vadd.f32 %v3105, %v3196
    %v3200 = vxor.u32 %v3199, 2147483648
    %v3201 = vmul.f32 %v3200, 1.442695
    %v3202 = vpow.pop %v3201
    %v3203 = vadd.f32 %v3202, 1.0
    %v3204 = vrcp.pop %v3203
    %v3205 = vmul.f32 1.0, %v3204
    %v3206 = vtanh.pop %v3123
    %3208 = vrot.lane.b32.xlu0 %v3206, 64
    %v3209 = vpop.permute.xlu0 %3208
    %v3211 = vmul.f32 %v3205, %v3209
    %3213 = vrot.lane.b32.xlu0 %v2841, 32
    %v3214 = vpop.permute.xlu0 %3213
    %3217 = vrot.lane.b32.xlu0 %v3211, 64
    %v3218 = vpop.permute.xlu0 %3217
    %3221 = vrot.lane.b32.xlu0 %v2656, 96
    %v3222 = vpop.permute.xlu0 %3221
    %v3224 = vsel %vm528, %v3214, %v3218
    %v3225 = vsel %vm432, %v3224, %v3222
    %v3226 = vld [vmem:[#allocation7] sm:$0xff]
    %v3227 = vld [vmem:[#allocation7 + $0x8] sm:$0xff]
    %v3228 = vld [vmem:[#allocation7 + $0x10] sm:$0xff]
    %v3229 = vld [vmem:[#allocation7 + $0x18] sm:$0xff]
    %v3230 = vld [vmem:[#allocation7 + $0x20] sm:$0xff]
    %v3231 = vld [vmem:[#allocation7 + $0x28] sm:$0xff]
    %v3232 = vld [vmem:[#allocation7 + $0x30] sm:$0xff]
    %v3233 = vld [vmem:[#allocation7 + $0x38] sm:$0xff]
    %v3234 = vld [vmem:[#allocation7 + $0x40] sm:$0xff]
    %v3235 = vld [vmem:[#allocation7 + $0x48] sm:$0xff]
    %v3236 = vld [vmem:[#allocation7 + $0x50] sm:$0xff]
    %v3237 = vld [vmem:[#allocation7 + $0x58] sm:$0xff]
    %v3238 = vld [vmem:[#allocation7 + $0x60] sm:$0xff]
    %v3239 = vld [vmem:[#allocation7 + $0x68] sm:$0x1]
    %v3240 = vld [vmem:[#allocation7 + $0x69] sm:$0x1]
    %v3241 = vlaneseq
    %v3242 = vshrl.u32 %v3241, 7
    %v3243 = vsub.s32 0, %v3242
    %v3244 = vrot.slane %v3239, %v3243
    %vm3245 = vcmask 785408
    %v3247 = vsel %vm3245, %v3225, 0
    %3249 = vmatprep.subr.mxu0 0.0
    %3250 = vmatpush1.msra.mxu0 0.0
    %3251 = vmatprep.subr.mxu0 0.0
    %3252 = vmatpush1.msra.mxu0 0.0
    %3253 = vmatprep.subr.mxu0 0.0
    %3254 = vmatpush1.msra.mxu0 0.0
    %3255 = vmatprep.subr.mxu0 0.0
    %3256 = vmatpush1.msra.mxu0 0.0
    %3257 = vmatprep.subr.mxu0 0.0
    %3258 = vmatpush1.msra.mxu0 %v3237
    %3259 = vmatprep.subr.mxu0 0.0
    %3260 = vmatpush1.msra.mxu0 %v3236
    %3261 = vmatprep.subr.mxu0 0.0
    %3262 = vmatpush1.msra.mxu0 %v3235
    %3263 = vmatprep.subr.mxu0 0.0
    %3264 = vmatpush1.msra.mxu0 %v3234
    %3265 = vmatprep.subr.mxu0 0.0
    %3266 = vmatpush1.msra.mxu0 %v3233
    %3267 = vmatprep.subr.mxu0 0.0
    %3268 = vmatpush1.msra.mxu0 %v3232
    %3269 = vmatprep.subr.mxu0 0.0
    %3270 = vmatpush1.msra.mxu0 %v3231
    %3271 = vmatprep.subr.mxu0 0.0
    %3272 = vmatpush1.msra.mxu0 %v3230
    %3273 = vmatprep.subr.mxu0 0.0
    %3274 = vmatpush1.msra.mxu0 %v3229
    %3275 = vmatprep.subr.mxu0 0.0
    %3276 = vmatpush1.msra.mxu0 %v3228
    %3277 = vmatprep.subr.mxu0 0.0
    %3278 = vmatpush1.msra.mxu0 %v3227
    %3279 = vmatprep.subr.mxu0 0.0
    %3280 = vmatpush1.msra.mxu0 %v3226
    %3281 = vmatprep.subr.mxu0 0.0
    %3282 = vmatpush2.msra.mxu0 0.0
    %3283 = vmatprep.subr.mxu0 0.0
    %3284 = vmatpush2.msra.mxu0 0.0
    %3285 = vmatprep.subr.mxu0 0.0
    %3286 = vmatpush2.msra.mxu0 0.0
    %3287 = vmatprep.subr.mxu0 0.0
    %3288 = vmatpush2.msra.mxu0 0.0
    %3289 = vmatprep.subr.mxu0 0.0
    %3290 = vmatpush2.msra.mxu0 0.0
    %3291 = vmatprep.subr.mxu0 0.0
    %3292 = vmatpush2.msra.mxu0 0.0
    %3293 = vmatprep.subr.mxu0 0.0
    %3294 = vmatpush2.msra.mxu0 0.0
    %3295 = vmatprep.subr.mxu0 0.0
    %3296 = vmatpush2.msra.mxu0 0.0
    %3297 = vmatprep.subr.mxu0 0.0
    %3298 = vmatpush2.msra.mxu0 0.0
    %3299 = vmatprep.subr.mxu0 0.0
    %3300 = vmatpush2.msra.mxu0 0.0
    %3301 = vmatprep.subr.mxu0 0.0
    %3302 = vmatpush2.msra.mxu0 0.0
    %3303 = vmatprep.subr.mxu0 0.0
    %3304 = vmatpush2.msra.mxu0 0.0
    %3305 = vmatprep.subr.mxu0 0.0
    %3306 = vmatpush2.msra.mxu0 0.0
    %3307 = vmatprep.subr.mxu0 0.0
    %3308 = vmatpush2.msra.mxu0 0.0
    %3309 = vmatprep.subr.mxu0 0.0
    %3310 = vmatpush2.msra.mxu0 0.0
    %3311 = vmatprep.subr.mxu0 0.0
    %3312 = vmatpush2.msra.mxu0 0.0
    %3313 = vmatprep.mubr.f32.mxu0 0.0
    %3314 = vmatmul.mubr.f32.gmra.mxu0 %v3247
    %v3315 = vpop.f32.mrf.mxu0
    %v3316 = vadd.f32 %v3244, %v3315
    %v3317 = vpop.f32.mrf.mxu0
    %3318 = vdwg.mxu0
    %v3319 = vmax.f32 %v3316, 0.0
    %v3320 = vlaneseq
    %v3321 = vshrl.u32 %v3320, 7
    %v3322 = vsub.s32 0, %v3321
    %v3323 = vrot.slane %v3240, %v3322
    %v3325 = vsel %vm322, %v3319, 0
    %3327 = vmatprep.subr.mxu0 0.0
    %3328 = vmatpush1.msra.mxu0 0.0
    %3329 = vmatprep.subr.mxu0 0.0
    %3330 = vmatpush1.msra.mxu0 0.0
    %3331 = vmatprep.subr.mxu0 0.0
    %3332 = vmatpush1.msra.mxu0 0.0
    %3333 = vmatprep.subr.mxu0 0.0
    %3334 = vmatpush1.msra.mxu0 0.0
    %3335 = vmatprep.subr.mxu0 0.0
    %3336 = vmatpush1.msra.mxu0 0.0
    %3337 = vmatprep.subr.mxu0 0.0
    %3338 = vmatpush1.msra.mxu0 0.0
    %3339 = vmatprep.subr.mxu0 0.0
    %3340 = vmatpush1.msra.mxu0 0.0
    %3341 = vmatprep.subr.mxu0 0.0
    %3342 = vmatpush1.msra.mxu0 0.0
    %3343 = vmatprep.subr.mxu0 0.0
    %3344 = vmatpush1.msra.mxu0 0.0
    %3345 = vmatprep.subr.mxu0 0.0
    %3346 = vmatpush1.msra.mxu0 0.0
    %3347 = vmatprep.subr.mxu0 0.0
    %3348 = vmatpush1.msra.mxu0 0.0
    %3349 = vmatprep.subr.mxu0 0.0
    %3350 = vmatpush1.msra.mxu0 0.0
    %3351 = vmatprep.subr.mxu0 0.0
    %3352 = vmatpush1.msra.mxu0 0.0
    %3353 = vmatprep.subr.mxu0 0.0
    %3354 = vmatpush1.msra.mxu0 0.0
    %3355 = vmatprep.subr.mxu0 0.0
    %3356 = vmatpush1.msra.mxu0 0.0
    %3357 = vmatprep.subr.mxu0 0.0
    %3358 = vmatpush1.msra.mxu0 %v3238
    %3359 = vmatprep.subr.mxu0 0.0
    %3360 = vmatpush2.msra.mxu0 0.0
    %3361 = vmatprep.subr.mxu0 0.0
    %3362 = vmatpush2.msra.mxu0 0.0
    %3363 = vmatprep.subr.mxu0 0.0
    %3364 = vmatpush2.msra.mxu0 0.0
    %3365 = vmatprep.subr.mxu0 0.0
    %3366 = vmatpush2.msra.mxu0 0.0
    %3367 = vmatprep.subr.mxu0 0.0
    %3368 = vmatpush2.msra.mxu0 0.0
    %3369 = vmatprep.subr.mxu0 0.0
    %3370 = vmatpush2.msra.mxu0 0.0
    %3371 = vmatprep.subr.mxu0 0.0
    %3372 = vmatpush2.msra.mxu0 0.0
    %3373 = vmatprep.subr.mxu0 0.0
    %3374 = vmatpush2.msra.mxu0 0.0
    %3375 = vmatprep.subr.mxu0 0.0
    %3376 = vmatpush2.msra.mxu0 0.0
    %3377 = vmatprep.subr.mxu0 0.0
    %3378 = vmatpush2.msra.mxu0 0.0
    %3379 = vmatprep.subr.mxu0 0.0
    %3380 = vmatpush2.msra.mxu0 0.0
    %3381 = vmatprep.subr.mxu0 0.0
    %3382 = vmatpush2.msra.mxu0 0.0
    %3383 = vmatprep.subr.mxu0 0.0
    %3384 = vmatpush2.msra.mxu0 0.0
    %3385 = vmatprep.subr.mxu0 0.0
    %3386 = vmatpush2.msra.mxu0 0.0
    %3387 = vmatprep.subr.mxu0 0.0
    %3388 = vmatpush2.msra.mxu0 0.0
    %3389 = vmatprep.subr.mxu0 0.0
    %3390 = vmatpush2.msra.mxu0 0.0
    %3391 = vmatprep.mubr.f32.mxu0 0.0
    %3392 = vmatmul.mubr.f32.gmra.mxu0 %v3325
    %v3393 = vpop.f32.mrf.mxu0
    %v3394 = vadd.f32 %v3323, %v3393
    %v3395 = vpop.f32.mrf.mxu0
    %3396 = vdwg.mxu0
    %v3397 = vsel %vm322, %v3394, -inf
    %3398 = vmax.xlane.f32.xlu0 %v3397
    %v3399 = vpop.xlane.xlu0 %3398
    %v3400 = vsub.f32 %v3394, %v3399
    %v3401 = vmul.f32 %v3400, 1.442695
    %v3402 = vpow.pop %v3401
    %v3403 = vsel %vm322, %v3402, 0.0
    %3404 = vadd.xlane.f32.xlu0 %v3403
    %v3405 = vpop.xlane.xlu0 %3404
    %v3406 = vrcp.pop %v3405
    %v3407 = vmul.f32 %v3402, %v3406
    %vm3408 = vcmask 58368
    %3409 = vst.msk [vmem:[#allocation8] sm:$0x3] %vm3408, %v3407
    // Predicated region
    $region42: #{parsing_forward.1} parent=1 // pred_check
      _
    $region43: #{parsing_forward.1} parent=1 // pred_check_branch
      %3411 = sbr.rel (0) target = $region45
    $region44: #{parsing_forward.1} parent=1 // pred_region
      %s3413 = ssub.s32 32, 32
      %3414 = vsyncadd [#allocation4], %s3413
      %s3416 = sshll.u32 [#allocation8], 4
      %s3417 = int_to_ptr.vmem [resolvable:$true] %s3416
      %3419 = dma.vmem_to_hbm [thread:$0]  %s3417, 32, %s7, [#allocation4]
    $region45: #{parsing_forward.1} parent=1 // pred_fallthru
      _
    // Predicated region
    $region46: #{parsing_forward.1} parent=1 // pred_check
      _
    $region47: #{parsing_forward.1} parent=1 // pred_check_branch
      %3421 = sbr.rel (0) target = $region49
    $region48: #{parsing_forward.1} parent=1 // pred_region
      %3422 = dma.done [#allocation4], 32
    $region49: #{parsing_forward.1} parent=1 // pred_fallthru
      _
    %3423 = vsyncpa [#allocation3], 1
    %3424 = vsyncpa [#allocation6], 1
    %3425 = vsyncpa [#allocation4], 1

</llo_original>
